<compile_context>
chip_gen: v5e
topology: v5e:2x2
jax: 0.10.0
libtpu: 0.0.40
codegen_flags: <defaults>
</compile_context>

<pallas_src>
import jax
import jax.numpy as jnp
from jax import lax
from jax.experimental import pallas as pl
from jax.experimental.pallas import tpu as pltpu


_EPS = 1e-5     # InstanceNorm2d eps
_SLOPE = 0.01   # LeakyReLU negative_slope


def _zero_border(ref):
    """Zero only the 1-pixel spatial halo of a (H+2, W+2, C) padded scratch."""
    Hp, Wp, C = ref.shape
    ref[0:1, :, :] = jnp.zeros((1, Wp, C), ref.dtype)
    ref[Hp - 1:Hp, :, :] = jnp.zeros((1, Wp, C), ref.dtype)
    ref[:, 0:1, :] = jnp.zeros((Hp, 1, C), ref.dtype)
    ref[:, Wp - 1:Wp, :] = jnp.zeros((Hp, 1, C), ref.dtype)


def _instance_norm_leaky_relu(x):
    """InstanceNorm2d (affine=False, biased var) + LeakyReLU, f32 math.

    Single-pass statistics: var = E[x^2] - mean^2 (one reduction sweep)."""
    mean = jnp.mean(x, axis=(0, 1), keepdims=True)
    mean_sq = jnp.mean(x * x, axis=(0, 1), keepdims=True)
    var = mean_sq - mean * mean
    y = (x - mean) * lax.rsqrt(var + _EPS)
    return jnp.where(y >= 0, y, _SLOPE * y)


def _double_conv_kernel(x_ref, w1_ref, w2_ref, out_ref,
                        xpad_ref, midpad_ref, patch1_ref, patch2_ref):
    # x_ref      : (H, W, Cin)      per-sample NHWC block (batch dim squeezed), bf16
    # w1_ref     : (9*Cin, Cmid)    bf16, rows ordered (kh, kw, cin)
    # w2_ref     : (9*Cmid, Cout)   bf16
    # out_ref    : (H, W, Cout)     f32
    # xpad_ref   : (H+2, W+2, Cin)  f32 scratch (1-px halo; interior rewritten each step)
    # midpad_ref : (H+2, W+2, Cmid) f32 scratch
    # patch1_ref : (H, W, 9*Cin)    f32 scratch — im2col matrix for conv1
    # patch2_ref : (H, W, 9*Cmid)   f32 scratch — im2col matrix for conv2
    H, W, Cout = out_ref.shape
    Cin = x_ref.shape[-1]
    Cmid = midpad_ref.shape[-1]

    # Zero only the halo (cheap strips); interiors are fully overwritten below,
    # so this is correct per-step regardless of which core runs which sample.
    _zero_border(xpad_ref)
    _zero_border(midpad_ref)

    # ---------------- conv1: im2col + one MXU matmul (K = 9*Cin) ----------------
    xpad_ref[1:H + 1, 1:W + 1, :] = x_ref[...].astype(xpad_ref.dtype)
    t = 0
    for kh in range(3):
        for kw in range(3):
            patch1_ref[:, :, t * Cin:(t + 1) * Cin] = xpad_ref[kh:kh + H, kw:kw + W, :]
            t += 1
    acc1 = jnp.einsum(
        "hwk,ko->hwo",
        patch1_ref[...].astype(w1_ref.dtype),      # bf16 operands,
        w1_ref[...],
        preferred_element_type=jnp.float32)        # f32 accumulation -> (H, W, Cmid)

    y1 = _instance_norm_leaky_relu(acc1)           # f32

    # ---------------- conv2: im2col + one MXU matmul (K = 9*Cmid) ---------------
    midpad_ref[1:H + 1, 1:W + 1, :] = y1
    t = 0
    for kh in range(3):
        for kw in range(3):
            patch2_ref[:, :, t * Cmid:(t + 1) * Cmid] = midpad_ref[kh:kh + H, kw:kw + W, :]
            t += 1
    acc2 = jnp.einsum(
        "hwk,ko->hwo",
        patch2_ref[...].astype(w2_ref.dtype),
        w2_ref[...],
        preferred_element_type=jnp.float32)        # (H, W, Cout) f32

    y2 = _instance_norm_leaky_relu(acc2)
    out_ref[...] = y2.astype(out_ref.dtype)


def double_conv(x_nchw, w1_oihw, w2_oihw, compute_dtype=jnp.bfloat16):
    """DoubleConv forward.

    x_nchw : (N, Cin, H, W)   — PyTorch NCHW input
    w*_oihw: (O, I, 3, 3)     — PyTorch Conv2d weight layout
    compute_dtype             — matmul operand dtype (norm math stays f32)
    """
    N, Cin, H, W = x_nchw.shape
    Cmid = w1_oihw.shape[0]
    Cout = w2_oihw.shape[0]

    # NCHW -> NHWC so channels sit on the contraction axis of the matmuls.
    x = jnp.transpose(x_nchw, (0, 2, 3, 1)).astype(compute_dtype)
    # OIHW -> (kh, kw, I, O) -> (9*I, O); row index = (kh*3 + kw)*I + i matches
    # the tap/channel ordering used to build the im2col patch matrices.
    w1m = jnp.transpose(w1_oihw, (2, 3, 1, 0)).reshape(9 * Cin, Cmid).astype(compute_dtype)
    w2m = jnp.transpose(w2_oihw, (2, 3, 1, 0)).reshape(9 * Cmid, Cout).astype(compute_dtype)

    out_nhwc = pl.pallas_call(
        _double_conv_kernel,
        out_shape=jax.ShapeDtypeStruct((N, H, W, Cout), jnp.float32),
        grid_spec=pltpu.PrefetchScalarGridSpec(
            num_scalar_prefetch=0,
            grid=(N,),
            in_specs=[
                pl.BlockSpec((None, H, W, Cin), lambda b: (b, 0, 0, 0)),
                pl.BlockSpec((9 * Cin, Cmid), lambda b: (0, 0)),
                pl.BlockSpec((9 * Cmid, Cout), lambda b: (0, 0)),
            ],
            out_specs=pl.BlockSpec((None, H, W, Cout), lambda b: (b, 0, 0, 0)),
            scratch_shapes=[
                pltpu.VMEM((H + 2, W + 2, Cin), jnp.float32),    # padded input
                pltpu.VMEM((H + 2, W + 2, Cmid), jnp.float32),   # padded intermediate
                pltpu.VMEM((H, W, 9 * Cin), jnp.float32),        # im2col for conv1
                pltpu.VMEM((H, W, 9 * Cmid), jnp.float32),       # im2col for conv2
            ],
        ),
        compiler_params=pltpu.CompilerParams(
            dimension_semantics=("parallel",),
            vmem_limit_bytes=32 * 1024 * 1024,
        ),
    )(x, w1m, w2m)

    return jnp.transpose(out_nhwc, (0, 3, 1, 2))  # NHWC -> NCHW


def _reference(x_nchw, w1_oihw, w2_oihw, conv_dtype=jnp.float32):
    """Pure-JAX reference matching PyTorch semantics.

    conv_dtype lets us match the kernel's bf16 matmul operands exactly."""
    def conv(x, w):
        return lax.conv_general_dilated(
            x.astype(conv_dtype), w.astype(conv_dtype),
            window_strides=(1, 1), padding="SAME",
            dimension_numbers=("NCHW", "OIHW", "NCHW"),
            preferred_element_type=jnp.float32)

    def inorm_lrelu(x):
        mean = jnp.mean(x, axis=(2, 3), keepdims=True)
        var = jnp.mean((x - mean) ** 2, axis=(2, 3), keepdims=True)
        y = (x - mean) * lax.rsqrt(var + _EPS)
        return jnp.where(y >= 0, y, _SLOPE * y)

    y = inorm_lrelu(conv(x_nchw, w1_oihw))
    return inorm_lrelu(conv(y, w2_oihw))


if __name__ == "__main__":
    # small shapes consistent with DoubleConv(in_channels=4, out_channels=8)
    N, Cin, H, W = 2, 4, 16, 16
    Cmid = Cout = 8

    key = jax.random.PRNGKey(0)
    kx, kw1, kw2 = jax.random.split(key, 3)
    x = jax.random.normal(kx, (N, Cin, H, W), dtype=jnp.float32)
    w1 = jax.random.normal(kw1, (Cmid, Cin, 3, 3), dtype=jnp.float32) * 0.1
    w2 = jax.random.normal(kw2, (Cout, Cmid, 3, 3), dtype=jnp.float32) * 0.1

    out = jax.block_until_ready(double_conv(x, w1, w2))
    assert out.shape == (N, Cout, H, W)

    # Tight check against a reference using the same bf16 matmul operands.
    ref_matched = _reference(x, w1, w2, conv_dtype=jnp.bfloat16)
    assert jnp.allclose(out, ref_matched, atol=2e-3, rtol=2e-3)

    # Loose sanity check against the full-f32 PyTorch-semantics reference
    # (difference is only the deliberate bf16 matmul-operand precision trade).
    ref_f32 = _reference(x, w1, w2, conv_dtype=jnp.float32)
    assert jnp.allclose(out, ref_f32, atol=5e-2, rtol=5e-2)

    print("KERNEL_OK")
</pallas_src>

<mosaic_0001>
module attributes {stable_mosaic.version = 11 : i64} {
  func.func @_double_conv_kernel(%arg0: i32, %arg1: memref<1x16x16x4xbf16, #tpu.memory_space<vmem>>, %arg2: memref<36x8xbf16, #tpu.memory_space<vmem>>, %arg3: memref<72x8xbf16, #tpu.memory_space<vmem>>, %arg4: memref<1x16x16x8xf32, #tpu.memory_space<vmem>>, %arg5: memref<18x18x4xf32, #tpu.memory_space<vmem>>, %arg6: memref<18x18x8xf32, #tpu.memory_space<vmem>>, %arg7: memref<16x16x36xf32, #tpu.memory_space<vmem>>, %arg8: memref<16x16x72xf32, #tpu.memory_space<vmem>>) attributes {dimension_semantics = [#tpu.dimension_semantics<parallel>], iteration_bounds = array<i64: 2>, scalar_prefetch = 0 : i64, scratch_operands = 4 : i64, tpu.core_type = #tpu.core_type<tc>, window_params = [{transform_indices = @transform_0, window_bounds = array<i64: 1, 16, 16, 4>}, {pipeline_mode = #tpu.pipeline_mode<synchronous>, transform_indices = @transform_1, window_bounds = array<i64: 36, 8>}, {pipeline_mode = #tpu.pipeline_mode<synchronous>, transform_indices = @transform_2, window_bounds = array<i64: 72, 8>}, {transform_indices = @transform_3, window_bounds = array<i64: 1, 16, 16, 8>}]} {
    %cst = arith.constant 0.000000e+00 : f32
    %0 = vector.broadcast %cst : f32 to vector<1x18x4xf32>
    %c0 = arith.constant 0 : index
    %c0_0 = arith.constant 0 : index
    %c0_1 = arith.constant 0 : index
    %1 = vector.load %arg5[%c0, %c0_0, %c0_1] : memref<18x18x4xf32, #tpu.memory_space<vmem>>, vector<1x18x4xf32>
    tpu.vector_store %arg5[%c0, %c0_0, %c0_1], %0 {strides = array<i32>} : memref<18x18x4xf32, #tpu.memory_space<vmem>>, vector<1x18x4xf32>,
    %cst_2 = arith.constant 0.000000e+00 : f32
    %2 = vector.broadcast %cst_2 : f32 to vector<1x18x4xf32>
    %c17 = arith.constant 17 : index
    %c0_3 = arith.constant 0 : index
    %c0_4 = arith.constant 0 : index
    %3 = vector.load %arg5[%c17, %c0_3, %c0_4] : memref<18x18x4xf32, #tpu.memory_space<vmem>>, vector<1x18x4xf32>
    tpu.vector_store %arg5[%c17, %c0_3, %c0_4], %2 {strides = array<i32>} : memref<18x18x4xf32, #tpu.memory_space<vmem>>, vector<1x18x4xf32>,
    %cst_5 = arith.constant 0.000000e+00 : f32
    %4 = vector.broadcast %cst_5 : f32 to vector<18x1x4xf32>
    %c0_6 = arith.constant 0 : index
    %c0_7 = arith.constant 0 : index
    %c0_8 = arith.constant 0 : index
    %5 = vector.load %arg5[%c0_6, %c0_7, %c0_8] : memref<18x18x4xf32, #tpu.memory_space<vmem>>, vector<18x1x4xf32>
    tpu.vector_store %arg5[%c0_6, %c0_7, %c0_8], %4 {strides = array<i32>} : memref<18x18x4xf32, #tpu.memory_space<vmem>>, vector<18x1x4xf32>,
    %cst_9 = arith.constant 0.000000e+00 : f32
    %6 = vector.broadcast %cst_9 : f32 to vector<18x1x4xf32>
    %c0_10 = arith.constant 0 : index
    %c17_11 = arith.constant 17 : index
    %c0_12 = arith.constant 0 : index
    %7 = vector.load %arg5[%c0_10, %c17_11, %c0_12] : memref<18x18x4xf32, #tpu.memory_space<vmem>>, vector<18x1x4xf32>
    tpu.vector_store %arg5[%c0_10, %c17_11, %c0_12], %6 {strides = array<i32>} : memref<18x18x4xf32, #tpu.memory_space<vmem>>, vector<18x1x4xf32>,
    %cst_13 = arith.constant 0.000000e+00 : f32
    %8 = vector.broadcast %cst_13 : f32 to vector<1x18x8xf32>
    %c0_14 = arith.constant 0 : index
    %c0_15 = arith.constant 0 : index
    %c0_16 = arith.constant 0 : index
    %9 = vector.load %arg6[%c0_14, %c0_15, %c0_16] : memref<18x18x8xf32, #tpu.memory_space<vmem>>, vector<1x18x8xf32>
    tpu.vector_store %arg6[%c0_14, %c0_15, %c0_16], %8 {strides = array<i32>} : memref<18x18x8xf32, #tpu.memory_space<vmem>>, vector<1x18x8xf32>,
    %cst_17 = arith.constant 0.000000e+00 : f32
    %10 = vector.broadcast %cst_17 : f32 to vector<1x18x8xf32>
    %c17_18 = arith.constant 17 : index
    %c0_19 = arith.constant 0 : index
    %c0_20 = arith.constant 0 : index
    %11 = vector.load %arg6[%c17_18, %c0_19, %c0_20] : memref<18x18x8xf32, #tpu.memory_space<vmem>>, vector<1x18x8xf32>
    tpu.vector_store %arg6[%c17_18, %c0_19, %c0_20], %10 {strides = array<i32>} : memref<18x18x8xf32, #tpu.memory_space<vmem>>, vector<1x18x8xf32>,
    %cst_21 = arith.constant 0.000000e+00 : f32
    %12 = vector.broadcast %cst_21 : f32 to vector<18x1x8xf32>
    %c0_22 = arith.constant 0 : index
    %c0_23 = arith.constant 0 : index
    %c0_24 = arith.constant 0 : index
    %13 = vector.load %arg6[%c0_22, %c0_23, %c0_24] : memref<18x18x8xf32, #tpu.memory_space<vmem>>, vector<18x1x8xf32>
    tpu.vector_store %arg6[%c0_22, %c0_23, %c0_24], %12 {strides = array<i32>} : memref<18x18x8xf32, #tpu.memory_space<vmem>>, vector<18x1x8xf32>,
    %cst_25 = arith.constant 0.000000e+00 : f32
    %14 = vector.broadcast %cst_25 : f32 to vector<18x1x8xf32>
    %c0_26 = arith.constant 0 : index
    %c17_27 = arith.constant 17 : index
    %c0_28 = arith.constant 0 : index
    %15 = vector.load %arg6[%c0_26, %c17_27, %c0_28] : memref<18x18x8xf32, #tpu.memory_space<vmem>>, vector<18x1x8xf32>
    tpu.vector_store %arg6[%c0_26, %c17_27, %c0_28], %14 {strides = array<i32>} : memref<18x18x8xf32, #tpu.memory_space<vmem>>, vector<18x1x8xf32>,
    %c0_29 = arith.constant 0 : index
    %c0_30 = arith.constant 0 : index
    %c0_31 = arith.constant 0 : index
    %c0_32 = arith.constant 0 : index
    %16 = vector.load %arg1[%c0_29, %c0_30, %c0_31, %c0_32] : memref<1x16x16x4xbf16, #tpu.memory_space<vmem>>, vector<1x16x16x4xbf16>
    %17 = vector.shape_cast %16 : vector<1x16x16x4xbf16> to vector<16x16x4xbf16>
    %18 = arith.extf %17 : vector<16x16x4xbf16> to vector<16x16x4xf32>
    %c1 = arith.constant 1 : index
    %c1_33 = arith.constant 1 : index
    %c0_34 = arith.constant 0 : index
    %19 = vector.load %arg5[%c1, %c1_33, %c0_34] : memref<18x18x4xf32, #tpu.memory_space<vmem>>, vector<16x16x4xf32>
    tpu.vector_store %arg5[%c1, %c1_33, %c0_34], %18 {strides = array<i32>} : memref<18x18x4xf32, #tpu.memory_space<vmem>>, vector<16x16x4xf32>,
    %c0_35 = arith.constant 0 : index
    %c0_36 = arith.constant 0 : index
    %c0_37 = arith.constant 0 : index
    %20 = vector.load %arg5[%c0_35, %c0_36, %c0_37] : memref<18x18x4xf32, #tpu.memory_space<vmem>>, vector<16x16x4xf32>
    %c0_38 = arith.constant 0 : index
    %c0_39 = arith.constant 0 : index
    %c0_40 = arith.constant 0 : index
    %21 = vector.load %arg7[%c0_38, %c0_39, %c0_40] : memref<16x16x36xf32, #tpu.memory_space<vmem>>, vector<16x16x4xf32>
    tpu.vector_store %arg7[%c0_38, %c0_39, %c0_40], %20 {strides = array<i32>} : memref<16x16x36xf32, #tpu.memory_space<vmem>>, vector<16x16x4xf32>,
    %c0_41 = arith.constant 0 : index
    %c1_42 = arith.constant 1 : index
    %c0_43 = arith.constant 0 : index
    %22 = vector.load %arg5[%c0_41, %c1_42, %c0_43] : memref<18x18x4xf32, #tpu.memory_space<vmem>>, vector<16x16x4xf32>
    %c0_44 = arith.constant 0 : index
    %c0_45 = arith.constant 0 : index
    %c4 = arith.constant 4 : index
    %23 = vector.load %arg7[%c0_44, %c0_45, %c4] : memref<16x16x36xf32, #tpu.memory_space<vmem>>, vector<16x16x4xf32>
    tpu.vector_store %arg7[%c0_44, %c0_45, %c4], %22 {strides = array<i32>} : memref<16x16x36xf32, #tpu.memory_space<vmem>>, vector<16x16x4xf32>,
    %c0_46 = arith.constant 0 : index
    %c2 = arith.constant 2 : index
    %c0_47 = arith.constant 0 : index
    %24 = vector.load %arg5[%c0_46, %c2, %c0_47] : memref<18x18x4xf32, #tpu.memory_space<vmem>>, vector<16x16x4xf32>
    %c0_48 = arith.constant 0 : index
    %c0_49 = arith.constant 0 : index
    %c8 = arith.constant 8 : index
    %25 = vector.load %arg7[%c0_48, %c0_49, %c8] : memref<16x16x36xf32, #tpu.memory_space<vmem>>, vector<16x16x4xf32>
    tpu.vector_store %arg7[%c0_48, %c0_49, %c8], %24 {strides = array<i32>} : memref<16x16x36xf32, #tpu.memory_space<vmem>>, vector<16x16x4xf32>,
    %c1_50 = arith.constant 1 : index
    %c0_51 = arith.constant 0 : index
    %c0_52 = arith.constant 0 : index
    %26 = vector.load %arg5[%c1_50, %c0_51, %c0_52] : memref<18x18x4xf32, #tpu.memory_space<vmem>>, vector<16x16x4xf32>
    %c0_53 = arith.constant 0 : index
    %c0_54 = arith.constant 0 : index
    %c12 = arith.constant 12 : index
    %27 = vector.load %arg7[%c0_53, %c0_54, %c12] : memref<16x16x36xf32, #tpu.memory_space<vmem>>, vector<16x16x4xf32>
    tpu.vector_store %arg7[%c0_53, %c0_54, %c12], %26 {strides = array<i32>} : memref<16x16x36xf32, #tpu.memory_space<vmem>>, vector<16x16x4xf32>,
    %c1_55 = arith.constant 1 : index
    %c1_56 = arith.constant 1 : index
    %c0_57 = arith.constant 0 : index
    %28 = vector.load %arg5[%c1_55, %c1_56, %c0_57] : memref<18x18x4xf32, #tpu.memory_space<vmem>>, vector<16x16x4xf32>
    %c0_58 = arith.constant 0 : index
    %c0_59 = arith.constant 0 : index
    %c16 = arith.constant 16 : index
    %29 = vector.load %arg7[%c0_58, %c0_59, %c16] : memref<16x16x36xf32, #tpu.memory_space<vmem>>, vector<16x16x4xf32>
    tpu.vector_store %arg7[%c0_58, %c0_59, %c16], %28 {strides = array<i32>} : memref<16x16x36xf32, #tpu.memory_space<vmem>>, vector<16x16x4xf32>,
    %c1_60 = arith.constant 1 : index
    %c2_61 = arith.constant 2 : index
    %c0_62 = arith.constant 0 : index
    %30 = vector.load %arg5[%c1_60, %c2_61, %c0_62] : memref<18x18x4xf32, #tpu.memory_space<vmem>>, vector<16x16x4xf32>
    %c0_63 = arith.constant 0 : index
    %c0_64 = arith.constant 0 : index
    %c20 = arith.constant 20 : index
    %31 = vector.load %arg7[%c0_63, %c0_64, %c20] : memref<16x16x36xf32, #tpu.memory_space<vmem>>, vector<16x16x4xf32>
    tpu.vector_store %arg7[%c0_63, %c0_64, %c20], %30 {strides = array<i32>} : memref<16x16x36xf32, #tpu.memory_space<vmem>>, vector<16x16x4xf32>,
    %c2_65 = arith.constant 2 : index
    %c0_66 = arith.constant 0 : index
    %c0_67 = arith.constant 0 : index
    %32 = vector.load %arg5[%c2_65, %c0_66, %c0_67] : memref<18x18x4xf32, #tpu.memory_space<vmem>>, vector<16x16x4xf32>
    %c0_68 = arith.constant 0 : index
    %c0_69 = arith.constant 0 : index
    %c24 = arith.constant 24 : index
    %33 = vector.load %arg7[%c0_68, %c0_69, %c24] : memref<16x16x36xf32, #tpu.memory_space<vmem>>, vector<16x16x4xf32>
    tpu.vector_store %arg7[%c0_68, %c0_69, %c24], %32 {strides = array<i32>} : memref<16x16x36xf32, #tpu.memory_space<vmem>>, vector<16x16x4xf32>,
    %c2_70 = arith.constant 2 : index
    %c1_71 = arith.constant 1 : index
    %c0_72 = arith.constant 0 : index
    %34 = vector.load %arg5[%c2_70, %c1_71, %c0_72] : memref<18x18x4xf32, #tpu.memory_space<vmem>>, vector<16x16x4xf32>
    %c0_73 = arith.constant 0 : index
    %c0_74 = arith.constant 0 : index
    %c28 = arith.constant 28 : index
    %35 = vector.load %arg7[%c0_73, %c0_74, %c28] : memref<16x16x36xf32, #tpu.memory_space<vmem>>, vector<16x16x4xf32>
    tpu.vector_store %arg7[%c0_73, %c0_74, %c28], %34 {strides = array<i32>} : memref<16x16x36xf32, #tpu.memory_space<vmem>>, vector<16x16x4xf32>,
    %c2_75 = arith.constant 2 : index
    %c2_76 = arith.constant 2 : index
    %c0_77 = arith.constant 0 : index
    %36 = vector.load %arg5[%c2_75, %c2_76, %c0_77] : memref<18x18x4xf32, #tpu.memory_space<vmem>>, vector<16x16x4xf32>
    %c0_78 = arith.constant 0 : index
    %c0_79 = arith.constant 0 : index
    %c32 = arith.constant 32 : index
    %37 = vector.load %arg7[%c0_78, %c0_79, %c32] : memref<16x16x36xf32, #tpu.memory_space<vmem>>, vector<16x16x4xf32>
    tpu.vector_store %arg7[%c0_78, %c0_79, %c32], %36 {strides = array<i32>} : memref<16x16x36xf32, #tpu.memory_space<vmem>>, vector<16x16x4xf32>,
    %c0_80 = arith.constant 0 : index
    %c0_81 = arith.constant 0 : index
    %c0_82 = arith.constant 0 : index
    %38 = vector.load %arg7[%c0_80, %c0_81, %c0_82] : memref<16x16x36xf32, #tpu.memory_space<vmem>>, vector<16x16x36xf32>
    %39 = arith.truncf %38 : vector<16x16x36xf32> to vector<16x16x36xbf16>
    %c0_83 = arith.constant 0 : index
    %c0_84 = arith.constant 0 : index
    %40 = vector.load %arg2[%c0_83, %c0_84] : memref<36x8xbf16, #tpu.memory_space<vmem>>, vector<36x8xbf16>
    "tpu.trace_start"() <{level = 10 : i32, message = "hwk,ko->hwo"}> : () -> ()
    %cst_85 = arith.constant dense<0.000000e+00> : vector<16x16x8xf32>
    %41 = tpu.matmul %39, %40, %cst_85 {dimension_numbers = #tpu.dot_dimension_numbers<[2], [0], [0, 1], [1], [0, 0, 0, 1, 1, 1], [], []>} : vector<16x16x36xbf16>, vector<36x8xbf16>, vector<16x16x8xf32> -> vector<16x16x8xf32>
    "tpu.trace_stop"() : () -> ()
    %cst_86 = arith.constant dense<0.000000e+00> : vector<8xf32>
    %42 = vector.multi_reduction <add>, %41, %cst_86 [0, 1] : vector<16x16x8xf32> to vector<8xf32>
    %43 = vector.shape_cast %42 : vector<8xf32> to vector<1x1x8xf32>
    %cst_87 = arith.constant 2.560000e+02 : f32
    %44 = vector.broadcast %cst_87 : f32 to vector<1x1x8xf32>
    %45 = arith.divf %43, %44 : vector<1x1x8xf32>
    %46 = arith.mulf %41, %41 : vector<16x16x8xf32>
    %cst_88 = arith.constant dense<0.000000e+00> : vector<8xf32>
    %47 = vector.multi_reduction <add>, %46, %cst_88 [0, 1] : vector<16x16x8xf32> to vector<8xf32>
    %48 = vector.shape_cast %47 : vector<8xf32> to vector<1x1x8xf32>
    %cst_89 = arith.constant 2.560000e+02 : f32
    %49 = vector.broadcast %cst_89 : f32 to vector<1x1x8xf32>
    %50 = arith.divf %48, %49 : vector<1x1x8xf32>
    %51 = arith.mulf %45, %45 : vector<1x1x8xf32>
    %52 = arith.subf %50, %51 : vector<1x1x8xf32>
    %53 = vector.broadcast %45 : vector<1x1x8xf32> to vector<16x16x8xf32>
    %54 = arith.subf %41, %53 : vector<16x16x8xf32>
    %cst_90 = arith.constant 9.99999974E-6 : f32
    %55 = vector.broadcast %cst_90 : f32 to vector<1x1x8xf32>
    %56 = arith.addf %52, %55 : vector<1x1x8xf32>
    %57 = math.rsqrt %56 : vector<1x1x8xf32>
    %58 = vector.broadcast %57 : vector<1x1x8xf32> to vector<16x16x8xf32>
    %59 = arith.mulf %54, %58 : vector<16x16x8xf32>
    %cst_91 = arith.constant 0.000000e+00 : f32
    %60 = vector.broadcast %cst_91 : f32 to vector<16x16x8xf32>
    %61 = arith.cmpf oge, %59, %60 : vector<16x16x8xf32>
    %cst_92 = arith.constant 0.00999999977 : f32
    %62 = vector.broadcast %cst_92 : f32 to vector<16x16x8xf32>
    %63 = arith.mulf %62, %59 : vector<16x16x8xf32>
    %64 = arith.select %61, %59, %63 : vector<16x16x8xi1>, vector<16x16x8xf32>
    %c1_93 = arith.constant 1 : index
    %c1_94 = arith.constant 1 : index
    %c0_95 = arith.constant 0 : index
    %65 = vector.load %arg6[%c1_93, %c1_94, %c0_95] : memref<18x18x8xf32, #tpu.memory_space<vmem>>, vector<16x16x8xf32>
    tpu.vector_store %arg6[%c1_93, %c1_94, %c0_95], %64 {strides = array<i32>} : memref<18x18x8xf32, #tpu.memory_space<vmem>>, vector<16x16x8xf32>,
    %c0_96 = arith.constant 0 : index
    %c0_97 = arith.constant 0 : index
    %c0_98 = arith.constant 0 : index
    %66 = vector.load %arg6[%c0_96, %c0_97, %c0_98] : memref<18x18x8xf32, #tpu.memory_space<vmem>>, vector<16x16x8xf32>
    %c0_99 = arith.constant 0 : index
    %c0_100 = arith.constant 0 : index
    %c0_101 = arith.constant 0 : index
    %67 = vector.load %arg8[%c0_99, %c0_100, %c0_101] : memref<16x16x72xf32, #tpu.memory_space<vmem>>, vector<16x16x8xf32>
    tpu.vector_store %arg8[%c0_99, %c0_100, %c0_101], %66 {strides = array<i32>} : memref<16x16x72xf32, #tpu.memory_space<vmem>>, vector<16x16x8xf32>,
    %c0_102 = arith.constant 0 : index
    %c1_103 = arith.constant 1 : index
    %c0_104 = arith.constant 0 : index
    %68 = vector.load %arg6[%c0_102, %c1_103, %c0_104] : memref<18x18x8xf32, #tpu.memory_space<vmem>>, vector<16x16x8xf32>
    %c0_105 = arith.constant 0 : index
    %c0_106 = arith.constant 0 : index
    %c8_107 = arith.constant 8 : index
    %69 = vector.load %arg8[%c0_105, %c0_106, %c8_107] : memref<16x16x72xf32, #tpu.memory_space<vmem>>, vector<16x16x8xf32>
    tpu.vector_store %arg8[%c0_105, %c0_106, %c8_107], %68 {strides = array<i32>} : memref<16x16x72xf32, #tpu.memory_space<vmem>>, vector<16x16x8xf32>,
    %c0_108 = arith.constant 0 : index
    %c2_109 = arith.constant 2 : index
    %c0_110 = arith.constant 0 : index
    %70 = vector.load %arg6[%c0_108, %c2_109, %c0_110] : memref<18x18x8xf32, #tpu.memory_space<vmem>>, vector<16x16x8xf32>
    %c0_111 = arith.constant 0 : index
    %c0_112 = arith.constant 0 : index
    %c16_113 = arith.constant 16 : index
    %71 = vector.load %arg8[%c0_111, %c0_112, %c16_113] : memref<16x16x72xf32, #tpu.memory_space<vmem>>, vector<16x16x8xf32>
    tpu.vector_store %arg8[%c0_111, %c0_112, %c16_113], %70 {strides = array<i32>} : memref<16x16x72xf32, #tpu.memory_space<vmem>>, vector<16x16x8xf32>,
    %c1_114 = arith.constant 1 : index
    %c0_115 = arith.constant 0 : index
    %c0_116 = arith.constant 0 : index
    %72 = vector.load %arg6[%c1_114, %c0_115, %c0_116] : memref<18x18x8xf32, #tpu.memory_space<vmem>>, vector<16x16x8xf32>
    %c0_117 = arith.constant 0 : index
    %c0_118 = arith.constant 0 : index
    %c24_119 = arith.constant 24 : index
    %73 = vector.load %arg8[%c0_117, %c0_118, %c24_119] : memref<16x16x72xf32, #tpu.memory_space<vmem>>, vector<16x16x8xf32>
    tpu.vector_store %arg8[%c0_117, %c0_118, %c24_119], %72 {strides = array<i32>} : memref<16x16x72xf32, #tpu.memory_space<vmem>>, vector<16x16x8xf32>,
    %c1_120 = arith.constant 1 : index
    %c1_121 = arith.constant 1 : index
    %c0_122 = arith.constant 0 : index
    %74 = vector.load %arg6[%c1_120, %c1_121, %c0_122] : memref<18x18x8xf32, #tpu.memory_space<vmem>>, vector<16x16x8xf32>
    %c0_123 = arith.constant 0 : index
    %c0_124 = arith.constant 0 : index
    %c32_125 = arith.constant 32 : index
    %75 = vector.load %arg8[%c0_123, %c0_124, %c32_125] : memref<16x16x72xf32, #tpu.memory_space<vmem>>, vector<16x16x8xf32>
    tpu.vector_store %arg8[%c0_123, %c0_124, %c32_125], %74 {strides = array<i32>} : memref<16x16x72xf32, #tpu.memory_space<vmem>>, vector<16x16x8xf32>,
    %c1_126 = arith.constant 1 : index
    %c2_127 = arith.constant 2 : index
    %c0_128 = arith.constant 0 : index
    %76 = vector.load %arg6[%c1_126, %c2_127, %c0_128] : memref<18x18x8xf32, #tpu.memory_space<vmem>>, vector<16x16x8xf32>
    %c0_129 = arith.constant 0 : index
    %c0_130 = arith.constant 0 : index
    %c40 = arith.constant 40 : index
    %77 = vector.load %arg8[%c0_129, %c0_130, %c40] : memref<16x16x72xf32, #tpu.memory_space<vmem>>, vector<16x16x8xf32>
    tpu.vector_store %arg8[%c0_129, %c0_130, %c40], %76 {strides = array<i32>} : memref<16x16x72xf32, #tpu.memory_space<vmem>>, vector<16x16x8xf32>,
    %c2_131 = arith.constant 2 : index
    %c0_132 = arith.constant 0 : index
    %c0_133 = arith.constant 0 : index
    %78 = vector.load %arg6[%c2_131, %c0_132, %c0_133] : memref<18x18x8xf32, #tpu.memory_space<vmem>>, vector<16x16x8xf32>
    %c0_134 = arith.constant 0 : index
    %c0_135 = arith.constant 0 : index
    %c48 = arith.constant 48 : index
    %79 = vector.load %arg8[%c0_134, %c0_135, %c48] : memref<16x16x72xf32, #tpu.memory_space<vmem>>, vector<16x16x8xf32>
    tpu.vector_store %arg8[%c0_134, %c0_135, %c48], %78 {strides = array<i32>} : memref<16x16x72xf32, #tpu.memory_space<vmem>>, vector<16x16x8xf32>,
    %c2_136 = arith.constant 2 : index
    %c1_137 = arith.constant 1 : index
    %c0_138 = arith.constant 0 : index
    %80 = vector.load %arg6[%c2_136, %c1_137, %c0_138] : memref<18x18x8xf32, #tpu.memory_space<vmem>>, vector<16x16x8xf32>
    %c0_139 = arith.constant 0 : index
    %c0_140 = arith.constant 0 : index
    %c56 = arith.constant 56 : index
    %81 = vector.load %arg8[%c0_139, %c0_140, %c56] : memref<16x16x72xf32, #tpu.memory_space<vmem>>, vector<16x16x8xf32>
    tpu.vector_store %arg8[%c0_139, %c0_140, %c56], %80 {strides = array<i32>} : memref<16x16x72xf32, #tpu.memory_space<vmem>>, vector<16x16x8xf32>,
    %c2_141 = arith.constant 2 : index
    %c2_142 = arith.constant 2 : index
    %c0_143 = arith.constant 0 : index
    %82 = vector.load %arg6[%c2_141, %c2_142, %c0_143] : memref<18x18x8xf32, #tpu.memory_space<vmem>>, vector<16x16x8xf32>
    %c0_144 = arith.constant 0 : index
    %c0_145 = arith.constant 0 : index
    %c64 = arith.constant 64 : index
    %83 = vector.load %arg8[%c0_144, %c0_145, %c64] : memref<16x16x72xf32, #tpu.memory_space<vmem>>, vector<16x16x8xf32>
    tpu.vector_store %arg8[%c0_144, %c0_145, %c64], %82 {strides = array<i32>} : memref<16x16x72xf32, #tpu.memory_space<vmem>>, vector<16x16x8xf32>,
    %c0_146 = arith.constant 0 : index
    %c0_147 = arith.constant 0 : index
    %c0_148 = arith.constant 0 : index
    %84 = vector.load %arg8[%c0_146, %c0_147, %c0_148] : memref<16x16x72xf32, #tpu.memory_space<vmem>>, vector<16x16x72xf32>
    %85 = arith.truncf %84 : vector<16x16x72xf32> to vector<16x16x72xbf16>
    %c0_149 = arith.constant 0 : index
    %c0_150 = arith.constant 0 : index
    %86 = vector.load %arg3[%c0_149, %c0_150] : memref<72x8xbf16, #tpu.memory_space<vmem>>, vector<72x8xbf16>
    "tpu.trace_start"() <{level = 10 : i32, message = "hwk,ko->hwo"}> : () -> ()
    %cst_151 = arith.constant dense<0.000000e+00> : vector<16x16x8xf32>
    %87 = tpu.matmul %85, %86, %cst_151 {dimension_numbers = #tpu.dot_dimension_numbers<[2], [0], [0, 1], [1], [0, 0, 0, 1, 1, 1], [], []>} : vector<16x16x72xbf16>, vector<72x8xbf16>, vector<16x16x8xf32> -> vector<16x16x8xf32>
    "tpu.trace_stop"() : () -> ()
    %cst_152 = arith.constant dense<0.000000e+00> : vector<8xf32>
    %88 = vector.multi_reduction <add>, %87, %cst_152 [0, 1] : vector<16x16x8xf32> to vector<8xf32>
    %89 = vector.shape_cast %88 : vector<8xf32> to vector<1x1x8xf32>
    %cst_153 = arith.constant 2.560000e+02 : f32
    %90 = vector.broadcast %cst_153 : f32 to vector<1x1x8xf32>
    %91 = arith.divf %89, %90 : vector<1x1x8xf32>
    %92 = arith.mulf %87, %87 : vector<16x16x8xf32>
    %cst_154 = arith.constant dense<0.000000e+00> : vector<8xf32>
    %93 = vector.multi_reduction <add>, %92, %cst_154 [0, 1] : vector<16x16x8xf32> to vector<8xf32>
    %94 = vector.shape_cast %93 : vector<8xf32> to vector<1x1x8xf32>
    %cst_155 = arith.constant 2.560000e+02 : f32
    %95 = vector.broadcast %cst_155 : f32 to vector<1x1x8xf32>
    %96 = arith.divf %94, %95 : vector<1x1x8xf32>
    %97 = arith.mulf %91, %91 : vector<1x1x8xf32>
    %98 = arith.subf %96, %97 : vector<1x1x8xf32>
    %99 = vector.broadcast %91 : vector<1x1x8xf32> to vector<16x16x8xf32>
    %100 = arith.subf %87, %99 : vector<16x16x8xf32>
    %cst_156 = arith.constant 9.99999974E-6 : f32
    %101 = vector.broadcast %cst_156 : f32 to vector<1x1x8xf32>
    %102 = arith.addf %98, %101 : vector<1x1x8xf32>
    %103 = math.rsqrt %102 : vector<1x1x8xf32>
    %104 = vector.broadcast %103 : vector<1x1x8xf32> to vector<16x16x8xf32>
    %105 = arith.mulf %100, %104 : vector<16x16x8xf32>
    %cst_157 = arith.constant 0.000000e+00 : f32
    %106 = vector.broadcast %cst_157 : f32 to vector<16x16x8xf32>
    %107 = arith.cmpf oge, %105, %106 : vector<16x16x8xf32>
    %cst_158 = arith.constant 0.00999999977 : f32
    %108 = vector.broadcast %cst_158 : f32 to vector<16x16x8xf32>
    %109 = arith.mulf %108, %105 : vector<16x16x8xf32>
    %110 = arith.select %107, %105, %109 : vector<16x16x8xi1>, vector<16x16x8xf32>
    %c0_159 = arith.constant 0 : index
    %c0_160 = arith.constant 0 : index
    %c0_161 = arith.constant 0 : index
    %c0_162 = arith.constant 0 : index
    %111 = vector.load %arg4[%c0_159, %c0_160, %c0_161, %c0_162] : memref<1x16x16x8xf32, #tpu.memory_space<vmem>>, vector<1x16x16x8xf32>
    %112 = vector.shape_cast %111 : vector<1x16x16x8xf32> to vector<16x16x8xf32>
    %113 = vector.shape_cast %110 : vector<16x16x8xf32> to vector<1x16x16x8xf32>
    tpu.vector_store %arg4[%c0_159, %c0_160, %c0_161, %c0_162], %113 {strides = array<i32>} : memref<1x16x16x8xf32, #tpu.memory_space<vmem>>, vector<1x16x16x8xf32>,
    return
  }
  func.func @transform_0(%arg0: i32) -> (i32, i32, i32, i32) {
    %c0_i32 = arith.constant 0 : i32
    %c0_i32_0 = arith.constant 0 : i32
    %c0_i32_1 = arith.constant 0 : i32
    %c0_i32_2 = arith.constant 0 : i32
    return %arg0, %c0_i32, %c0_i32_0, %c0_i32_1 : i32, i32, i32, i32
  }
  func.func @transform_1(%arg0: i32) -> (i32, i32) {
    %c0_i32 = arith.constant 0 : i32
    %c0_i32_0 = arith.constant 0 : i32
    %c0_i32_1 = arith.constant 0 : i32
    return %c0_i32, %c0_i32_0 : i32, i32
  }
  func.func @transform_2(%arg0: i32) -> (i32, i32) {
    %c0_i32 = arith.constant 0 : i32
    %c0_i32_0 = arith.constant 0 : i32
    %c0_i32_1 = arith.constant 0 : i32
    return %c0_i32, %c0_i32_0 : i32, i32
  }
  func.func @transform_3(%arg0: i32) -> (i32, i32, i32, i32) {
    %c0_i32 = arith.constant 0 : i32
    %c0_i32_0 = arith.constant 0 : i32
    %c0_i32_1 = arith.constant 0 : i32
    %c0_i32_2 = arith.constant 0 : i32
    return %arg0, %c0_i32, %c0_i32_0, %c0_i32_1 : i32, i32, i32, i32
  }
}

</mosaic_0001>

<llo_original>
// kernel: tpu_custom_call.1
$region0: #{tpu_custom_call.1}
  #allocation0 [shape = 'u32[]', space=smem, size = 0x4, offset = 0x4, fixed_abs, tag = 'smem constant byte address 0x4 - core index']
  #allocation1 [shape = 'u32[72,128]{1,0:T(1,128)}', space=vmem, size = 0x9000, scoped, tag = 'internal scratch']
  #allocation2 [shape = 'f32[18,18,4]{2,1,0:T(8,128)}', space=vmem, size = 0x36000, scoped, tag = 'scratch operand']
  #allocation3 [shape = 'f32[18,18,8]{2,1,0:T(8,128)}', space=vmem, size = 0x36000, scoped, tag = 'scratch operand']
  #allocation4 [shape = 'f32[16,16,36]{2,1,0:T(8,128)}', space=vmem, size = 0x20000, scoped, tag = 'scratch operand']
  #allocation5 [shape = 'f32[16,16,72]{2,1,0:T(8,128)}', space=vmem, size = 0x20000, scoped, tag = 'scratch operand']
  %s0 = inlined_call_operand.vmem [shape: bf16[2,16,16,4], index: 0, kind: input, shape index: {}]
  %s1 = inlined_call_operand.vmem [shape: bf16[36,8], index: 1, kind: input, shape index: {}]
  %s2 = inlined_call_operand.vmem [shape: bf16[72,8], index: 2, kind: input, shape index: {}]
  %s3 = inlined_call_operand.vmem [shape: f32[2,16,16,8], index: 3, kind: output, shape index: {}]
  %s4 = sld [smem:[#allocation0]]
  $region45: #{tpu_custom_call.1} parent=0
    _
  %s6 = ssub.s32 1, %s4
  %s7 = scalar_select 0, %s6, %s4
  loop: start=0, step=1, limit=4
  $region2: #{tpu_custom_call.1} parent=0 // loop_pre_header
    _
  $region3: #{tpu_custom_call.1} parent=0 // loop_header
    %s9 = sphi 0, %s13
    %p10 = scmp.ge.s32.totalorder %s9, 4
    %s19 = sphi 0, %s21
    %s22 = sphi 0, %s19
    %s23 = sphi 0, %s22
    %s39 = sphi 0, %s23
    %s43 = sphi 0, %s43
    %s45 = sphi 0, %s43
    %s46 = sphi 0, %s45
    %s60 = sphi 0, %s46
    %s64 = sphi 0, %s64
    %s66 = sphi 0, %s64
    %s67 = sphi 0, %s66
    %s81 = sphi 0, %s67
    %s87 = sphi 0, %s89
    %s90 = sphi 0, %s87
    %s91 = sphi 0, %s90
    %s107 = sphi 0, %s91
  $region4: #{tpu_custom_call.1} parent=0 // loop_header_branch
    %12 = sbr.rel (%p10) target = $region8
  $region5: #{tpu_custom_call.1} parent=0 // loop_body
    %s14 = ssub.s32 %s9, 1
    %s15 = ssub.s32 %s9, 2
    %s16 = sadd.s32 %s9, 1
    %s17 = ssub.s32 %s9, %s16
    %p18 = scmp.eq.s32.totalorder %s17, 0
    %s20 = sadd.s32 %s19, 1
    %s21 = scalar_select %p18, %s19, %s20
    %p24 = pneg %p18
    %p25 = scmp.eq.s32.totalorder %s9, 1
    %p26 = por %p24, %p25
    %p27 = scmp.ne.s32.totalorder %s19, %s22
    %p28 = scmp.eq.s32.totalorder %s9, 0
    %p29 = por %p27, %p28
    %p30 = scmp.ne.s32.totalorder %s19, %s22
    %p31 = scmp.eq.s32.totalorder %s14, 1
    %p32 = por %p30, %p31
    %p33 = scmp.ne.s32.totalorder %s22, %s23
    %p34 = scmp.eq.s32.totalorder %s14, 0
    %p35 = por %p33, %p34
    %p36 = scmp.ne.s32.totalorder %s22, %s23
    %p37 = scmp.eq.s32.totalorder %s15, 1
    %p38 = por %p36, %p37
    %p40 = scmp.ne.s32.totalorder %s23, %s39
    %p41 = scmp.eq.s32.totalorder %s15, 0
    %p42 = por %p40, %p41
    %s44 = sadd.s32 %s43, 1
    %p47 = scmp.eq.s32.totalorder %s9, 1
    %p48 = scmp.ne.s32.totalorder %s43, %s45
    %p49 = scmp.eq.s32.totalorder %s9, 0
    %p50 = por %p48, %p49
    %p51 = scmp.ne.s32.totalorder %s43, %s45
    %p52 = scmp.eq.s32.totalorder %s14, 1
    %p53 = por %p51, %p52
    %p54 = scmp.ne.s32.totalorder %s45, %s46
    %p55 = scmp.eq.s32.totalorder %s14, 0
    %p56 = por %p54, %p55
    %p57 = scmp.ne.s32.totalorder %s45, %s46
    %p58 = scmp.eq.s32.totalorder %s15, 1
    %p59 = por %p57, %p58
    %p61 = scmp.ne.s32.totalorder %s46, %s60
    %p62 = scmp.eq.s32.totalorder %s15, 0
    %p63 = por %p61, %p62
    %s65 = sadd.s32 %s64, 1
    %p68 = scmp.eq.s32.totalorder %s9, 1
    %p69 = scmp.ne.s32.totalorder %s64, %s66
    %p70 = scmp.eq.s32.totalorder %s9, 0
    %p71 = por %p69, %p70
    %p72 = scmp.ne.s32.totalorder %s64, %s66
    %p73 = scmp.eq.s32.totalorder %s14, 1
    %p74 = por %p72, %p73
    %p75 = scmp.ne.s32.totalorder %s66, %s67
    %p76 = scmp.eq.s32.totalorder %s14, 0
    %p77 = por %p75, %p76
    %p78 = scmp.ne.s32.totalorder %s66, %s67
    %p79 = scmp.eq.s32.totalorder %s15, 1
    %p80 = por %p78, %p79
    %p82 = scmp.ne.s32.totalorder %s67, %s81
    %p83 = scmp.eq.s32.totalorder %s15, 0
    %p84 = por %p82, %p83
    %s85 = ssub.s32 %s9, %s16
    %p86 = scmp.eq.s32.totalorder %s85, 0
    %s88 = sadd.s32 %s87, 1
    %s89 = scalar_select %p86, %s87, %s88
    %p92 = pneg %p86
    %p93 = scmp.eq.s32.totalorder %s9, 1
    %p94 = por %p92, %p93
    %p95 = scmp.ne.s32.totalorder %s87, %s90
    %p96 = scmp.eq.s32.totalorder %s9, 0
    %p97 = por %p95, %p96
    %p98 = scmp.ne.s32.totalorder %s87, %s90
    %p99 = scmp.eq.s32.totalorder %s14, 1
    %p100 = por %p98, %p99
    %p101 = scmp.ne.s32.totalorder %s90, %s91
    %p102 = scmp.eq.s32.totalorder %s14, 0
    %p103 = por %p101, %p102
    %p104 = scmp.ne.s32.totalorder %s90, %s91
    %p105 = scmp.eq.s32.totalorder %s15, 1
    %p106 = por %p104, %p105
    %p108 = scmp.ne.s32.totalorder %s91, %s107
    %p109 = scmp.eq.s32.totalorder %s15, 0
    %p110 = por %p108, %p109
    %p111 = scmp.le.s32.totalorder 1, %s9
    %p112 = scmp.lt.s32.totalorder %s9, 3
    %p113 = pnand %p111, %p112
    %p114 = pneg %p113
    // Predicated region
    $region9: #{tpu_custom_call.1} parent=5 // pred_check
      _
    $region10: #{tpu_custom_call.1} parent=5 // pred_check_branch
      %116 = sbr.rel (%p113) target = $region12
    $region11: #{tpu_custom_call.1} parent=5 // pred_region
      %s117 = ssub.s32 %s9, 1
      // Predicated region
      $region13: #{tpu_custom_call.1} parent=11 // pred_check
        %p118 = pneg %p56
      $region14: #{tpu_custom_call.1} parent=11 // pred_check_branch
        %120 = sbr.rel (%p118) target = $region16
      $region15: #{tpu_custom_call.1} parent=11 // pred_region
        _
      $region16: #{tpu_custom_call.1} parent=11 // pred_fallthru
        _
      // Predicated region
      $region17: #{tpu_custom_call.1} parent=11 // pred_check
        %p121 = pneg %p77
      $region18: #{tpu_custom_call.1} parent=11 // pred_check_branch
        %123 = sbr.rel (%p121) target = $region20
      $region19: #{tpu_custom_call.1} parent=11 // pred_region
        _
      $region20: #{tpu_custom_call.1} parent=11 // pred_fallthru
        _
    $region12: #{tpu_custom_call.1} parent=5 // pred_fallthru
      _
    %p124 = scmp.lt.s32.totalorder %s9, 2
    // Predicated region
    $region21: #{tpu_custom_call.1} parent=5 // pred_check
      %p125 = pneg %p124
    $region22: #{tpu_custom_call.1} parent=5 // pred_check_branch
      %127 = sbr.rel (%p125) target = $region24
    $region23: #{tpu_custom_call.1} parent=5 // pred_region
      // Predicated region
      $region25: #{tpu_custom_call.1} parent=23 // pred_check
        %p128 = pneg %p29
      $region26: #{tpu_custom_call.1} parent=23 // pred_check_branch
        %130 = sbr.rel (%p128) target = $region28
      $region27: #{tpu_custom_call.1} parent=23 // pred_region
        %p131 = scmp.lt.s32.totalorder %s9, 1
        %s132 = scalar_select %p131, %s9, 1
        %s133 = smul.addr %s132, 32
        %s134 = smul.addr %s133, 4
        %s135 = scalar_lea.vmem %s0, %s134
      $region28: #{tpu_custom_call.1} parent=23 // pred_fallthru
        _
    $region24: #{tpu_custom_call.1} parent=5 // pred_fallthru
      _
    %p136 = scmp.le.s32.totalorder 1, %s9
    %p137 = scmp.lt.s32.totalorder %s9, 3
    %p138 = pnand %p136, %p137
    %p139 = pneg %p138
    // Predicated region
    $region29: #{tpu_custom_call.1} parent=5 // pred_check
      _
    $region30: #{tpu_custom_call.1} parent=5 // pred_check_branch
      %141 = sbr.rel (%p138) target = $region32
    $region31: #{tpu_custom_call.1} parent=5 // pred_region
      %s142 = ssub.s32 %s9, 1
      %p143 = scmp.lt.s32.totalorder %s14, 1
      %s144 = scalar_select %p143, %s14, 1
      %s145 = smul.addr %s144, 32
      %s146 = smul.addr %s145, 4
      %s147 = scalar_lea.vmem %s0, %s146
      %p148 = pneg %p35
      %p149 = pneg %p32
      %p150 = pneg %p56
      %p151 = pneg %p53
      %p152 = pneg %p77
      %p153 = pneg %p74
      %p154 = pneg %p103
      %p155 = pneg %p100
      %p156 = scmp.lt.s32.totalorder %s14, 1
      %s157 = scalar_select %p156, %s14, 1
      %s158 = smul.addr %s157, 32
      %s159 = smul.addr %s158, 8
      %s160 = scalar_lea.vmem %s3, %s159
      %p161 = scmp.lt.s32.totalorder %s14, 1
      %s162 = scalar_select %p161, %s14, 1
      %s163 = smul.addr %s162, 32
      %s164 = smul.addr %s163, 4
      %s165 = scalar_lea.vmem %s0, %s164
      %p166 = scmp.lt.s32.totalorder %s14, 1
      %s167 = scalar_select %p166, %s14, 1
      %s168 = smul.addr %s167, 32
      %s169 = smul.addr %s168, 8
      %s170 = scalar_lea.vmem %s3, %s169
      %vm172 = vcmask 31744
      %173 = vst.msk [vmem:[#allocation2] sm:$0xff] %vm172, 0.0
      %174 = vst.msk [vmem:[#allocation2 + $0x8] sm:$0xff] %vm172, 0.0
      %vm175 = vcmask 25600
      %176 = vst.msk [vmem:[#allocation2 + $0x10] sm:$0x3] %vm175, 0.0
      %s177 = scalar_lea.vmem [#allocation2], 408
      %178 = vst.msk [vmem:[%s177] sm:$0xff] %vm172, 0.0
      %179 = vst.msk [vmem:[%s177 + $0x8] sm:$0xff] %vm172, 0.0
      %180 = vst.msk [vmem:[%s177 + $0x10] sm:$0x3] %vm175, 0.0
      %vm181 = vcmask 24576
      %182 = vst.msk [vmem:[#allocation2] sm:$0x1] %vm181, 0.0
      %183 = vst.msk [vmem:[#allocation2 + $0x18] sm:$0x1] %vm181, 0.0
      %184 = vst.msk [vmem:[#allocation2 + $0x30] sm:$0x1] %vm181, 0.0
      %185 = vst.msk [vmem:[#allocation2 + $0x48] sm:$0x1] %vm181, 0.0
      %186 = vst.msk [vmem:[#allocation2 + $0x60] sm:$0x1] %vm181, 0.0
      %187 = vst.msk [vmem:[#allocation2 + $0x78] sm:$0x1] %vm181, 0.0
      %188 = vst.msk [vmem:[#allocation2 + $0x90] sm:$0x1] %vm181, 0.0
      %189 = vst.msk [vmem:[#allocation2 + $0xa8] sm:$0x1] %vm181, 0.0
      %190 = vst.msk [vmem:[#allocation2 + $0xc0] sm:$0x1] %vm181, 0.0
      %191 = vst.msk [vmem:[#allocation2 + $0xd8] sm:$0x1] %vm181, 0.0
      %192 = vst.msk [vmem:[#allocation2 + $0xf0] sm:$0x1] %vm181, 0.0
      %193 = vst.msk [vmem:[#allocation2 + $0x108] sm:$0x1] %vm181, 0.0
      %194 = vst.msk [vmem:[#allocation2 + $0x120] sm:$0x1] %vm181, 0.0
      %195 = vst.msk [vmem:[#allocation2 + $0x138] sm:$0x1] %vm181, 0.0
      %196 = vst.msk [vmem:[#allocation2 + $0x150] sm:$0x1] %vm181, 0.0
      %197 = vst.msk [vmem:[#allocation2 + $0x168] sm:$0x1] %vm181, 0.0
      %198 = vst.msk [vmem:[#allocation2 + $0x180] sm:$0x1] %vm181, 0.0
      %199 = vst.msk [vmem:[#allocation2 + $0x198] sm:$0x1] %vm181, 0.0
      %200 = vst.msk [vmem:[#allocation2 + $0x11] sm:$0x1] %vm181, 0.0
      %201 = vst.msk [vmem:[#allocation2 + $0x29] sm:$0x1] %vm181, 0.0
      %202 = vst.msk [vmem:[#allocation2 + $0x41] sm:$0x1] %vm181, 0.0
      %203 = vst.msk [vmem:[#allocation2 + $0x59] sm:$0x1] %vm181, 0.0
      %204 = vst.msk [vmem:[#allocation2 + $0x71] sm:$0x1] %vm181, 0.0
      %205 = vst.msk [vmem:[#allocation2 + $0x89] sm:$0x1] %vm181, 0.0
      %206 = vst.msk [vmem:[#allocation2 + $0xa1] sm:$0x1] %vm181, 0.0
      %207 = vst.msk [vmem:[#allocation2 + $0xb9] sm:$0x1] %vm181, 0.0
      %208 = vst.msk [vmem:[#allocation2 + $0xd1] sm:$0x1] %vm181, 0.0
      %209 = vst.msk [vmem:[#allocation2 + $0xe9] sm:$0x1] %vm181, 0.0
      %210 = vst.msk [vmem:[#allocation2 + $0x101] sm:$0x1] %vm181, 0.0
      %211 = vst.msk [vmem:[#allocation2 + $0x119] sm:$0x1] %vm181, 0.0
      %212 = vst.msk [vmem:[#allocation2 + $0x131] sm:$0x1] %vm181, 0.0
      %213 = vst.msk [vmem:[#allocation2 + $0x149] sm:$0x1] %vm181, 0.0
      %214 = vst.msk [vmem:[#allocation2 + $0x161] sm:$0x1] %vm181, 0.0
      %215 = vst.msk [vmem:[#allocation2 + $0x179] sm:$0x1] %vm181, 0.0
      %216 = vst.msk [vmem:[#allocation2 + $0x191] sm:$0x1] %vm181, 0.0
      %217 = vst.msk [vmem:[#allocation2 + $0x1a9] sm:$0x1] %vm181, 0.0
      %vm218 = vcmask 64512
      %219 = vst.msk [vmem:[#allocation3] sm:$0xff] %vm218, 0.0
      %220 = vst.msk [vmem:[#allocation3 + $0x8] sm:$0xff] %vm218, 0.0
      %vm221 = vcmask 58368
      %222 = vst.msk [vmem:[#allocation3 + $0x10] sm:$0x3] %vm221, 0.0
      %s223 = scalar_lea.vmem [#allocation3], 408
      %224 = vst.msk [vmem:[%s223] sm:$0xff] %vm218, 0.0
      %225 = vst.msk [vmem:[%s223 + $0x8] sm:$0xff] %vm218, 0.0
      %226 = vst.msk [vmem:[%s223 + $0x10] sm:$0x3] %vm221, 0.0
      %vm227 = vcmask 57344
      %228 = vst.msk [vmem:[#allocation3] sm:$0x1] %vm227, 0.0
      %229 = vst.msk [vmem:[#allocation3 + $0x18] sm:$0x1] %vm227, 0.0
      %230 = vst.msk [vmem:[#allocation3 + $0x30] sm:$0x1] %vm227, 0.0
      %231 = vst.msk [vmem:[#allocation3 + $0x48] sm:$0x1] %vm227, 0.0
      %232 = vst.msk [vmem:[#allocation3 + $0x60] sm:$0x1] %vm227, 0.0
      %233 = vst.msk [vmem:[#allocation3 + $0x78] sm:$0x1] %vm227, 0.0
      %234 = vst.msk [vmem:[#allocation3 + $0x90] sm:$0x1] %vm227, 0.0
      %235 = vst.msk [vmem:[#allocation3 + $0xa8] sm:$0x1] %vm227, 0.0
      %236 = vst.msk [vmem:[#allocation3 + $0xc0] sm:$0x1] %vm227, 0.0
      %237 = vst.msk [vmem:[#allocation3 + $0xd8] sm:$0x1] %vm227, 0.0
      %238 = vst.msk [vmem:[#allocation3 + $0xf0] sm:$0x1] %vm227, 0.0
      %239 = vst.msk [vmem:[#allocation3 + $0x108] sm:$0x1] %vm227, 0.0
      %240 = vst.msk [vmem:[#allocation3 + $0x120] sm:$0x1] %vm227, 0.0
      %241 = vst.msk [vmem:[#allocation3 + $0x138] sm:$0x1] %vm227, 0.0
      %242 = vst.msk [vmem:[#allocation3 + $0x150] sm:$0x1] %vm227, 0.0
      %243 = vst.msk [vmem:[#allocation3 + $0x168] sm:$0x1] %vm227, 0.0
      %244 = vst.msk [vmem:[#allocation3 + $0x180] sm:$0x1] %vm227, 0.0
      %245 = vst.msk [vmem:[#allocation3 + $0x198] sm:$0x1] %vm227, 0.0
      %246 = vst.msk [vmem:[#allocation3 + $0x11] sm:$0x1] %vm227, 0.0
      %247 = vst.msk [vmem:[#allocation3 + $0x29] sm:$0x1] %vm227, 0.0
      %248 = vst.msk [vmem:[#allocation3 + $0x41] sm:$0x1] %vm227, 0.0
      %249 = vst.msk [vmem:[#allocation3 + $0x59] sm:$0x1] %vm227, 0.0
      %250 = vst.msk [vmem:[#allocation3 + $0x71] sm:$0x1] %vm227, 0.0
      %251 = vst.msk [vmem:[#allocation3 + $0x89] sm:$0x1] %vm227, 0.0
      %252 = vst.msk [vmem:[#allocation3 + $0xa1] sm:$0x1] %vm227, 0.0
      %253 = vst.msk [vmem:[#allocation3 + $0xb9] sm:$0x1] %vm227, 0.0
      %254 = vst.msk [vmem:[#allocation3 + $0xd1] sm:$0x1] %vm227, 0.0
      %255 = vst.msk [vmem:[#allocation3 + $0xe9] sm:$0x1] %vm227, 0.0
      %256 = vst.msk [vmem:[#allocation3 + $0x101] sm:$0x1] %vm227, 0.0
      %257 = vst.msk [vmem:[#allocation3 + $0x119] sm:$0x1] %vm227, 0.0
      %258 = vst.msk [vmem:[#allocation3 + $0x131] sm:$0x1] %vm227, 0.0
      %259 = vst.msk [vmem:[#allocation3 + $0x149] sm:$0x1] %vm227, 0.0
      %260 = vst.msk [vmem:[#allocation3 + $0x161] sm:$0x1] %vm227, 0.0
      %261 = vst.msk [vmem:[#allocation3 + $0x179] sm:$0x1] %vm227, 0.0
      %262 = vst.msk [vmem:[#allocation3 + $0x191] sm:$0x1] %vm227, 0.0
      %263 = vst.msk [vmem:[#allocation3 + $0x1a9] sm:$0x1] %vm227, 0.0
      %v264 = vld [vmem:[%s165] sm:$0xf]
      %v265 = vld [vmem:[%s165 + $0x4] sm:$0xf]
      %v266 = vld [vmem:[%s165 + $0x8] sm:$0xf]
      %v267 = vld [vmem:[%s165 + $0xc] sm:$0xf]
      %v268 = vld [vmem:[%s165 + $0x10] sm:$0xf]
      %v269 = vld [vmem:[%s165 + $0x14] sm:$0xf]
      %v270 = vld [vmem:[%s165 + $0x18] sm:$0xf]
      %v271 = vld [vmem:[%s165 + $0x1c] sm:$0xf]
      %v272 = vld [vmem:[%s165 + $0x20] sm:$0xf]
      %v273 = vld [vmem:[%s165 + $0x24] sm:$0xf]
      %v274 = vld [vmem:[%s165 + $0x28] sm:$0xf]
      %v275 = vld [vmem:[%s165 + $0x2c] sm:$0xf]
      %v276 = vld [vmem:[%s165 + $0x30] sm:$0xf]
      %v277 = vld [vmem:[%s165 + $0x34] sm:$0xf]
      %v278 = vld [vmem:[%s165 + $0x38] sm:$0xf]
      %v279 = vld [vmem:[%s165 + $0x3c] sm:$0xf]
      %v280 = vld [vmem:[%s165 + $0x40] sm:$0xf]
      %v281 = vld [vmem:[%s165 + $0x44] sm:$0xf]
      %v282 = vld [vmem:[%s165 + $0x48] sm:$0xf]
      %v283 = vld [vmem:[%s165 + $0x4c] sm:$0xf]
      %v284 = vld [vmem:[%s165 + $0x50] sm:$0xf]
      %v285 = vld [vmem:[%s165 + $0x54] sm:$0xf]
      %v286 = vld [vmem:[%s165 + $0x58] sm:$0xf]
      %v287 = vld [vmem:[%s165 + $0x5c] sm:$0xf]
      %v288 = vld [vmem:[%s165 + $0x60] sm:$0xf]
      %v289 = vld [vmem:[%s165 + $0x64] sm:$0xf]
      %v290 = vld [vmem:[%s165 + $0x68] sm:$0xf]
      %v291 = vld [vmem:[%s165 + $0x6c] sm:$0xf]
      %v292 = vld [vmem:[%s165 + $0x70] sm:$0xf]
      %v293 = vld [vmem:[%s165 + $0x74] sm:$0xf]
      %v294 = vld [vmem:[%s165 + $0x78] sm:$0xf]
      %v295 = vld [vmem:[%s165 + $0x7c] sm:$0xf]
      %v296 = vunpack.c.l.bf16 %v264
      %v297 = vunpack.c.l.bf16 %v265
      %v298 = vunpack.c.l.bf16 %v266
      %v299 = vunpack.c.l.bf16 %v267
      %v300 = vunpack.c.l.bf16 %v268
      %v301 = vunpack.c.l.bf16 %v269
      %v302 = vunpack.c.l.bf16 %v270
      %v303 = vunpack.c.l.bf16 %v271
      %v304 = vunpack.c.l.bf16 %v272
      %v305 = vunpack.c.l.bf16 %v273
      %v306 = vunpack.c.l.bf16 %v274
      %v307 = vunpack.c.l.bf16 %v275
      %v308 = vunpack.c.l.bf16 %v276
      %v309 = vunpack.c.l.bf16 %v277
      %v310 = vunpack.c.l.bf16 %v278
      %v311 = vunpack.c.l.bf16 %v279
      %v312 = vunpack.c.l.bf16 %v280
      %v313 = vunpack.c.l.bf16 %v281
      %v314 = vunpack.c.l.bf16 %v282
      %v315 = vunpack.c.l.bf16 %v283
      %v316 = vunpack.c.l.bf16 %v284
      %v317 = vunpack.c.l.bf16 %v285
      %v318 = vunpack.c.l.bf16 %v286
      %v319 = vunpack.c.l.bf16 %v287
      %v320 = vunpack.c.l.bf16 %v288
      %v321 = vunpack.c.l.bf16 %v289
      %v322 = vunpack.c.l.bf16 %v290
      %v323 = vunpack.c.l.bf16 %v291
      %v324 = vunpack.c.l.bf16 %v292
      %v325 = vunpack.c.l.bf16 %v293
      %v326 = vunpack.c.l.bf16 %v294
      %v327 = vunpack.c.l.bf16 %v295
      %s328 = scalar_lea.vmem [#allocation2], 24
      %329 = vst.msk [vmem:[%s328 + $0x1] sm:$0xff] %vm172, %v296
      %330 = vst.msk [vmem:[%s328 + $0x9] sm:$0xff] %vm172, %v297
      %331 = vst.msk [vmem:[%s328 + $0x19] sm:$0xff] %vm172, %v298
      %332 = vst.msk [vmem:[%s328 + $0x21] sm:$0xff] %vm172, %v299
      %333 = vst.msk [vmem:[%s328 + $0x31] sm:$0xff] %vm172, %v300
      %334 = vst.msk [vmem:[%s328 + $0x39] sm:$0xff] %vm172, %v301
      %335 = vst.msk [vmem:[%s328 + $0x49] sm:$0xff] %vm172, %v302
      %336 = vst.msk [vmem:[%s328 + $0x51] sm:$0xff] %vm172, %v303
      %337 = vst.msk [vmem:[%s328 + $0x61] sm:$0xff] %vm172, %v304
      %338 = vst.msk [vmem:[%s328 + $0x69] sm:$0xff] %vm172, %v305
      %339 = vst.msk [vmem:[%s328 + $0x79] sm:$0xff] %vm172, %v306
      %340 = vst.msk [vmem:[%s328 + $0x81] sm:$0xff] %vm172, %v307
      %341 = vst.msk [vmem:[%s328 + $0x91] sm:$0xff] %vm172, %v308
      %342 = vst.msk [vmem:[%s328 + $0x99] sm:$0xff] %vm172, %v309
      %343 = vst.msk [vmem:[%s328 + $0xa9] sm:$0xff] %vm172, %v310
      %344 = vst.msk [vmem:[%s328 + $0xb1] sm:$0xff] %vm172, %v311
      %345 = vst.msk [vmem:[%s328 + $0xc1] sm:$0xff] %vm172, %v312
      %346 = vst.msk [vmem:[%s328 + $0xc9] sm:$0xff] %vm172, %v313
      %347 = vst.msk [vmem:[%s328 + $0xd9] sm:$0xff] %vm172, %v314
      %348 = vst.msk [vmem:[%s328 + $0xe1] sm:$0xff] %vm172, %v315
      %349 = vst.msk [vmem:[%s328 + $0xf1] sm:$0xff] %vm172, %v316
      %350 = vst.msk [vmem:[%s328 + $0xf9] sm:$0xff] %vm172, %v317
      %351 = vst.msk [vmem:[%s328 + $0x109] sm:$0xff] %vm172, %v318
      %352 = vst.msk [vmem:[%s328 + $0x111] sm:$0xff] %vm172, %v319
      %353 = vst.msk [vmem:[%s328 + $0x121] sm:$0xff] %vm172, %v320
      %354 = vst.msk [vmem:[%s328 + $0x129] sm:$0xff] %vm172, %v321
      %355 = vst.msk [vmem:[%s328 + $0x139] sm:$0xff] %vm172, %v322
      %356 = vst.msk [vmem:[%s328 + $0x141] sm:$0xff] %vm172, %v323
      %357 = vst.msk [vmem:[%s328 + $0x151] sm:$0xff] %vm172, %v324
      %358 = vst.msk [vmem:[%s328 + $0x159] sm:$0xff] %vm172, %v325
      %359 = vst.msk [vmem:[%s328 + $0x169] sm:$0xff] %vm172, %v326
      %360 = vst.msk [vmem:[%s328 + $0x171] sm:$0xff] %vm172, %v327
      %v361 = vld [vmem:[#allocation2] sm:$0xff]
      %v362 = vld [vmem:[#allocation2 + $0x8] sm:$0xff]
      %v363 = vld [vmem:[#allocation2 + $0x18] sm:$0xff]
      %v364 = vld [vmem:[#allocation2 + $0x20] sm:$0xff]
      %v365 = vld [vmem:[#allocation2 + $0x30] sm:$0xff]
      %v366 = vld [vmem:[#allocation2 + $0x38] sm:$0xff]
      %v367 = vld [vmem:[#allocation2 + $0x48] sm:$0xff]
      %v368 = vld [vmem:[#allocation2 + $0x50] sm:$0xff]
      %v369 = vld [vmem:[#allocation2 + $0x60] sm:$0xff]
      %v370 = vld [vmem:[#allocation2 + $0x68] sm:$0xff]
      %v371 = vld [vmem:[#allocation2 + $0x78] sm:$0xff]
      %v372 = vld [vmem:[#allocation2 + $0x80] sm:$0xff]
      %v373 = vld [vmem:[#allocation2 + $0x90] sm:$0xff]
      %v374 = vld [vmem:[#allocation2 + $0x98] sm:$0xff]
      %v375 = vld [vmem:[#allocation2 + $0xa8] sm:$0xff]
      %v376 = vld [vmem:[#allocation2 + $0xb0] sm:$0xff]
      %v377 = vld [vmem:[#allocation2 + $0xc0] sm:$0xff]
      %v378 = vld [vmem:[#allocation2 + $0xc8] sm:$0xff]
      %v379 = vld [vmem:[#allocation2 + $0xd8] sm:$0xff]
      %v380 = vld [vmem:[#allocation2 + $0xe0] sm:$0xff]
      %v381 = vld [vmem:[#allocation2 + $0xf0] sm:$0xff]
      %v382 = vld [vmem:[#allocation2 + $0xf8] sm:$0xff]
      %v383 = vld [vmem:[#allocation2 + $0x108] sm:$0xff]
      %v384 = vld [vmem:[#allocation2 + $0x110] sm:$0xff]
      %v385 = vld [vmem:[#allocation2 + $0x120] sm:$0xff]
      %v386 = vld [vmem:[#allocation2 + $0x128] sm:$0xff]
      %v387 = vld [vmem:[#allocation2 + $0x138] sm:$0xff]
      %v388 = vld [vmem:[#allocation2 + $0x140] sm:$0xff]
      %v389 = vld [vmem:[#allocation2 + $0x150] sm:$0xff]
      %v390 = vld [vmem:[#allocation2 + $0x158] sm:$0xff]
      %v391 = vld [vmem:[#allocation2 + $0x168] sm:$0xff]
      %v392 = vld [vmem:[#allocation2 + $0x170] sm:$0xff]
      %393 = vst.msk [vmem:[#allocation4] sm:$0xff] %vm172, %v361
      %394 = vst.msk [vmem:[#allocation4 + $0x8] sm:$0xff] %vm172, %v362
      %395 = vst.msk [vmem:[#allocation4 + $0x10] sm:$0xff] %vm172, %v363
      %396 = vst.msk [vmem:[#allocation4 + $0x18] sm:$0xff] %vm172, %v364
      %397 = vst.msk [vmem:[#allocation4 + $0x20] sm:$0xff] %vm172, %v365
      %398 = vst.msk [vmem:[#allocation4 + $0x28] sm:$0xff] %vm172, %v366
      %399 = vst.msk [vmem:[#allocation4 + $0x30] sm:$0xff] %vm172, %v367
      %400 = vst.msk [vmem:[#allocation4 + $0x38] sm:$0xff] %vm172, %v368
      %401 = vst.msk [vmem:[#allocation4 + $0x40] sm:$0xff] %vm172, %v369
      %402 = vst.msk [vmem:[#allocation4 + $0x48] sm:$0xff] %vm172, %v370
      %403 = vst.msk [vmem:[#allocation4 + $0x50] sm:$0xff] %vm172, %v371
      %404 = vst.msk [vmem:[#allocation4 + $0x58] sm:$0xff] %vm172, %v372
      %405 = vst.msk [vmem:[#allocation4 + $0x60] sm:$0xff] %vm172, %v373
      %406 = vst.msk [vmem:[#allocation4 + $0x68] sm:$0xff] %vm172, %v374
      %407 = vst.msk [vmem:[#allocation4 + $0x70] sm:$0xff] %vm172, %v375
      %408 = vst.msk [vmem:[#allocation4 + $0x78] sm:$0xff] %vm172, %v376
      %409 = vst.msk [vmem:[#allocation4 + $0x80] sm:$0xff] %vm172, %v377
      %410 = vst.msk [vmem:[#allocation4 + $0x88] sm:$0xff] %vm172, %v378
      %411 = vst.msk [vmem:[#allocation4 + $0x90] sm:$0xff] %vm172, %v379
      %412 = vst.msk [vmem:[#allocation4 + $0x98] sm:$0xff] %vm172, %v380
      %413 = vst.msk [vmem:[#allocation4 + $0xa0] sm:$0xff] %vm172, %v381
      %414 = vst.msk [vmem:[#allocation4 + $0xa8] sm:$0xff] %vm172, %v382
      %415 = vst.msk [vmem:[#allocation4 + $0xb0] sm:$0xff] %vm172, %v383
      %416 = vst.msk [vmem:[#allocation4 + $0xb8] sm:$0xff] %vm172, %v384
      %417 = vst.msk [vmem:[#allocation4 + $0xc0] sm:$0xff] %vm172, %v385
      %418 = vst.msk [vmem:[#allocation4 + $0xc8] sm:$0xff] %vm172, %v386
      %419 = vst.msk [vmem:[#allocation4 + $0xd0] sm:$0xff] %vm172, %v387
      %420 = vst.msk [vmem:[#allocation4 + $0xd8] sm:$0xff] %vm172, %v388
      %421 = vst.msk [vmem:[#allocation4 + $0xe0] sm:$0xff] %vm172, %v389
      %422 = vst.msk [vmem:[#allocation4 + $0xe8] sm:$0xff] %vm172, %v390
      %423 = vst.msk [vmem:[#allocation4 + $0xf0] sm:$0xff] %vm172, %v391
      %424 = vst.msk [vmem:[#allocation4 + $0xf8] sm:$0xff] %vm172, %v392
      %v425 = vld [vmem:[#allocation2 + $0x1] sm:$0xff]
      %v426 = vld [vmem:[#allocation2 + $0x9] sm:$0xff]
      %v427 = vld [vmem:[#allocation2 + $0x19] sm:$0xff]
      %v428 = vld [vmem:[#allocation2 + $0x21] sm:$0xff]
      %v429 = vld [vmem:[#allocation2 + $0x31] sm:$0xff]
      %v430 = vld [vmem:[#allocation2 + $0x39] sm:$0xff]
      %v431 = vld [vmem:[#allocation2 + $0x49] sm:$0xff]
      %v432 = vld [vmem:[#allocation2 + $0x51] sm:$0xff]
      %v433 = vld [vmem:[#allocation2 + $0x61] sm:$0xff]
      %v434 = vld [vmem:[#allocation2 + $0x69] sm:$0xff]
      %v435 = vld [vmem:[#allocation2 + $0x79] sm:$0xff]
      %v436 = vld [vmem:[#allocation2 + $0x81] sm:$0xff]
      %v437 = vld [vmem:[#allocation2 + $0x91] sm:$0xff]
      %v438 = vld [vmem:[#allocation2 + $0x99] sm:$0xff]
      %v439 = vld [vmem:[#allocation2 + $0xa9] sm:$0xff]
      %v440 = vld [vmem:[#allocation2 + $0xb1] sm:$0xff]
      %v441 = vld [vmem:[#allocation2 + $0xc1] sm:$0xff]
      %v442 = vld [vmem:[#allocation2 + $0xc9] sm:$0xff]
      %v443 = vld [vmem:[#allocation2 + $0xd9] sm:$0xff]
      %v444 = vld [vmem:[#allocation2 + $0xe1] sm:$0xff]
      %v445 = vld [vmem:[#allocation2 + $0xf1] sm:$0xff]
      %v446 = vld [vmem:[#allocation2 + $0xf9] sm:$0xff]
      %v447 = vld [vmem:[#allocation2 + $0x109] sm:$0xff]
      %v448 = vld [vmem:[#allocation2 + $0x111] sm:$0xff]
      %v449 = vld [vmem:[#allocation2 + $0x121] sm:$0xff]
      %v450 = vld [vmem:[#allocation2 + $0x129] sm:$0xff]
      %v451 = vld [vmem:[#allocation2 + $0x139] sm:$0xff]
      %v452 = vld [vmem:[#allocation2 + $0x141] sm:$0xff]
      %v453 = vld [vmem:[#allocation2 + $0x151] sm:$0xff]
      %v454 = vld [vmem:[#allocation2 + $0x159] sm:$0xff]
      %v455 = vld [vmem:[#allocation2 + $0x169] sm:$0xff]
      %v456 = vld [vmem:[#allocation2 + $0x171] sm:$0xff]
      %489 = vrot.lane.b32.xlu0 %v425, 4
      %v490 = vpop.permute.xlu0 %489
      %491 = vrot.lane.b32.xlu0 %v426, 4
      %v492 = vpop.permute.xlu0 %491
      %493 = vrot.lane.b32.xlu0 %v427, 4
      %v494 = vpop.permute.xlu0 %493
      %495 = vrot.lane.b32.xlu0 %v428, 4
      %v496 = vpop.permute.xlu0 %495
      %497 = vrot.lane.b32.xlu0 %v429, 4
      %v498 = vpop.permute.xlu0 %497
      %499 = vrot.lane.b32.xlu0 %v430, 4
      %v500 = vpop.permute.xlu0 %499
      %501 = vrot.lane.b32.xlu0 %v431, 4
      %v502 = vpop.permute.xlu0 %501
      %503 = vrot.lane.b32.xlu0 %v432, 4
      %v504 = vpop.permute.xlu0 %503
      %505 = vrot.lane.b32.xlu0 %v433, 4
      %v506 = vpop.permute.xlu0 %505
      %507 = vrot.lane.b32.xlu0 %v434, 4
      %v508 = vpop.permute.xlu0 %507
      %509 = vrot.lane.b32.xlu0 %v435, 4
      %v510 = vpop.permute.xlu0 %509
      %511 = vrot.lane.b32.xlu0 %v436, 4
      %v512 = vpop.permute.xlu0 %511
      %513 = vrot.lane.b32.xlu0 %v437, 4
      %v514 = vpop.permute.xlu0 %513
      %515 = vrot.lane.b32.xlu0 %v438, 4
      %v516 = vpop.permute.xlu0 %515
      %517 = vrot.lane.b32.xlu0 %v439, 4
      %v518 = vpop.permute.xlu0 %517
      %519 = vrot.lane.b32.xlu0 %v440, 4
      %v520 = vpop.permute.xlu0 %519
      %521 = vrot.lane.b32.xlu0 %v441, 4
      %v522 = vpop.permute.xlu0 %521
      %523 = vrot.lane.b32.xlu0 %v442, 4
      %v524 = vpop.permute.xlu0 %523
      %525 = vrot.lane.b32.xlu0 %v443, 4
      %v526 = vpop.permute.xlu0 %525
      %527 = vrot.lane.b32.xlu0 %v444, 4
      %v528 = vpop.permute.xlu0 %527
      %529 = vrot.lane.b32.xlu0 %v445, 4
      %v530 = vpop.permute.xlu0 %529
      %531 = vrot.lane.b32.xlu0 %v446, 4
      %v532 = vpop.permute.xlu0 %531
      %533 = vrot.lane.b32.xlu0 %v447, 4
      %v534 = vpop.permute.xlu0 %533
      %535 = vrot.lane.b32.xlu0 %v448, 4
      %v536 = vpop.permute.xlu0 %535
      %537 = vrot.lane.b32.xlu0 %v449, 4
      %v538 = vpop.permute.xlu0 %537
      %539 = vrot.lane.b32.xlu0 %v450, 4
      %v540 = vpop.permute.xlu0 %539
      %541 = vrot.lane.b32.xlu0 %v451, 4
      %v542 = vpop.permute.xlu0 %541
      %543 = vrot.lane.b32.xlu0 %v452, 4
      %v544 = vpop.permute.xlu0 %543
      %545 = vrot.lane.b32.xlu0 %v453, 4
      %v546 = vpop.permute.xlu0 %545
      %547 = vrot.lane.b32.xlu0 %v454, 4
      %v548 = vpop.permute.xlu0 %547
      %549 = vrot.lane.b32.xlu0 %v455, 4
      %v550 = vpop.permute.xlu0 %549
      %551 = vrot.lane.b32.xlu0 %v456, 4
      %v552 = vpop.permute.xlu0 %551
      %vm585 = vcmask 64544
      %586 = vst.msk [vmem:[#allocation4] sm:$0xff] %vm585, %v490
      %587 = vst.msk [vmem:[#allocation4 + $0x8] sm:$0xff] %vm585, %v492
      %588 = vst.msk [vmem:[#allocation4 + $0x10] sm:$0xff] %vm585, %v494
      %589 = vst.msk [vmem:[#allocation4 + $0x18] sm:$0xff] %vm585, %v496
      %590 = vst.msk [vmem:[#allocation4 + $0x20] sm:$0xff] %vm585, %v498
      %591 = vst.msk [vmem:[#allocation4 + $0x28] sm:$0xff] %vm585, %v500
      %592 = vst.msk [vmem:[#allocation4 + $0x30] sm:$0xff] %vm585, %v502
      %593 = vst.msk [vmem:[#allocation4 + $0x38] sm:$0xff] %vm585, %v504
      %594 = vst.msk [vmem:[#allocation4 + $0x40] sm:$0xff] %vm585, %v506
      %595 = vst.msk [vmem:[#allocation4 + $0x48] sm:$0xff] %vm585, %v508
      %596 = vst.msk [vmem:[#allocation4 + $0x50] sm:$0xff] %vm585, %v510
      %597 = vst.msk [vmem:[#allocation4 + $0x58] sm:$0xff] %vm585, %v512
      %598 = vst.msk [vmem:[#allocation4 + $0x60] sm:$0xff] %vm585, %v514
      %599 = vst.msk [vmem:[#allocation4 + $0x68] sm:$0xff] %vm585, %v516
      %600 = vst.msk [vmem:[#allocation4 + $0x70] sm:$0xff] %vm585, %v518
      %601 = vst.msk [vmem:[#allocation4 + $0x78] sm:$0xff] %vm585, %v520
      %602 = vst.msk [vmem:[#allocation4 + $0x80] sm:$0xff] %vm585, %v522
      %603 = vst.msk [vmem:[#allocation4 + $0x88] sm:$0xff] %vm585, %v524
      %604 = vst.msk [vmem:[#allocation4 + $0x90] sm:$0xff] %vm585, %v526
      %605 = vst.msk [vmem:[#allocation4 + $0x98] sm:$0xff] %vm585, %v528
      %606 = vst.msk [vmem:[#allocation4 + $0xa0] sm:$0xff] %vm585, %v530
      %607 = vst.msk [vmem:[#allocation4 + $0xa8] sm:$0xff] %vm585, %v532
      %608 = vst.msk [vmem:[#allocation4 + $0xb0] sm:$0xff] %vm585, %v534
      %609 = vst.msk [vmem:[#allocation4 + $0xb8] sm:$0xff] %vm585, %v536
      %610 = vst.msk [vmem:[#allocation4 + $0xc0] sm:$0xff] %vm585, %v538
      %611 = vst.msk [vmem:[#allocation4 + $0xc8] sm:$0xff] %vm585, %v540
      %612 = vst.msk [vmem:[#allocation4 + $0xd0] sm:$0xff] %vm585, %v542
      %613 = vst.msk [vmem:[#allocation4 + $0xd8] sm:$0xff] %vm585, %v544
      %614 = vst.msk [vmem:[#allocation4 + $0xe0] sm:$0xff] %vm585, %v546
      %615 = vst.msk [vmem:[#allocation4 + $0xe8] sm:$0xff] %vm585, %v548
      %616 = vst.msk [vmem:[#allocation4 + $0xf0] sm:$0xff] %vm585, %v550
      %617 = vst.msk [vmem:[#allocation4 + $0xf8] sm:$0xff] %vm585, %v552
      %v618 = vld [vmem:[#allocation2 + $0x2] sm:$0xff]
      %v619 = vld [vmem:[#allocation2 + $0xa] sm:$0xff]
      %v620 = vld [vmem:[#allocation2 + $0x1a] sm:$0xff]
      %v621 = vld [vmem:[#allocation2 + $0x22] sm:$0xff]
      %v622 = vld [vmem:[#allocation2 + $0x32] sm:$0xff]
      %v623 = vld [vmem:[#allocation2 + $0x3a] sm:$0xff]
      %v624 = vld [vmem:[#allocation2 + $0x4a] sm:$0xff]
      %v625 = vld [vmem:[#allocation2 + $0x52] sm:$0xff]
      %v626 = vld [vmem:[#allocation2 + $0x62] sm:$0xff]
      %v627 = vld [vmem:[#allocation2 + $0x6a] sm:$0xff]
      %v628 = vld [vmem:[#allocation2 + $0x7a] sm:$0xff]
      %v629 = vld [vmem:[#allocation2 + $0x82] sm:$0xff]
      %v630 = vld [vmem:[#allocation2 + $0x92] sm:$0xff]
      %v631 = vld [vmem:[#allocation2 + $0x9a] sm:$0xff]
      %v632 = vld [vmem:[#allocation2 + $0xaa] sm:$0xff]
      %v633 = vld [vmem:[#allocation2 + $0xb2] sm:$0xff]
      %v634 = vld [vmem:[#allocation2 + $0xc2] sm:$0xff]
      %v635 = vld [vmem:[#allocation2 + $0xca] sm:$0xff]
      %v636 = vld [vmem:[#allocation2 + $0xda] sm:$0xff]
      %v637 = vld [vmem:[#allocation2 + $0xe2] sm:$0xff]
      %v638 = vld [vmem:[#allocation2 + $0xf2] sm:$0xff]
      %v639 = vld [vmem:[#allocation2 + $0xfa] sm:$0xff]
      %v640 = vld [vmem:[#allocation2 + $0x10a] sm:$0xff]
      %v641 = vld [vmem:[#allocation2 + $0x112] sm:$0xff]
      %v642 = vld [vmem:[#allocation2 + $0x122] sm:$0xff]
      %v643 = vld [vmem:[#allocation2 + $0x12a] sm:$0xff]
      %v644 = vld [vmem:[#allocation2 + $0x13a] sm:$0xff]
      %v645 = vld [vmem:[#allocation2 + $0x142] sm:$0xff]
      %v646 = vld [vmem:[#allocation2 + $0x152] sm:$0xff]
      %v647 = vld [vmem:[#allocation2 + $0x15a] sm:$0xff]
      %v648 = vld [vmem:[#allocation2 + $0x16a] sm:$0xff]
      %v649 = vld [vmem:[#allocation2 + $0x172] sm:$0xff]
      %682 = vrot.lane.b32.xlu0 %v618, 8
      %v683 = vpop.permute.xlu0 %682
      %684 = vrot.lane.b32.xlu0 %v619, 8
      %v685 = vpop.permute.xlu0 %684
      %686 = vrot.lane.b32.xlu0 %v620, 8
      %v687 = vpop.permute.xlu0 %686
      %688 = vrot.lane.b32.xlu0 %v621, 8
      %v689 = vpop.permute.xlu0 %688
      %690 = vrot.lane.b32.xlu0 %v622, 8
      %v691 = vpop.permute.xlu0 %690
      %692 = vrot.lane.b32.xlu0 %v623, 8
      %v693 = vpop.permute.xlu0 %692
      %694 = vrot.lane.b32.xlu0 %v624, 8
      %v695 = vpop.permute.xlu0 %694
      %696 = vrot.lane.b32.xlu0 %v625, 8
      %v697 = vpop.permute.xlu0 %696
      %698 = vrot.lane.b32.xlu0 %v626, 8
      %v699 = vpop.permute.xlu0 %698
      %700 = vrot.lane.b32.xlu0 %v627, 8
      %v701 = vpop.permute.xlu0 %700
      %702 = vrot.lane.b32.xlu0 %v628, 8
      %v703 = vpop.permute.xlu0 %702
      %704 = vrot.lane.b32.xlu0 %v629, 8
      %v705 = vpop.permute.xlu0 %704
      %706 = vrot.lane.b32.xlu0 %v630, 8
      %v707 = vpop.permute.xlu0 %706
      %708 = vrot.lane.b32.xlu0 %v631, 8
      %v709 = vpop.permute.xlu0 %708
      %710 = vrot.lane.b32.xlu0 %v632, 8
      %v711 = vpop.permute.xlu0 %710
      %712 = vrot.lane.b32.xlu0 %v633, 8
      %v713 = vpop.permute.xlu0 %712
      %714 = vrot.lane.b32.xlu0 %v634, 8
      %v715 = vpop.permute.xlu0 %714
      %716 = vrot.lane.b32.xlu0 %v635, 8
      %v717 = vpop.permute.xlu0 %716
      %718 = vrot.lane.b32.xlu0 %v636, 8
      %v719 = vpop.permute.xlu0 %718
      %720 = vrot.lane.b32.xlu0 %v637, 8
      %v721 = vpop.permute.xlu0 %720
      %722 = vrot.lane.b32.xlu0 %v638, 8
      %v723 = vpop.permute.xlu0 %722
      %724 = vrot.lane.b32.xlu0 %v639, 8
      %v725 = vpop.permute.xlu0 %724
      %726 = vrot.lane.b32.xlu0 %v640, 8
      %v727 = vpop.permute.xlu0 %726
      %728 = vrot.lane.b32.xlu0 %v641, 8
      %v729 = vpop.permute.xlu0 %728
      %730 = vrot.lane.b32.xlu0 %v642, 8
      %v731 = vpop.permute.xlu0 %730
      %732 = vrot.lane.b32.xlu0 %v643, 8
      %v733 = vpop.permute.xlu0 %732
      %734 = vrot.lane.b32.xlu0 %v644, 8
      %v735 = vpop.permute.xlu0 %734
      %736 = vrot.lane.b32.xlu0 %v645, 8
      %v737 = vpop.permute.xlu0 %736
      %738 = vrot.lane.b32.xlu0 %v646, 8
      %v739 = vpop.permute.xlu0 %738
      %740 = vrot.lane.b32.xlu0 %v647, 8
      %v741 = vpop.permute.xlu0 %740
      %742 = vrot.lane.b32.xlu0 %v648, 8
      %v743 = vpop.permute.xlu0 %742
      %744 = vrot.lane.b32.xlu0 %v649, 8
      %v745 = vpop.permute.xlu0 %744
      %vm778 = vcmask 97344
      %779 = vst.msk [vmem:[#allocation4] sm:$0xff] %vm778, %v683
      %780 = vst.msk [vmem:[#allocation4 + $0x8] sm:$0xff] %vm778, %v685
      %781 = vst.msk [vmem:[#allocation4 + $0x10] sm:$0xff] %vm778, %v687
      %782 = vst.msk [vmem:[#allocation4 + $0x18] sm:$0xff] %vm778, %v689
      %783 = vst.msk [vmem:[#allocation4 + $0x20] sm:$0xff] %vm778, %v691
      %784 = vst.msk [vmem:[#allocation4 + $0x28] sm:$0xff] %vm778, %v693
      %785 = vst.msk [vmem:[#allocation4 + $0x30] sm:$0xff] %vm778, %v695
      %786 = vst.msk [vmem:[#allocation4 + $0x38] sm:$0xff] %vm778, %v697
      %787 = vst.msk [vmem:[#allocation4 + $0x40] sm:$0xff] %vm778, %v699
      %788 = vst.msk [vmem:[#allocation4 + $0x48] sm:$0xff] %vm778, %v701
      %789 = vst.msk [vmem:[#allocation4 + $0x50] sm:$0xff] %vm778, %v703
      %790 = vst.msk [vmem:[#allocation4 + $0x58] sm:$0xff] %vm778, %v705
      %791 = vst.msk [vmem:[#allocation4 + $0x60] sm:$0xff] %vm778, %v707
      %792 = vst.msk [vmem:[#allocation4 + $0x68] sm:$0xff] %vm778, %v709
      %793 = vst.msk [vmem:[#allocation4 + $0x70] sm:$0xff] %vm778, %v711
      %794 = vst.msk [vmem:[#allocation4 + $0x78] sm:$0xff] %vm778, %v713
      %795 = vst.msk [vmem:[#allocation4 + $0x80] sm:$0xff] %vm778, %v715
      %796 = vst.msk [vmem:[#allocation4 + $0x88] sm:$0xff] %vm778, %v717
      %797 = vst.msk [vmem:[#allocation4 + $0x90] sm:$0xff] %vm778, %v719
      %798 = vst.msk [vmem:[#allocation4 + $0x98] sm:$0xff] %vm778, %v721
      %799 = vst.msk [vmem:[#allocation4 + $0xa0] sm:$0xff] %vm778, %v723
      %800 = vst.msk [vmem:[#allocation4 + $0xa8] sm:$0xff] %vm778, %v725
      %801 = vst.msk [vmem:[#allocation4 + $0xb0] sm:$0xff] %vm778, %v727
      %802 = vst.msk [vmem:[#allocation4 + $0xb8] sm:$0xff] %vm778, %v729
      %803 = vst.msk [vmem:[#allocation4 + $0xc0] sm:$0xff] %vm778, %v731
      %804 = vst.msk [vmem:[#allocation4 + $0xc8] sm:$0xff] %vm778, %v733
      %805 = vst.msk [vmem:[#allocation4 + $0xd0] sm:$0xff] %vm778, %v735
      %806 = vst.msk [vmem:[#allocation4 + $0xd8] sm:$0xff] %vm778, %v737
      %807 = vst.msk [vmem:[#allocation4 + $0xe0] sm:$0xff] %vm778, %v739
      %808 = vst.msk [vmem:[#allocation4 + $0xe8] sm:$0xff] %vm778, %v741
      %809 = vst.msk [vmem:[#allocation4 + $0xf0] sm:$0xff] %vm778, %v743
      %810 = vst.msk [vmem:[#allocation4 + $0xf8] sm:$0xff] %vm778, %v745
      %v811 = vld [vmem:[%s328] sm:$0xff]
      %v812 = vld [vmem:[%s328 + $0x8] sm:$0xff]
      %v813 = vld [vmem:[%s328 + $0x18] sm:$0xff]
      %v814 = vld [vmem:[%s328 + $0x20] sm:$0xff]
      %v815 = vld [vmem:[%s328 + $0x30] sm:$0xff]
      %v816 = vld [vmem:[%s328 + $0x38] sm:$0xff]
      %v817 = vld [vmem:[%s328 + $0x48] sm:$0xff]
      %v818 = vld [vmem:[%s328 + $0x50] sm:$0xff]
      %v819 = vld [vmem:[%s328 + $0x60] sm:$0xff]
      %v820 = vld [vmem:[%s328 + $0x68] sm:$0xff]
      %v821 = vld [vmem:[%s328 + $0x78] sm:$0xff]
      %v822 = vld [vmem:[%s328 + $0x80] sm:$0xff]
      %v823 = vld [vmem:[%s328 + $0x90] sm:$0xff]
      %v824 = vld [vmem:[%s328 + $0x98] sm:$0xff]
      %v825 = vld [vmem:[%s328 + $0xa8] sm:$0xff]
      %v826 = vld [vmem:[%s328 + $0xb0] sm:$0xff]
      %v827 = vld [vmem:[%s328 + $0xc0] sm:$0xff]
      %v828 = vld [vmem:[%s328 + $0xc8] sm:$0xff]
      %v829 = vld [vmem:[%s328 + $0xd8] sm:$0xff]
      %v830 = vld [vmem:[%s328 + $0xe0] sm:$0xff]
      %v831 = vld [vmem:[%s328 + $0xf0] sm:$0xff]
      %v832 = vld [vmem:[%s328 + $0xf8] sm:$0xff]
      %v833 = vld [vmem:[%s328 + $0x108] sm:$0xff]
      %v834 = vld [vmem:[%s328 + $0x110] sm:$0xff]
      %v835 = vld [vmem:[%s328 + $0x120] sm:$0xff]
      %v836 = vld [vmem:[%s328 + $0x128] sm:$0xff]
      %v837 = vld [vmem:[%s328 + $0x138] sm:$0xff]
      %v838 = vld [vmem:[%s328 + $0x140] sm:$0xff]
      %v839 = vld [vmem:[%s328 + $0x150] sm:$0xff]
      %v840 = vld [vmem:[%s328 + $0x158] sm:$0xff]
      %v841 = vld [vmem:[%s328 + $0x168] sm:$0xff]
      %v842 = vld [vmem:[%s328 + $0x170] sm:$0xff]
      %875 = vrot.lane.b32.xlu0 %v811, 12
      %v876 = vpop.permute.xlu0 %875
      %877 = vrot.lane.b32.xlu0 %v812, 12
      %v878 = vpop.permute.xlu0 %877
      %879 = vrot.lane.b32.xlu0 %v813, 12
      %v880 = vpop.permute.xlu0 %879
      %881 = vrot.lane.b32.xlu0 %v814, 12
      %v882 = vpop.permute.xlu0 %881
      %883 = vrot.lane.b32.xlu0 %v815, 12
      %v884 = vpop.permute.xlu0 %883
      %885 = vrot.lane.b32.xlu0 %v816, 12
      %v886 = vpop.permute.xlu0 %885
      %887 = vrot.lane.b32.xlu0 %v817, 12
      %v888 = vpop.permute.xlu0 %887
      %889 = vrot.lane.b32.xlu0 %v818, 12
      %v890 = vpop.permute.xlu0 %889
      %891 = vrot.lane.b32.xlu0 %v819, 12
      %v892 = vpop.permute.xlu0 %891
      %893 = vrot.lane.b32.xlu0 %v820, 12
      %v894 = vpop.permute.xlu0 %893
      %895 = vrot.lane.b32.xlu0 %v821, 12
      %v896 = vpop.permute.xlu0 %895
      %897 = vrot.lane.b32.xlu0 %v822, 12
      %v898 = vpop.permute.xlu0 %897
      %899 = vrot.lane.b32.xlu0 %v823, 12
      %v900 = vpop.permute.xlu0 %899
      %901 = vrot.lane.b32.xlu0 %v824, 12
      %v902 = vpop.permute.xlu0 %901
      %903 = vrot.lane.b32.xlu0 %v825, 12
      %v904 = vpop.permute.xlu0 %903
      %905 = vrot.lane.b32.xlu0 %v826, 12
      %v906 = vpop.permute.xlu0 %905
      %907 = vrot.lane.b32.xlu0 %v827, 12
      %v908 = vpop.permute.xlu0 %907
      %909 = vrot.lane.b32.xlu0 %v828, 12
      %v910 = vpop.permute.xlu0 %909
      %911 = vrot.lane.b32.xlu0 %v829, 12
      %v912 = vpop.permute.xlu0 %911
      %913 = vrot.lane.b32.xlu0 %v830, 12
      %v914 = vpop.permute.xlu0 %913
      %915 = vrot.lane.b32.xlu0 %v831, 12
      %v916 = vpop.permute.xlu0 %915
      %917 = vrot.lane.b32.xlu0 %v832, 12
      %v918 = vpop.permute.xlu0 %917
      %919 = vrot.lane.b32.xlu0 %v833, 12
      %v920 = vpop.permute.xlu0 %919
      %921 = vrot.lane.b32.xlu0 %v834, 12
      %v922 = vpop.permute.xlu0 %921
      %923 = vrot.lane.b32.xlu0 %v835, 12
      %v924 = vpop.permute.xlu0 %923
      %925 = vrot.lane.b32.xlu0 %v836, 12
      %v926 = vpop.permute.xlu0 %925
      %927 = vrot.lane.b32.xlu0 %v837, 12
      %v928 = vpop.permute.xlu0 %927
      %929 = vrot.lane.b32.xlu0 %v838, 12
      %v930 = vpop.permute.xlu0 %929
      %931 = vrot.lane.b32.xlu0 %v839, 12
      %v932 = vpop.permute.xlu0 %931
      %933 = vrot.lane.b32.xlu0 %v840, 12
      %v934 = vpop.permute.xlu0 %933
      %935 = vrot.lane.b32.xlu0 %v841, 12
      %v936 = vpop.permute.xlu0 %935
      %937 = vrot.lane.b32.xlu0 %v842, 12
      %v938 = vpop.permute.xlu0 %937
      %vm971 = vcmask 130144
      %972 = vst.msk [vmem:[#allocation4] sm:$0xff] %vm971, %v876
      %973 = vst.msk [vmem:[#allocation4 + $0x8] sm:$0xff] %vm971, %v878
      %974 = vst.msk [vmem:[#allocation4 + $0x10] sm:$0xff] %vm971, %v880
      %975 = vst.msk [vmem:[#allocation4 + $0x18] sm:$0xff] %vm971, %v882
      %976 = vst.msk [vmem:[#allocation4 + $0x20] sm:$0xff] %vm971, %v884
      %977 = vst.msk [vmem:[#allocation4 + $0x28] sm:$0xff] %vm971, %v886
      %978 = vst.msk [vmem:[#allocation4 + $0x30] sm:$0xff] %vm971, %v888
      %979 = vst.msk [vmem:[#allocation4 + $0x38] sm:$0xff] %vm971, %v890
      %980 = vst.msk [vmem:[#allocation4 + $0x40] sm:$0xff] %vm971, %v892
      %981 = vst.msk [vmem:[#allocation4 + $0x48] sm:$0xff] %vm971, %v894
      %982 = vst.msk [vmem:[#allocation4 + $0x50] sm:$0xff] %vm971, %v896
      %983 = vst.msk [vmem:[#allocation4 + $0x58] sm:$0xff] %vm971, %v898
      %984 = vst.msk [vmem:[#allocation4 + $0x60] sm:$0xff] %vm971, %v900
      %985 = vst.msk [vmem:[#allocation4 + $0x68] sm:$0xff] %vm971, %v902
      %986 = vst.msk [vmem:[#allocation4 + $0x70] sm:$0xff] %vm971, %v904
      %987 = vst.msk [vmem:[#allocation4 + $0x78] sm:$0xff] %vm971, %v906
      %988 = vst.msk [vmem:[#allocation4 + $0x80] sm:$0xff] %vm971, %v908
      %989 = vst.msk [vmem:[#allocation4 + $0x88] sm:$0xff] %vm971, %v910
      %990 = vst.msk [vmem:[#allocation4 + $0x90] sm:$0xff] %vm971, %v912
      %991 = vst.msk [vmem:[#allocation4 + $0x98] sm:$0xff] %vm971, %v914
      %992 = vst.msk [vmem:[#allocation4 + $0xa0] sm:$0xff] %vm971, %v916
      %993 = vst.msk [vmem:[#allocation4 + $0xa8] sm:$0xff] %vm971, %v918
      %994 = vst.msk [vmem:[#allocation4 + $0xb0] sm:$0xff] %vm971, %v920
      %995 = vst.msk [vmem:[#allocation4 + $0xb8] sm:$0xff] %vm971, %v922
      %996 = vst.msk [vmem:[#allocation4 + $0xc0] sm:$0xff] %vm971, %v924
      %997 = vst.msk [vmem:[#allocation4 + $0xc8] sm:$0xff] %vm971, %v926
      %998 = vst.msk [vmem:[#allocation4 + $0xd0] sm:$0xff] %vm971, %v928
      %999 = vst.msk [vmem:[#allocation4 + $0xd8] sm:$0xff] %vm971, %v930
      %1000 = vst.msk [vmem:[#allocation4 + $0xe0] sm:$0xff] %vm971, %v932
      %1001 = vst.msk [vmem:[#allocation4 + $0xe8] sm:$0xff] %vm971, %v934
      %1002 = vst.msk [vmem:[#allocation4 + $0xf0] sm:$0xff] %vm971, %v936
      %1003 = vst.msk [vmem:[#allocation4 + $0xf8] sm:$0xff] %vm971, %v938
      %v1004 = vld [vmem:[%s328 + $0x1] sm:$0xff]
      %v1005 = vld [vmem:[%s328 + $0x9] sm:$0xff]
      %v1006 = vld [vmem:[%s328 + $0x19] sm:$0xff]
      %v1007 = vld [vmem:[%s328 + $0x21] sm:$0xff]
      %v1008 = vld [vmem:[%s328 + $0x31] sm:$0xff]
      %v1009 = vld [vmem:[%s328 + $0x39] sm:$0xff]
      %v1010 = vld [vmem:[%s328 + $0x49] sm:$0xff]
      %v1011 = vld [vmem:[%s328 + $0x51] sm:$0xff]
      %v1012 = vld [vmem:[%s328 + $0x61] sm:$0xff]
      %v1013 = vld [vmem:[%s328 + $0x69] sm:$0xff]
      %v1014 = vld [vmem:[%s328 + $0x79] sm:$0xff]
      %v1015 = vld [vmem:[%s328 + $0x81] sm:$0xff]
      %v1016 = vld [vmem:[%s328 + $0x91] sm:$0xff]
      %v1017 = vld [vmem:[%s328 + $0x99] sm:$0xff]
      %v1018 = vld [vmem:[%s328 + $0xa9] sm:$0xff]
      %v1019 = vld [vmem:[%s328 + $0xb1] sm:$0xff]
      %v1020 = vld [vmem:[%s328 + $0xc1] sm:$0xff]
      %v1021 = vld [vmem:[%s328 + $0xc9] sm:$0xff]
      %v1022 = vld [vmem:[%s328 + $0xd9] sm:$0xff]
      %v1023 = vld [vmem:[%s328 + $0xe1] sm:$0xff]
      %v1024 = vld [vmem:[%s328 + $0xf1] sm:$0xff]
      %v1025 = vld [vmem:[%s328 + $0xf9] sm:$0xff]
      %v1026 = vld [vmem:[%s328 + $0x109] sm:$0xff]
      %v1027 = vld [vmem:[%s328 + $0x111] sm:$0xff]
      %v1028 = vld [vmem:[%s328 + $0x121] sm:$0xff]
      %v1029 = vld [vmem:[%s328 + $0x129] sm:$0xff]
      %v1030 = vld [vmem:[%s328 + $0x139] sm:$0xff]
      %v1031 = vld [vmem:[%s328 + $0x141] sm:$0xff]
      %v1032 = vld [vmem:[%s328 + $0x151] sm:$0xff]
      %v1033 = vld [vmem:[%s328 + $0x159] sm:$0xff]
      %v1034 = vld [vmem:[%s328 + $0x169] sm:$0xff]
      %v1035 = vld [vmem:[%s328 + $0x171] sm:$0xff]
      %1068 = vrot.lane.b32.xlu0 %v1004, 16
      %v1069 = vpop.permute.xlu0 %1068
      %1070 = vrot.lane.b32.xlu0 %v1005, 16
      %v1071 = vpop.permute.xlu0 %1070
      %1072 = vrot.lane.b32.xlu0 %v1006, 16
      %v1073 = vpop.permute.xlu0 %1072
      %1074 = vrot.lane.b32.xlu0 %v1007, 16
      %v1075 = vpop.permute.xlu0 %1074
      %1076 = vrot.lane.b32.xlu0 %v1008, 16
      %v1077 = vpop.permute.xlu0 %1076
      %1078 = vrot.lane.b32.xlu0 %v1009, 16
      %v1079 = vpop.permute.xlu0 %1078
      %1080 = vrot.lane.b32.xlu0 %v1010, 16
      %v1081 = vpop.permute.xlu0 %1080
      %1082 = vrot.lane.b32.xlu0 %v1011, 16
      %v1083 = vpop.permute.xlu0 %1082
      %1084 = vrot.lane.b32.xlu0 %v1012, 16
      %v1085 = vpop.permute.xlu0 %1084
      %1086 = vrot.lane.b32.xlu0 %v1013, 16
      %v1087 = vpop.permute.xlu0 %1086
      %1088 = vrot.lane.b32.xlu0 %v1014, 16
      %v1089 = vpop.permute.xlu0 %1088
      %1090 = vrot.lane.b32.xlu0 %v1015, 16
      %v1091 = vpop.permute.xlu0 %1090
      %1092 = vrot.lane.b32.xlu0 %v1016, 16
      %v1093 = vpop.permute.xlu0 %1092
      %1094 = vrot.lane.b32.xlu0 %v1017, 16
      %v1095 = vpop.permute.xlu0 %1094
      %1096 = vrot.lane.b32.xlu0 %v1018, 16
      %v1097 = vpop.permute.xlu0 %1096
      %1098 = vrot.lane.b32.xlu0 %v1019, 16
      %v1099 = vpop.permute.xlu0 %1098
      %1100 = vrot.lane.b32.xlu0 %v1020, 16
      %v1101 = vpop.permute.xlu0 %1100
      %1102 = vrot.lane.b32.xlu0 %v1021, 16
      %v1103 = vpop.permute.xlu0 %1102
      %1104 = vrot.lane.b32.xlu0 %v1022, 16
      %v1105 = vpop.permute.xlu0 %1104
      %1106 = vrot.lane.b32.xlu0 %v1023, 16
      %v1107 = vpop.permute.xlu0 %1106
      %1108 = vrot.lane.b32.xlu0 %v1024, 16
      %v1109 = vpop.permute.xlu0 %1108
      %1110 = vrot.lane.b32.xlu0 %v1025, 16
      %v1111 = vpop.permute.xlu0 %1110
      %1112 = vrot.lane.b32.xlu0 %v1026, 16
      %v1113 = vpop.permute.xlu0 %1112
      %1114 = vrot.lane.b32.xlu0 %v1027, 16
      %v1115 = vpop.permute.xlu0 %1114
      %1116 = vrot.lane.b32.xlu0 %v1028, 16
      %v1117 = vpop.permute.xlu0 %1116
      %1118 = vrot.lane.b32.xlu0 %v1029, 16
      %v1119 = vpop.permute.xlu0 %1118
      %1120 = vrot.lane.b32.xlu0 %v1030, 16
      %v1121 = vpop.permute.xlu0 %1120
      %1122 = vrot.lane.b32.xlu0 %v1031, 16
      %v1123 = vpop.permute.xlu0 %1122
      %1124 = vrot.lane.b32.xlu0 %v1032, 16
      %v1125 = vpop.permute.xlu0 %1124
      %1126 = vrot.lane.b32.xlu0 %v1033, 16
      %v1127 = vpop.permute.xlu0 %1126
      %1128 = vrot.lane.b32.xlu0 %v1034, 16
      %v1129 = vpop.permute.xlu0 %1128
      %1130 = vrot.lane.b32.xlu0 %v1035, 16
      %v1131 = vpop.permute.xlu0 %1130
      %vm1164 = vcmask 162944
      %1165 = vst.msk [vmem:[#allocation4] sm:$0xff] %vm1164, %v1069
      %1166 = vst.msk [vmem:[#allocation4 + $0x8] sm:$0xff] %vm1164, %v1071
      %1167 = vst.msk [vmem:[#allocation4 + $0x10] sm:$0xff] %vm1164, %v1073
      %1168 = vst.msk [vmem:[#allocation4 + $0x18] sm:$0xff] %vm1164, %v1075
      %1169 = vst.msk [vmem:[#allocation4 + $0x20] sm:$0xff] %vm1164, %v1077
      %1170 = vst.msk [vmem:[#allocation4 + $0x28] sm:$0xff] %vm1164, %v1079
      %1171 = vst.msk [vmem:[#allocation4 + $0x30] sm:$0xff] %vm1164, %v1081
      %1172 = vst.msk [vmem:[#allocation4 + $0x38] sm:$0xff] %vm1164, %v1083
      %1173 = vst.msk [vmem:[#allocation4 + $0x40] sm:$0xff] %vm1164, %v1085
      %1174 = vst.msk [vmem:[#allocation4 + $0x48] sm:$0xff] %vm1164, %v1087
      %1175 = vst.msk [vmem:[#allocation4 + $0x50] sm:$0xff] %vm1164, %v1089
      %1176 = vst.msk [vmem:[#allocation4 + $0x58] sm:$0xff] %vm1164, %v1091
      %1177 = vst.msk [vmem:[#allocation4 + $0x60] sm:$0xff] %vm1164, %v1093
      %1178 = vst.msk [vmem:[#allocation4 + $0x68] sm:$0xff] %vm1164, %v1095
      %1179 = vst.msk [vmem:[#allocation4 + $0x70] sm:$0xff] %vm1164, %v1097
      %1180 = vst.msk [vmem:[#allocation4 + $0x78] sm:$0xff] %vm1164, %v1099
      %1181 = vst.msk [vmem:[#allocation4 + $0x80] sm:$0xff] %vm1164, %v1101
      %1182 = vst.msk [vmem:[#allocation4 + $0x88] sm:$0xff] %vm1164, %v1103
      %1183 = vst.msk [vmem:[#allocation4 + $0x90] sm:$0xff] %vm1164, %v1105
      %1184 = vst.msk [vmem:[#allocation4 + $0x98] sm:$0xff] %vm1164, %v1107
      %1185 = vst.msk [vmem:[#allocation4 + $0xa0] sm:$0xff] %vm1164, %v1109
      %1186 = vst.msk [vmem:[#allocation4 + $0xa8] sm:$0xff] %vm1164, %v1111
      %1187 = vst.msk [vmem:[#allocation4 + $0xb0] sm:$0xff] %vm1164, %v1113
      %1188 = vst.msk [vmem:[#allocation4 + $0xb8] sm:$0xff] %vm1164, %v1115
      %1189 = vst.msk [vmem:[#allocation4 + $0xc0] sm:$0xff] %vm1164, %v1117
      %1190 = vst.msk [vmem:[#allocation4 + $0xc8] sm:$0xff] %vm1164, %v1119
      %1191 = vst.msk [vmem:[#allocation4 + $0xd0] sm:$0xff] %vm1164, %v1121
      %1192 = vst.msk [vmem:[#allocation4 + $0xd8] sm:$0xff] %vm1164, %v1123
      %1193 = vst.msk [vmem:[#allocation4 + $0xe0] sm:$0xff] %vm1164, %v1125
      %1194 = vst.msk [vmem:[#allocation4 + $0xe8] sm:$0xff] %vm1164, %v1127
      %1195 = vst.msk [vmem:[#allocation4 + $0xf0] sm:$0xff] %vm1164, %v1129
      %1196 = vst.msk [vmem:[#allocation4 + $0xf8] sm:$0xff] %vm1164, %v1131
      %v1197 = vld [vmem:[%s328 + $0x2] sm:$0xff]
      %v1198 = vld [vmem:[%s328 + $0xa] sm:$0xff]
      %v1199 = vld [vmem:[%s328 + $0x1a] sm:$0xff]
      %v1200 = vld [vmem:[%s328 + $0x22] sm:$0xff]
      %v1201 = vld [vmem:[%s328 + $0x32] sm:$0xff]
      %v1202 = vld [vmem:[%s328 + $0x3a] sm:$0xff]
      %v1203 = vld [vmem:[%s328 + $0x4a] sm:$0xff]
      %v1204 = vld [vmem:[%s328 + $0x52] sm:$0xff]
      %v1205 = vld [vmem:[%s328 + $0x62] sm:$0xff]
      %v1206 = vld [vmem:[%s328 + $0x6a] sm:$0xff]
      %v1207 = vld [vmem:[%s328 + $0x7a] sm:$0xff]
      %v1208 = vld [vmem:[%s328 + $0x82] sm:$0xff]
      %v1209 = vld [vmem:[%s328 + $0x92] sm:$0xff]
      %v1210 = vld [vmem:[%s328 + $0x9a] sm:$0xff]
      %v1211 = vld [vmem:[%s328 + $0xaa] sm:$0xff]
      %v1212 = vld [vmem:[%s328 + $0xb2] sm:$0xff]
      %v1213 = vld [vmem:[%s328 + $0xc2] sm:$0xff]
      %v1214 = vld [vmem:[%s328 + $0xca] sm:$0xff]
      %v1215 = vld [vmem:[%s328 + $0xda] sm:$0xff]
      %v1216 = vld [vmem:[%s328 + $0xe2] sm:$0xff]
      %v1217 = vld [vmem:[%s328 + $0xf2] sm:$0xff]
      %v1218 = vld [vmem:[%s328 + $0xfa] sm:$0xff]
      %v1219 = vld [vmem:[%s328 + $0x10a] sm:$0xff]
      %v1220 = vld [vmem:[%s328 + $0x112] sm:$0xff]
      %v1221 = vld [vmem:[%s328 + $0x122] sm:$0xff]
      %v1222 = vld [vmem:[%s328 + $0x12a] sm:$0xff]
      %v1223 = vld [vmem:[%s328 + $0x13a] sm:$0xff]
      %v1224 = vld [vmem:[%s328 + $0x142] sm:$0xff]
      %v1225 = vld [vmem:[%s328 + $0x152] sm:$0xff]
      %v1226 = vld [vmem:[%s328 + $0x15a] sm:$0xff]
      %v1227 = vld [vmem:[%s328 + $0x16a] sm:$0xff]
      %v1228 = vld [vmem:[%s328 + $0x172] sm:$0xff]
      %1261 = vrot.lane.b32.xlu0 %v1197, 20
      %v1262 = vpop.permute.xlu0 %1261
      %1263 = vrot.lane.b32.xlu0 %v1198, 20
      %v1264 = vpop.permute.xlu0 %1263
      %1265 = vrot.lane.b32.xlu0 %v1199, 20
      %v1266 = vpop.permute.xlu0 %1265
      %1267 = vrot.lane.b32.xlu0 %v1200, 20
      %v1268 = vpop.permute.xlu0 %1267
      %1269 = vrot.lane.b32.xlu0 %v1201, 20
      %v1270 = vpop.permute.xlu0 %1269
      %1271 = vrot.lane.b32.xlu0 %v1202, 20
      %v1272 = vpop.permute.xlu0 %1271
      %1273 = vrot.lane.b32.xlu0 %v1203, 20
      %v1274 = vpop.permute.xlu0 %1273
      %1275 = vrot.lane.b32.xlu0 %v1204, 20
      %v1276 = vpop.permute.xlu0 %1275
      %1277 = vrot.lane.b32.xlu0 %v1205, 20
      %v1278 = vpop.permute.xlu0 %1277
      %1279 = vrot.lane.b32.xlu0 %v1206, 20
      %v1280 = vpop.permute.xlu0 %1279
      %1281 = vrot.lane.b32.xlu0 %v1207, 20
      %v1282 = vpop.permute.xlu0 %1281
      %1283 = vrot.lane.b32.xlu0 %v1208, 20
      %v1284 = vpop.permute.xlu0 %1283
      %1285 = vrot.lane.b32.xlu0 %v1209, 20
      %v1286 = vpop.permute.xlu0 %1285
      %1287 = vrot.lane.b32.xlu0 %v1210, 20
      %v1288 = vpop.permute.xlu0 %1287
      %1289 = vrot.lane.b32.xlu0 %v1211, 20
      %v1290 = vpop.permute.xlu0 %1289
      %1291 = vrot.lane.b32.xlu0 %v1212, 20
      %v1292 = vpop.permute.xlu0 %1291
      %1293 = vrot.lane.b32.xlu0 %v1213, 20
      %v1294 = vpop.permute.xlu0 %1293
      %1295 = vrot.lane.b32.xlu0 %v1214, 20
      %v1296 = vpop.permute.xlu0 %1295
      %1297 = vrot.lane.b32.xlu0 %v1215, 20
      %v1298 = vpop.permute.xlu0 %1297
      %1299 = vrot.lane.b32.xlu0 %v1216, 20
      %v1300 = vpop.permute.xlu0 %1299
      %1301 = vrot.lane.b32.xlu0 %v1217, 20
      %v1302 = vpop.permute.xlu0 %1301
      %1303 = vrot.lane.b32.xlu0 %v1218, 20
      %v1304 = vpop.permute.xlu0 %1303
      %1305 = vrot.lane.b32.xlu0 %v1219, 20
      %v1306 = vpop.permute.xlu0 %1305
      %1307 = vrot.lane.b32.xlu0 %v1220, 20
      %v1308 = vpop.permute.xlu0 %1307
      %1309 = vrot.lane.b32.xlu0 %v1221, 20
      %v1310 = vpop.permute.xlu0 %1309
      %1311 = vrot.lane.b32.xlu0 %v1222, 20
      %v1312 = vpop.permute.xlu0 %1311
      %1313 = vrot.lane.b32.xlu0 %v1223, 20
      %v1314 = vpop.permute.xlu0 %1313
      %1315 = vrot.lane.b32.xlu0 %v1224, 20
      %v1316 = vpop.permute.xlu0 %1315
      %1317 = vrot.lane.b32.xlu0 %v1225, 20
      %v1318 = vpop.permute.xlu0 %1317
      %1319 = vrot.lane.b32.xlu0 %v1226, 20
      %v1320 = vpop.permute.xlu0 %1319
      %1321 = vrot.lane.b32.xlu0 %v1227, 20
      %v1322 = vpop.permute.xlu0 %1321
      %1323 = vrot.lane.b32.xlu0 %v1228, 20
      %v1324 = vpop.permute.xlu0 %1323
      %vm1357 = vcmask 195744
      %1358 = vst.msk [vmem:[#allocation4] sm:$0xff] %vm1357, %v1262
      %1359 = vst.msk [vmem:[#allocation4 + $0x8] sm:$0xff] %vm1357, %v1264
      %1360 = vst.msk [vmem:[#allocation4 + $0x10] sm:$0xff] %vm1357, %v1266
      %1361 = vst.msk [vmem:[#allocation4 + $0x18] sm:$0xff] %vm1357, %v1268
      %1362 = vst.msk [vmem:[#allocation4 + $0x20] sm:$0xff] %vm1357, %v1270
      %1363 = vst.msk [vmem:[#allocation4 + $0x28] sm:$0xff] %vm1357, %v1272
      %1364 = vst.msk [vmem:[#allocation4 + $0x30] sm:$0xff] %vm1357, %v1274
      %1365 = vst.msk [vmem:[#allocation4 + $0x38] sm:$0xff] %vm1357, %v1276
      %1366 = vst.msk [vmem:[#allocation4 + $0x40] sm:$0xff] %vm1357, %v1278
      %1367 = vst.msk [vmem:[#allocation4 + $0x48] sm:$0xff] %vm1357, %v1280
      %1368 = vst.msk [vmem:[#allocation4 + $0x50] sm:$0xff] %vm1357, %v1282
      %1369 = vst.msk [vmem:[#allocation4 + $0x58] sm:$0xff] %vm1357, %v1284
      %1370 = vst.msk [vmem:[#allocation4 + $0x60] sm:$0xff] %vm1357, %v1286
      %1371 = vst.msk [vmem:[#allocation4 + $0x68] sm:$0xff] %vm1357, %v1288
      %1372 = vst.msk [vmem:[#allocation4 + $0x70] sm:$0xff] %vm1357, %v1290
      %1373 = vst.msk [vmem:[#allocation4 + $0x78] sm:$0xff] %vm1357, %v1292
      %1374 = vst.msk [vmem:[#allocation4 + $0x80] sm:$0xff] %vm1357, %v1294
      %1375 = vst.msk [vmem:[#allocation4 + $0x88] sm:$0xff] %vm1357, %v1296
      %1376 = vst.msk [vmem:[#allocation4 + $0x90] sm:$0xff] %vm1357, %v1298
      %1377 = vst.msk [vmem:[#allocation4 + $0x98] sm:$0xff] %vm1357, %v1300
      %1378 = vst.msk [vmem:[#allocation4 + $0xa0] sm:$0xff] %vm1357, %v1302
      %1379 = vst.msk [vmem:[#allocation4 + $0xa8] sm:$0xff] %vm1357, %v1304
      %1380 = vst.msk [vmem:[#allocation4 + $0xb0] sm:$0xff] %vm1357, %v1306
      %1381 = vst.msk [vmem:[#allocation4 + $0xb8] sm:$0xff] %vm1357, %v1308
      %1382 = vst.msk [vmem:[#allocation4 + $0xc0] sm:$0xff] %vm1357, %v1310
      %1383 = vst.msk [vmem:[#allocation4 + $0xc8] sm:$0xff] %vm1357, %v1312
      %1384 = vst.msk [vmem:[#allocation4 + $0xd0] sm:$0xff] %vm1357, %v1314
      %1385 = vst.msk [vmem:[#allocation4 + $0xd8] sm:$0xff] %vm1357, %v1316
      %1386 = vst.msk [vmem:[#allocation4 + $0xe0] sm:$0xff] %vm1357, %v1318
      %1387 = vst.msk [vmem:[#allocation4 + $0xe8] sm:$0xff] %vm1357, %v1320
      %1388 = vst.msk [vmem:[#allocation4 + $0xf0] sm:$0xff] %vm1357, %v1322
      %1389 = vst.msk [vmem:[#allocation4 + $0xf8] sm:$0xff] %vm1357, %v1324
      %s1390 = scalar_lea.vmem [#allocation2], 48
      %v1391 = vld [vmem:[%s1390] sm:$0xff]
      %v1392 = vld [vmem:[%s1390 + $0x8] sm:$0xff]
      %v1393 = vld [vmem:[%s1390 + $0x18] sm:$0xff]
      %v1394 = vld [vmem:[%s1390 + $0x20] sm:$0xff]
      %v1395 = vld [vmem:[%s1390 + $0x30] sm:$0xff]
      %v1396 = vld [vmem:[%s1390 + $0x38] sm:$0xff]
      %v1397 = vld [vmem:[%s1390 + $0x48] sm:$0xff]
      %v1398 = vld [vmem:[%s1390 + $0x50] sm:$0xff]
      %v1399 = vld [vmem:[%s1390 + $0x60] sm:$0xff]
      %v1400 = vld [vmem:[%s1390 + $0x68] sm:$0xff]
      %v1401 = vld [vmem:[%s1390 + $0x78] sm:$0xff]
      %v1402 = vld [vmem:[%s1390 + $0x80] sm:$0xff]
      %v1403 = vld [vmem:[%s1390 + $0x90] sm:$0xff]
      %v1404 = vld [vmem:[%s1390 + $0x98] sm:$0xff]
      %v1405 = vld [vmem:[%s1390 + $0xa8] sm:$0xff]
      %v1406 = vld [vmem:[%s1390 + $0xb0] sm:$0xff]
      %v1407 = vld [vmem:[%s1390 + $0xc0] sm:$0xff]
      %v1408 = vld [vmem:[%s1390 + $0xc8] sm:$0xff]
      %v1409 = vld [vmem:[%s1390 + $0xd8] sm:$0xff]
      %v1410 = vld [vmem:[%s1390 + $0xe0] sm:$0xff]
      %v1411 = vld [vmem:[%s1390 + $0xf0] sm:$0xff]
      %v1412 = vld [vmem:[%s1390 + $0xf8] sm:$0xff]
      %v1413 = vld [vmem:[%s1390 + $0x108] sm:$0xff]
      %v1414 = vld [vmem:[%s1390 + $0x110] sm:$0xff]
      %v1415 = vld [vmem:[%s1390 + $0x120] sm:$0xff]
      %v1416 = vld [vmem:[%s1390 + $0x128] sm:$0xff]
      %v1417 = vld [vmem:[%s1390 + $0x138] sm:$0xff]
      %v1418 = vld [vmem:[%s1390 + $0x140] sm:$0xff]
      %v1419 = vld [vmem:[%s1390 + $0x150] sm:$0xff]
      %v1420 = vld [vmem:[%s1390 + $0x158] sm:$0xff]
      %v1421 = vld [vmem:[%s1390 + $0x168] sm:$0xff]
      %v1422 = vld [vmem:[%s1390 + $0x170] sm:$0xff]
      %1455 = vrot.lane.b32.xlu0 %v1391, 24
      %v1456 = vpop.permute.xlu0 %1455
      %1457 = vrot.lane.b32.xlu0 %v1392, 24
      %v1458 = vpop.permute.xlu0 %1457
      %1459 = vrot.lane.b32.xlu0 %v1393, 24
      %v1460 = vpop.permute.xlu0 %1459
      %1461 = vrot.lane.b32.xlu0 %v1394, 24
      %v1462 = vpop.permute.xlu0 %1461
      %1463 = vrot.lane.b32.xlu0 %v1395, 24
      %v1464 = vpop.permute.xlu0 %1463
      %1465 = vrot.lane.b32.xlu0 %v1396, 24
      %v1466 = vpop.permute.xlu0 %1465
      %1467 = vrot.lane.b32.xlu0 %v1397, 24
      %v1468 = vpop.permute.xlu0 %1467
      %1469 = vrot.lane.b32.xlu0 %v1398, 24
      %v1470 = vpop.permute.xlu0 %1469
      %1471 = vrot.lane.b32.xlu0 %v1399, 24
      %v1472 = vpop.permute.xlu0 %1471
      %1473 = vrot.lane.b32.xlu0 %v1400, 24
      %v1474 = vpop.permute.xlu0 %1473
      %1475 = vrot.lane.b32.xlu0 %v1401, 24
      %v1476 = vpop.permute.xlu0 %1475
      %1477 = vrot.lane.b32.xlu0 %v1402, 24
      %v1478 = vpop.permute.xlu0 %1477
      %1479 = vrot.lane.b32.xlu0 %v1403, 24
      %v1480 = vpop.permute.xlu0 %1479
      %1481 = vrot.lane.b32.xlu0 %v1404, 24
      %v1482 = vpop.permute.xlu0 %1481
      %1483 = vrot.lane.b32.xlu0 %v1405, 24
      %v1484 = vpop.permute.xlu0 %1483
      %1485 = vrot.lane.b32.xlu0 %v1406, 24
      %v1486 = vpop.permute.xlu0 %1485
      %1487 = vrot.lane.b32.xlu0 %v1407, 24
      %v1488 = vpop.permute.xlu0 %1487
      %1489 = vrot.lane.b32.xlu0 %v1408, 24
      %v1490 = vpop.permute.xlu0 %1489
      %1491 = vrot.lane.b32.xlu0 %v1409, 24
      %v1492 = vpop.permute.xlu0 %1491
      %1493 = vrot.lane.b32.xlu0 %v1410, 24
      %v1494 = vpop.permute.xlu0 %1493
      %1495 = vrot.lane.b32.xlu0 %v1411, 24
      %v1496 = vpop.permute.xlu0 %1495
      %1497 = vrot.lane.b32.xlu0 %v1412, 24
      %v1498 = vpop.permute.xlu0 %1497
      %1499 = vrot.lane.b32.xlu0 %v1413, 24
      %v1500 = vpop.permute.xlu0 %1499
      %1501 = vrot.lane.b32.xlu0 %v1414, 24
      %v1502 = vpop.permute.xlu0 %1501
      %1503 = vrot.lane.b32.xlu0 %v1415, 24
      %v1504 = vpop.permute.xlu0 %1503
      %1505 = vrot.lane.b32.xlu0 %v1416, 24
      %v1506 = vpop.permute.xlu0 %1505
      %1507 = vrot.lane.b32.xlu0 %v1417, 24
      %v1508 = vpop.permute.xlu0 %1507
      %1509 = vrot.lane.b32.xlu0 %v1418, 24
      %v1510 = vpop.permute.xlu0 %1509
      %1511 = vrot.lane.b32.xlu0 %v1419, 24
      %v1512 = vpop.permute.xlu0 %1511
      %1513 = vrot.lane.b32.xlu0 %v1420, 24
      %v1514 = vpop.permute.xlu0 %1513
      %1515 = vrot.lane.b32.xlu0 %v1421, 24
      %v1516 = vpop.permute.xlu0 %1515
      %1517 = vrot.lane.b32.xlu0 %v1422, 24
      %v1518 = vpop.permute.xlu0 %1517
      %vm1551 = vcmask 228544
      %1552 = vst.msk [vmem:[#allocation4] sm:$0xff] %vm1551, %v1456
      %1553 = vst.msk [vmem:[#allocation4 + $0x8] sm:$0xff] %vm1551, %v1458
      %1554 = vst.msk [vmem:[#allocation4 + $0x10] sm:$0xff] %vm1551, %v1460
      %1555 = vst.msk [vmem:[#allocation4 + $0x18] sm:$0xff] %vm1551, %v1462
      %1556 = vst.msk [vmem:[#allocation4 + $0x20] sm:$0xff] %vm1551, %v1464
      %1557 = vst.msk [vmem:[#allocation4 + $0x28] sm:$0xff] %vm1551, %v1466
      %1558 = vst.msk [vmem:[#allocation4 + $0x30] sm:$0xff] %vm1551, %v1468
      %1559 = vst.msk [vmem:[#allocation4 + $0x38] sm:$0xff] %vm1551, %v1470
      %1560 = vst.msk [vmem:[#allocation4 + $0x40] sm:$0xff] %vm1551, %v1472
      %1561 = vst.msk [vmem:[#allocation4 + $0x48] sm:$0xff] %vm1551, %v1474
      %1562 = vst.msk [vmem:[#allocation4 + $0x50] sm:$0xff] %vm1551, %v1476
      %1563 = vst.msk [vmem:[#allocation4 + $0x58] sm:$0xff] %vm1551, %v1478
      %1564 = vst.msk [vmem:[#allocation4 + $0x60] sm:$0xff] %vm1551, %v1480
      %1565 = vst.msk [vmem:[#allocation4 + $0x68] sm:$0xff] %vm1551, %v1482
      %1566 = vst.msk [vmem:[#allocation4 + $0x70] sm:$0xff] %vm1551, %v1484
      %1567 = vst.msk [vmem:[#allocation4 + $0x78] sm:$0xff] %vm1551, %v1486
      %1568 = vst.msk [vmem:[#allocation4 + $0x80] sm:$0xff] %vm1551, %v1488
      %1569 = vst.msk [vmem:[#allocation4 + $0x88] sm:$0xff] %vm1551, %v1490
      %1570 = vst.msk [vmem:[#allocation4 + $0x90] sm:$0xff] %vm1551, %v1492
      %1571 = vst.msk [vmem:[#allocation4 + $0x98] sm:$0xff] %vm1551, %v1494
      %1572 = vst.msk [vmem:[#allocation4 + $0xa0] sm:$0xff] %vm1551, %v1496
      %1573 = vst.msk [vmem:[#allocation4 + $0xa8] sm:$0xff] %vm1551, %v1498
      %1574 = vst.msk [vmem:[#allocation4 + $0xb0] sm:$0xff] %vm1551, %v1500
      %1575 = vst.msk [vmem:[#allocation4 + $0xb8] sm:$0xff] %vm1551, %v1502
      %1576 = vst.msk [vmem:[#allocation4 + $0xc0] sm:$0xff] %vm1551, %v1504
      %1577 = vst.msk [vmem:[#allocation4 + $0xc8] sm:$0xff] %vm1551, %v1506
      %1578 = vst.msk [vmem:[#allocation4 + $0xd0] sm:$0xff] %vm1551, %v1508
      %1579 = vst.msk [vmem:[#allocation4 + $0xd8] sm:$0xff] %vm1551, %v1510
      %1580 = vst.msk [vmem:[#allocation4 + $0xe0] sm:$0xff] %vm1551, %v1512
      %1581 = vst.msk [vmem:[#allocation4 + $0xe8] sm:$0xff] %vm1551, %v1514
      %1582 = vst.msk [vmem:[#allocation4 + $0xf0] sm:$0xff] %vm1551, %v1516
      %1583 = vst.msk [vmem:[#allocation4 + $0xf8] sm:$0xff] %vm1551, %v1518
      %v1584 = vld [vmem:[%s1390 + $0x1] sm:$0xff]
      %v1585 = vld [vmem:[%s1390 + $0x9] sm:$0xff]
      %v1586 = vld [vmem:[%s1390 + $0x19] sm:$0xff]
      %v1587 = vld [vmem:[%s1390 + $0x21] sm:$0xff]
      %v1588 = vld [vmem:[%s1390 + $0x31] sm:$0xff]
      %v1589 = vld [vmem:[%s1390 + $0x39] sm:$0xff]
      %v1590 = vld [vmem:[%s1390 + $0x49] sm:$0xff]
      %v1591 = vld [vmem:[%s1390 + $0x51] sm:$0xff]
      %v1592 = vld [vmem:[%s1390 + $0x61] sm:$0xff]
      %v1593 = vld [vmem:[%s1390 + $0x69] sm:$0xff]
      %v1594 = vld [vmem:[%s1390 + $0x79] sm:$0xff]
      %v1595 = vld [vmem:[%s1390 + $0x81] sm:$0xff]
      %v1596 = vld [vmem:[%s1390 + $0x91] sm:$0xff]
      %v1597 = vld [vmem:[%s1390 + $0x99] sm:$0xff]
      %v1598 = vld [vmem:[%s1390 + $0xa9] sm:$0xff]
      %v1599 = vld [vmem:[%s1390 + $0xb1] sm:$0xff]
      %v1600 = vld [vmem:[%s1390 + $0xc1] sm:$0xff]
      %v1601 = vld [vmem:[%s1390 + $0xc9] sm:$0xff]
      %v1602 = vld [vmem:[%s1390 + $0xd9] sm:$0xff]
      %v1603 = vld [vmem:[%s1390 + $0xe1] sm:$0xff]
      %v1604 = vld [vmem:[%s1390 + $0xf1] sm:$0xff]
      %v1605 = vld [vmem:[%s1390 + $0xf9] sm:$0xff]
      %v1606 = vld [vmem:[%s1390 + $0x109] sm:$0xff]
      %v1607 = vld [vmem:[%s1390 + $0x111] sm:$0xff]
      %v1608 = vld [vmem:[%s1390 + $0x121] sm:$0xff]
      %v1609 = vld [vmem:[%s1390 + $0x129] sm:$0xff]
      %v1610 = vld [vmem:[%s1390 + $0x139] sm:$0xff]
      %v1611 = vld [vmem:[%s1390 + $0x141] sm:$0xff]
      %v1612 = vld [vmem:[%s1390 + $0x151] sm:$0xff]
      %v1613 = vld [vmem:[%s1390 + $0x159] sm:$0xff]
      %v1614 = vld [vmem:[%s1390 + $0x169] sm:$0xff]
      %v1615 = vld [vmem:[%s1390 + $0x171] sm:$0xff]
      %1648 = vrot.lane.b32.xlu0 %v1584, 28
      %v1649 = vpop.permute.xlu0 %1648
      %1650 = vrot.lane.b32.xlu0 %v1585, 28
      %v1651 = vpop.permute.xlu0 %1650
      %1652 = vrot.lane.b32.xlu0 %v1586, 28
      %v1653 = vpop.permute.xlu0 %1652
      %1654 = vrot.lane.b32.xlu0 %v1587, 28
      %v1655 = vpop.permute.xlu0 %1654
      %1656 = vrot.lane.b32.xlu0 %v1588, 28
      %v1657 = vpop.permute.xlu0 %1656
      %1658 = vrot.lane.b32.xlu0 %v1589, 28
      %v1659 = vpop.permute.xlu0 %1658
      %1660 = vrot.lane.b32.xlu0 %v1590, 28
      %v1661 = vpop.permute.xlu0 %1660
      %1662 = vrot.lane.b32.xlu0 %v1591, 28
      %v1663 = vpop.permute.xlu0 %1662
      %1664 = vrot.lane.b32.xlu0 %v1592, 28
      %v1665 = vpop.permute.xlu0 %1664
      %1666 = vrot.lane.b32.xlu0 %v1593, 28
      %v1667 = vpop.permute.xlu0 %1666
      %1668 = vrot.lane.b32.xlu0 %v1594, 28
      %v1669 = vpop.permute.xlu0 %1668
      %1670 = vrot.lane.b32.xlu0 %v1595, 28
      %v1671 = vpop.permute.xlu0 %1670
      %1672 = vrot.lane.b32.xlu0 %v1596, 28
      %v1673 = vpop.permute.xlu0 %1672
      %1674 = vrot.lane.b32.xlu0 %v1597, 28
      %v1675 = vpop.permute.xlu0 %1674
      %1676 = vrot.lane.b32.xlu0 %v1598, 28
      %v1677 = vpop.permute.xlu0 %1676
      %1678 = vrot.lane.b32.xlu0 %v1599, 28
      %v1679 = vpop.permute.xlu0 %1678
      %1680 = vrot.lane.b32.xlu0 %v1600, 28
      %v1681 = vpop.permute.xlu0 %1680
      %1682 = vrot.lane.b32.xlu0 %v1601, 28
      %v1683 = vpop.permute.xlu0 %1682
      %1684 = vrot.lane.b32.xlu0 %v1602, 28
      %v1685 = vpop.permute.xlu0 %1684
      %1686 = vrot.lane.b32.xlu0 %v1603, 28
      %v1687 = vpop.permute.xlu0 %1686
      %1688 = vrot.lane.b32.xlu0 %v1604, 28
      %v1689 = vpop.permute.xlu0 %1688
      %1690 = vrot.lane.b32.xlu0 %v1605, 28
      %v1691 = vpop.permute.xlu0 %1690
      %1692 = vrot.lane.b32.xlu0 %v1606, 28
      %v1693 = vpop.permute.xlu0 %1692
      %1694 = vrot.lane.b32.xlu0 %v1607, 28
      %v1695 = vpop.permute.xlu0 %1694
      %1696 = vrot.lane.b32.xlu0 %v1608, 28
      %v1697 = vpop.permute.xlu0 %1696
      %1698 = vrot.lane.b32.xlu0 %v1609, 28
      %v1699 = vpop.permute.xlu0 %1698
      %1700 = vrot.lane.b32.xlu0 %v1610, 28
      %v1701 = vpop.permute.xlu0 %1700
      %1702 = vrot.lane.b32.xlu0 %v1611, 28
      %v1703 = vpop.permute.xlu0 %1702
      %1704 = vrot.lane.b32.xlu0 %v1612, 28
      %v1705 = vpop.permute.xlu0 %1704
      %1706 = vrot.lane.b32.xlu0 %v1613, 28
      %v1707 = vpop.permute.xlu0 %1706
      %1708 = vrot.lane.b32.xlu0 %v1614, 28
      %v1709 = vpop.permute.xlu0 %1708
      %1710 = vrot.lane.b32.xlu0 %v1615, 28
      %v1711 = vpop.permute.xlu0 %1710
      %vm1744 = vcmask 261344
      %1745 = vst.msk [vmem:[#allocation4] sm:$0xff] %vm1744, %v1649
      %1746 = vst.msk [vmem:[#allocation4 + $0x8] sm:$0xff] %vm1744, %v1651
      %1747 = vst.msk [vmem:[#allocation4 + $0x10] sm:$0xff] %vm1744, %v1653
      %1748 = vst.msk [vmem:[#allocation4 + $0x18] sm:$0xff] %vm1744, %v1655
      %1749 = vst.msk [vmem:[#allocation4 + $0x20] sm:$0xff] %vm1744, %v1657
      %1750 = vst.msk [vmem:[#allocation4 + $0x28] sm:$0xff] %vm1744, %v1659
      %1751 = vst.msk [vmem:[#allocation4 + $0x30] sm:$0xff] %vm1744, %v1661
      %1752 = vst.msk [vmem:[#allocation4 + $0x38] sm:$0xff] %vm1744, %v1663
      %1753 = vst.msk [vmem:[#allocation4 + $0x40] sm:$0xff] %vm1744, %v1665
      %1754 = vst.msk [vmem:[#allocation4 + $0x48] sm:$0xff] %vm1744, %v1667
      %1755 = vst.msk [vmem:[#allocation4 + $0x50] sm:$0xff] %vm1744, %v1669
      %1756 = vst.msk [vmem:[#allocation4 + $0x58] sm:$0xff] %vm1744, %v1671
      %1757 = vst.msk [vmem:[#allocation4 + $0x60] sm:$0xff] %vm1744, %v1673
      %1758 = vst.msk [vmem:[#allocation4 + $0x68] sm:$0xff] %vm1744, %v1675
      %1759 = vst.msk [vmem:[#allocation4 + $0x70] sm:$0xff] %vm1744, %v1677
      %1760 = vst.msk [vmem:[#allocation4 + $0x78] sm:$0xff] %vm1744, %v1679
      %1761 = vst.msk [vmem:[#allocation4 + $0x80] sm:$0xff] %vm1744, %v1681
      %1762 = vst.msk [vmem:[#allocation4 + $0x88] sm:$0xff] %vm1744, %v1683
      %1763 = vst.msk [vmem:[#allocation4 + $0x90] sm:$0xff] %vm1744, %v1685
      %1764 = vst.msk [vmem:[#allocation4 + $0x98] sm:$0xff] %vm1744, %v1687
      %1765 = vst.msk [vmem:[#allocation4 + $0xa0] sm:$0xff] %vm1744, %v1689
      %1766 = vst.msk [vmem:[#allocation4 + $0xa8] sm:$0xff] %vm1744, %v1691
      %1767 = vst.msk [vmem:[#allocation4 + $0xb0] sm:$0xff] %vm1744, %v1693
      %1768 = vst.msk [vmem:[#allocation4 + $0xb8] sm:$0xff] %vm1744, %v1695
      %1769 = vst.msk [vmem:[#allocation4 + $0xc0] sm:$0xff] %vm1744, %v1697
      %1770 = vst.msk [vmem:[#allocation4 + $0xc8] sm:$0xff] %vm1744, %v1699
      %1771 = vst.msk [vmem:[#allocation4 + $0xd0] sm:$0xff] %vm1744, %v1701
      %1772 = vst.msk [vmem:[#allocation4 + $0xd8] sm:$0xff] %vm1744, %v1703
      %1773 = vst.msk [vmem:[#allocation4 + $0xe0] sm:$0xff] %vm1744, %v1705
      %1774 = vst.msk [vmem:[#allocation4 + $0xe8] sm:$0xff] %vm1744, %v1707
      %1775 = vst.msk [vmem:[#allocation4 + $0xf0] sm:$0xff] %vm1744, %v1709
      %1776 = vst.msk [vmem:[#allocation4 + $0xf8] sm:$0xff] %vm1744, %v1711
      %v1777 = vld [vmem:[%s1390 + $0x2] sm:$0xff]
      %v1778 = vld [vmem:[%s1390 + $0xa] sm:$0xff]
      %v1779 = vld [vmem:[%s1390 + $0x1a] sm:$0xff]
      %v1780 = vld [vmem:[%s1390 + $0x22] sm:$0xff]
      %v1781 = vld [vmem:[%s1390 + $0x32] sm:$0xff]
      %v1782 = vld [vmem:[%s1390 + $0x3a] sm:$0xff]
      %v1783 = vld [vmem:[%s1390 + $0x4a] sm:$0xff]
      %v1784 = vld [vmem:[%s1390 + $0x52] sm:$0xff]
      %v1785 = vld [vmem:[%s1390 + $0x62] sm:$0xff]
      %v1786 = vld [vmem:[%s1390 + $0x6a] sm:$0xff]
      %v1787 = vld [vmem:[%s1390 + $0x7a] sm:$0xff]
      %v1788 = vld [vmem:[%s1390 + $0x82] sm:$0xff]
      %v1789 = vld [vmem:[%s1390 + $0x92] sm:$0xff]
      %v1790 = vld [vmem:[%s1390 + $0x9a] sm:$0xff]
      %v1791 = vld [vmem:[%s1390 + $0xaa] sm:$0xff]
      %v1792 = vld [vmem:[%s1390 + $0xb2] sm:$0xff]
      %v1793 = vld [vmem:[%s1390 + $0xc2] sm:$0xff]
      %v1794 = vld [vmem:[%s1390 + $0xca] sm:$0xff]
      %v1795 = vld [vmem:[%s1390 + $0xda] sm:$0xff]
      %v1796 = vld [vmem:[%s1390 + $0xe2] sm:$0xff]
      %v1797 = vld [vmem:[%s1390 + $0xf2] sm:$0xff]
      %v1798 = vld [vmem:[%s1390 + $0xfa] sm:$0xff]
      %v1799 = vld [vmem:[%s1390 + $0x10a] sm:$0xff]
      %v1800 = vld [vmem:[%s1390 + $0x112] sm:$0xff]
      %v1801 = vld [vmem:[%s1390 + $0x122] sm:$0xff]
      %v1802 = vld [vmem:[%s1390 + $0x12a] sm:$0xff]
      %v1803 = vld [vmem:[%s1390 + $0x13a] sm:$0xff]
      %v1804 = vld [vmem:[%s1390 + $0x142] sm:$0xff]
      %v1805 = vld [vmem:[%s1390 + $0x152] sm:$0xff]
      %v1806 = vld [vmem:[%s1390 + $0x15a] sm:$0xff]
      %v1807 = vld [vmem:[%s1390 + $0x16a] sm:$0xff]
      %v1808 = vld [vmem:[%s1390 + $0x172] sm:$0xff]
      %1841 = vrot.lane.b32.xlu0 %v1777, 32
      %v1842 = vpop.permute.xlu0 %1841
      %1843 = vrot.lane.b32.xlu0 %v1778, 32
      %v1844 = vpop.permute.xlu0 %1843
      %1845 = vrot.lane.b32.xlu0 %v1779, 32
      %v1846 = vpop.permute.xlu0 %1845
      %1847 = vrot.lane.b32.xlu0 %v1780, 32
      %v1848 = vpop.permute.xlu0 %1847
      %1849 = vrot.lane.b32.xlu0 %v1781, 32
      %v1850 = vpop.permute.xlu0 %1849
      %1851 = vrot.lane.b32.xlu0 %v1782, 32
      %v1852 = vpop.permute.xlu0 %1851
      %1853 = vrot.lane.b32.xlu0 %v1783, 32
      %v1854 = vpop.permute.xlu0 %1853
      %1855 = vrot.lane.b32.xlu0 %v1784, 32
      %v1856 = vpop.permute.xlu0 %1855
      %1857 = vrot.lane.b32.xlu0 %v1785, 32
      %v1858 = vpop.permute.xlu0 %1857
      %1859 = vrot.lane.b32.xlu0 %v1786, 32
      %v1860 = vpop.permute.xlu0 %1859
      %1861 = vrot.lane.b32.xlu0 %v1787, 32
      %v1862 = vpop.permute.xlu0 %1861
      %1863 = vrot.lane.b32.xlu0 %v1788, 32
      %v1864 = vpop.permute.xlu0 %1863
      %1865 = vrot.lane.b32.xlu0 %v1789, 32
      %v1866 = vpop.permute.xlu0 %1865
      %1867 = vrot.lane.b32.xlu0 %v1790, 32
      %v1868 = vpop.permute.xlu0 %1867
      %1869 = vrot.lane.b32.xlu0 %v1791, 32
      %v1870 = vpop.permute.xlu0 %1869
      %1871 = vrot.lane.b32.xlu0 %v1792, 32
      %v1872 = vpop.permute.xlu0 %1871
      %1873 = vrot.lane.b32.xlu0 %v1793, 32
      %v1874 = vpop.permute.xlu0 %1873
      %1875 = vrot.lane.b32.xlu0 %v1794, 32
      %v1876 = vpop.permute.xlu0 %1875
      %1877 = vrot.lane.b32.xlu0 %v1795, 32
      %v1878 = vpop.permute.xlu0 %1877
      %1879 = vrot.lane.b32.xlu0 %v1796, 32
      %v1880 = vpop.permute.xlu0 %1879
      %1881 = vrot.lane.b32.xlu0 %v1797, 32
      %v1882 = vpop.permute.xlu0 %1881
      %1883 = vrot.lane.b32.xlu0 %v1798, 32
      %v1884 = vpop.permute.xlu0 %1883
      %1885 = vrot.lane.b32.xlu0 %v1799, 32
      %v1886 = vpop.permute.xlu0 %1885
      %1887 = vrot.lane.b32.xlu0 %v1800, 32
      %v1888 = vpop.permute.xlu0 %1887
      %1889 = vrot.lane.b32.xlu0 %v1801, 32
      %v1890 = vpop.permute.xlu0 %1889
      %1891 = vrot.lane.b32.xlu0 %v1802, 32
      %v1892 = vpop.permute.xlu0 %1891
      %1893 = vrot.lane.b32.xlu0 %v1803, 32
      %v1894 = vpop.permute.xlu0 %1893
      %1895 = vrot.lane.b32.xlu0 %v1804, 32
      %v1896 = vpop.permute.xlu0 %1895
      %1897 = vrot.lane.b32.xlu0 %v1805, 32
      %v1898 = vpop.permute.xlu0 %1897
      %1899 = vrot.lane.b32.xlu0 %v1806, 32
      %v1900 = vpop.permute.xlu0 %1899
      %1901 = vrot.lane.b32.xlu0 %v1807, 32
      %v1902 = vpop.permute.xlu0 %1901
      %1903 = vrot.lane.b32.xlu0 %v1808, 32
      %v1904 = vpop.permute.xlu0 %1903
      %vm1937 = vcmask 294144
      %1938 = vst.msk [vmem:[#allocation4] sm:$0xff] %vm1937, %v1842
      %1939 = vst.msk [vmem:[#allocation4 + $0x8] sm:$0xff] %vm1937, %v1844
      %1940 = vst.msk [vmem:[#allocation4 + $0x10] sm:$0xff] %vm1937, %v1846
      %1941 = vst.msk [vmem:[#allocation4 + $0x18] sm:$0xff] %vm1937, %v1848
      %1942 = vst.msk [vmem:[#allocation4 + $0x20] sm:$0xff] %vm1937, %v1850
      %1943 = vst.msk [vmem:[#allocation4 + $0x28] sm:$0xff] %vm1937, %v1852
      %1944 = vst.msk [vmem:[#allocation4 + $0x30] sm:$0xff] %vm1937, %v1854
      %1945 = vst.msk [vmem:[#allocation4 + $0x38] sm:$0xff] %vm1937, %v1856
      %1946 = vst.msk [vmem:[#allocation4 + $0x40] sm:$0xff] %vm1937, %v1858
      %1947 = vst.msk [vmem:[#allocation4 + $0x48] sm:$0xff] %vm1937, %v1860
      %1948 = vst.msk [vmem:[#allocation4 + $0x50] sm:$0xff] %vm1937, %v1862
      %1949 = vst.msk [vmem:[#allocation4 + $0x58] sm:$0xff] %vm1937, %v1864
      %1950 = vst.msk [vmem:[#allocation4 + $0x60] sm:$0xff] %vm1937, %v1866
      %1951 = vst.msk [vmem:[#allocation4 + $0x68] sm:$0xff] %vm1937, %v1868
      %1952 = vst.msk [vmem:[#allocation4 + $0x70] sm:$0xff] %vm1937, %v1870
      %1953 = vst.msk [vmem:[#allocation4 + $0x78] sm:$0xff] %vm1937, %v1872
      %1954 = vst.msk [vmem:[#allocation4 + $0x80] sm:$0xff] %vm1937, %v1874
      %1955 = vst.msk [vmem:[#allocation4 + $0x88] sm:$0xff] %vm1937, %v1876
      %1956 = vst.msk [vmem:[#allocation4 + $0x90] sm:$0xff] %vm1937, %v1878
      %1957 = vst.msk [vmem:[#allocation4 + $0x98] sm:$0xff] %vm1937, %v1880
      %1958 = vst.msk [vmem:[#allocation4 + $0xa0] sm:$0xff] %vm1937, %v1882
      %1959 = vst.msk [vmem:[#allocation4 + $0xa8] sm:$0xff] %vm1937, %v1884
      %1960 = vst.msk [vmem:[#allocation4 + $0xb0] sm:$0xff] %vm1937, %v1886
      %1961 = vst.msk [vmem:[#allocation4 + $0xb8] sm:$0xff] %vm1937, %v1888
      %1962 = vst.msk [vmem:[#allocation4 + $0xc0] sm:$0xff] %vm1937, %v1890
      %1963 = vst.msk [vmem:[#allocation4 + $0xc8] sm:$0xff] %vm1937, %v1892
      %1964 = vst.msk [vmem:[#allocation4 + $0xd0] sm:$0xff] %vm1937, %v1894
      %1965 = vst.msk [vmem:[#allocation4 + $0xd8] sm:$0xff] %vm1937, %v1896
      %1966 = vst.msk [vmem:[#allocation4 + $0xe0] sm:$0xff] %vm1937, %v1898
      %1967 = vst.msk [vmem:[#allocation4 + $0xe8] sm:$0xff] %vm1937, %v1900
      %1968 = vst.msk [vmem:[#allocation4 + $0xf0] sm:$0xff] %vm1937, %v1902
      %1969 = vst.msk [vmem:[#allocation4 + $0xf8] sm:$0xff] %vm1937, %v1904
      %v1970 = vld [vmem:[#allocation4] sm:$0xff]
      %v1971 = vld [vmem:[#allocation4 + $0x8] sm:$0xff]
      %v1972 = vld [vmem:[#allocation4 + $0x10] sm:$0xff]
      %v1973 = vld [vmem:[#allocation4 + $0x18] sm:$0xff]
      %v1974 = vld [vmem:[#allocation4 + $0x20] sm:$0xff]
      %v1975 = vld [vmem:[#allocation4 + $0x28] sm:$0xff]
      %v1976 = vld [vmem:[#allocation4 + $0x30] sm:$0xff]
      %v1977 = vld [vmem:[#allocation4 + $0x38] sm:$0xff]
      %v1978 = vld [vmem:[#allocation4 + $0x40] sm:$0xff]
      %v1979 = vld [vmem:[#allocation4 + $0x48] sm:$0xff]
      %v1980 = vld [vmem:[#allocation4 + $0x50] sm:$0xff]
      %v1981 = vld [vmem:[#allocation4 + $0x58] sm:$0xff]
      %v1982 = vld [vmem:[#allocation4 + $0x60] sm:$0xff]
      %v1983 = vld [vmem:[#allocation4 + $0x68] sm:$0xff]
      %v1984 = vld [vmem:[#allocation4 + $0x70] sm:$0xff]
      %v1985 = vld [vmem:[#allocation4 + $0x78] sm:$0xff]
      %v1986 = vld [vmem:[#allocation4 + $0x80] sm:$0xff]
      %v1987 = vld [vmem:[#allocation4 + $0x88] sm:$0xff]
      %v1988 = vld [vmem:[#allocation4 + $0x90] sm:$0xff]
      %v1989 = vld [vmem:[#allocation4 + $0x98] sm:$0xff]
      %v1990 = vld [vmem:[#allocation4 + $0xa0] sm:$0xff]
      %v1991 = vld [vmem:[#allocation4 + $0xa8] sm:$0xff]
      %v1992 = vld [vmem:[#allocation4 + $0xb0] sm:$0xff]
      %v1993 = vld [vmem:[#allocation4 + $0xb8] sm:$0xff]
      %v1994 = vld [vmem:[#allocation4 + $0xc0] sm:$0xff]
      %v1995 = vld [vmem:[#allocation4 + $0xc8] sm:$0xff]
      %v1996 = vld [vmem:[#allocation4 + $0xd0] sm:$0xff]
      %v1997 = vld [vmem:[#allocation4 + $0xd8] sm:$0xff]
      %v1998 = vld [vmem:[#allocation4 + $0xe0] sm:$0xff]
      %v1999 = vld [vmem:[#allocation4 + $0xe8] sm:$0xff]
      %v2000 = vld [vmem:[#allocation4 + $0xf0] sm:$0xff]
      %v2001 = vld [vmem:[#allocation4 + $0xf8] sm:$0xff]
      %v2002 = vpack.c.bf16 %v1970, %v1970
      %v2003 = vpack.c.bf16 %v1971, %v1971
      %v2004 = vpack.c.bf16 %v1972, %v1972
      %v2005 = vpack.c.bf16 %v1973, %v1973
      %v2006 = vpack.c.bf16 %v1974, %v1974
      %v2007 = vpack.c.bf16 %v1975, %v1975
      %v2008 = vpack.c.bf16 %v1976, %v1976
      %v2009 = vpack.c.bf16 %v1977, %v1977
      %v2010 = vpack.c.bf16 %v1978, %v1978
      %v2011 = vpack.c.bf16 %v1979, %v1979
      %v2012 = vpack.c.bf16 %v1980, %v1980
      %v2013 = vpack.c.bf16 %v1981, %v1981
      %v2014 = vpack.c.bf16 %v1982, %v1982
      %v2015 = vpack.c.bf16 %v1983, %v1983
      %v2016 = vpack.c.bf16 %v1984, %v1984
      %v2017 = vpack.c.bf16 %v1985, %v1985
      %v2018 = vpack.c.bf16 %v1986, %v1986
      %v2019 = vpack.c.bf16 %v1987, %v1987
      %v2020 = vpack.c.bf16 %v1988, %v1988
      %v2021 = vpack.c.bf16 %v1989, %v1989
      %v2022 = vpack.c.bf16 %v1990, %v1990
      %v2023 = vpack.c.bf16 %v1991, %v1991
      %v2024 = vpack.c.bf16 %v1992, %v1992
      %v2025 = vpack.c.bf16 %v1993, %v1993
      %v2026 = vpack.c.bf16 %v1994, %v1994
      %v2027 = vpack.c.bf16 %v1995, %v1995
      %v2028 = vpack.c.bf16 %v1996, %v1996
      %v2029 = vpack.c.bf16 %v1997, %v1997
      %v2030 = vpack.c.bf16 %v1998, %v1998
      %v2031 = vpack.c.bf16 %v1999, %v1999
      %v2032 = vpack.c.bf16 %v2000, %v2000
      %v2033 = vpack.c.bf16 %v2001, %v2001
      %v2034 = vld [vmem:[%s1] sm:$0xf]
      %v2035 = vld [vmem:[%s1 + $0x4] sm:$0xf]
      %v2036 = vld [vmem:[%s1 + $0x8] sm:$0xf]
      %v2037 = vld [vmem:[%s1 + $0xc] sm:$0xf]
      %v2038 = vld [vmem:[%s1 + $0x10] sm:$0x3]
      %v2071 = vunpack.c.l.b16 %v2002
      %v2072 = vunpack.c.l.b16 %v2003
      %v2073 = vunpack.c.l.b16 %v2004
      %v2074 = vunpack.c.l.b16 %v2005
      %v2075 = vunpack.c.l.b16 %v2006
      %v2076 = vunpack.c.l.b16 %v2007
      %v2077 = vunpack.c.l.b16 %v2008
      %v2078 = vunpack.c.l.b16 %v2009
      %v2079 = vunpack.c.l.b16 %v2010
      %v2080 = vunpack.c.l.b16 %v2011
      %v2081 = vunpack.c.l.b16 %v2012
      %v2082 = vunpack.c.l.b16 %v2013
      %v2083 = vunpack.c.l.b16 %v2014
      %v2084 = vunpack.c.l.b16 %v2015
      %v2085 = vunpack.c.l.b16 %v2016
      %v2086 = vunpack.c.l.b16 %v2017
      %v2087 = vunpack.c.l.b16 %v2018
      %v2088 = vunpack.c.l.b16 %v2019
      %v2089 = vunpack.c.l.b16 %v2020
      %v2090 = vunpack.c.l.b16 %v2021
      %v2091 = vunpack.c.l.b16 %v2022
      %v2092 = vunpack.c.l.b16 %v2023
      %v2093 = vunpack.c.l.b16 %v2024
      %v2094 = vunpack.c.l.b16 %v2025
      %v2095 = vunpack.c.l.b16 %v2026
      %v2096 = vunpack.c.l.b16 %v2027
      %v2097 = vunpack.c.l.b16 %v2028
      %v2098 = vunpack.c.l.b16 %v2029
      %v2099 = vunpack.c.l.b16 %v2030
      %v2100 = vunpack.c.l.b16 %v2031
      %v2101 = vunpack.c.l.b16 %v2032
      %v2102 = vunpack.c.l.b16 %v2033
      %v2103 = vpack.c.b16 %v2072, %v2071
      %v2104 = vpack.c.b16 %v2074, %v2073
      %v2105 = vpack.c.b16 %v2076, %v2075
      %v2106 = vpack.c.b16 %v2078, %v2077
      %v2107 = vpack.c.b16 %v2080, %v2079
      %v2108 = vpack.c.b16 %v2082, %v2081
      %v2109 = vpack.c.b16 %v2084, %v2083
      %v2110 = vpack.c.b16 %v2086, %v2085
      %v2111 = vpack.c.b16 %v2088, %v2087
      %v2112 = vpack.c.b16 %v2090, %v2089
      %v2113 = vpack.c.b16 %v2092, %v2091
      %v2114 = vpack.c.b16 %v2094, %v2093
      %v2115 = vpack.c.b16 %v2096, %v2095
      %v2116 = vpack.c.b16 %v2098, %v2097
      %v2117 = vpack.c.b16 %v2100, %v2099
      %v2118 = vpack.c.b16 %v2102, %v2101
      %v2124 = vunpack.c.l.b16 %v2034
      %v2125 = vunpack.c.l.b16 %v2035
      %v2126 = vunpack.c.l.b16 %v2036
      %v2127 = vunpack.c.l.b16 %v2037
      %v2128 = vunpack.c.l.b16 %v2038
      %v2129 = vpack.c.b16 %v2125, %v2124
      %v2130 = vpack.c.b16 %v2127, %v2126
      %v2131 = vpack.c.b16 %v2128, %v2128
      %vm2134 = vcmask 293888
      %v2136 = vsel %vm2134, %v2103, 0
      %v2139 = vsel %vm2134, %v2104, 0
      %v2142 = vsel %vm2134, %v2105, 0
      %v2145 = vsel %vm2134, %v2106, 0
      %v2148 = vsel %vm2134, %v2107, 0
      %v2151 = vsel %vm2134, %v2108, 0
      %v2154 = vsel %vm2134, %v2109, 0
      %v2157 = vsel %vm2134, %v2110, 0
      %v2160 = vsel %vm2134, %v2111, 0
      %v2163 = vsel %vm2134, %v2112, 0
      %v2166 = vsel %vm2134, %v2113, 0
      %v2169 = vsel %vm2134, %v2114, 0
      %v2172 = vsel %vm2134, %v2115, 0
      %v2175 = vsel %vm2134, %v2116, 0
      %v2178 = vsel %vm2134, %v2117, 0
      %v2181 = vsel %vm2134, %v2118, 0
      %vm2183 = vcmask 1041408
      %v2185 = vsel %vm2183, %v2131, 0
      %2187 = vmatpush.bf16.msra.mxu0 0
      %2188 = vmatpush.bf16.msra.mxu0 0
      %2189 = vmatpush.bf16.msra.mxu0 0
      %2190 = vmatpush.bf16.msra.mxu0 0
      %2191 = vmatpush.bf16.msra.mxu0 0
      %2192 = vmatpush.bf16.msra.mxu0 %v2185
      %2193 = vmatpush.bf16.msra.mxu0 %v2130
      %2194 = vmatpush.bf16.msra.mxu0 %v2129
      %2195 = vmatmul.bf16.gmra.mxu0 %v2136
      %v2196 = vpop.f32.mrf.mxu0
      %v2197 = vadd.f32 0.0, %v2196
      %v2198 = vpop.f32.mrf.mxu0
      %v2199 = vadd.f32 0.0, %v2198
      %2200 = vmatmul.bf16.gmra.mxu0 %v2139
      %v2201 = vpop.f32.mrf.mxu0
      %v2202 = vadd.f32 0.0, %v2201
      %v2203 = vpop.f32.mrf.mxu0
      %v2204 = vadd.f32 0.0, %v2203
      %2205 = vmatmul.bf16.gmra.mxu0 %v2142
      %v2206 = vpop.f32.mrf.mxu0
      %v2207 = vadd.f32 0.0, %v2206
      %v2208 = vpop.f32.mrf.mxu0
      %v2209 = vadd.f32 0.0, %v2208
      %2210 = vmatmul.bf16.gmra.mxu0 %v2145
      %v2211 = vpop.f32.mrf.mxu0
      %v2212 = vadd.f32 0.0, %v2211
      %v2213 = vpop.f32.mrf.mxu0
      %v2214 = vadd.f32 0.0, %v2213
      %2215 = vmatmul.bf16.gmra.mxu0 %v2148
      %v2216 = vpop.f32.mrf.mxu0
      %v2217 = vadd.f32 0.0, %v2216
      %v2218 = vpop.f32.mrf.mxu0
      %v2219 = vadd.f32 0.0, %v2218
      %2220 = vmatmul.bf16.gmra.mxu0 %v2151
      %v2221 = vpop.f32.mrf.mxu0
      %v2222 = vadd.f32 0.0, %v2221
      %v2223 = vpop.f32.mrf.mxu0
      %v2224 = vadd.f32 0.0, %v2223
      %2225 = vmatmul.bf16.gmra.mxu0 %v2154
      %v2226 = vpop.f32.mrf.mxu0
      %v2227 = vadd.f32 0.0, %v2226
      %v2228 = vpop.f32.mrf.mxu0
      %v2229 = vadd.f32 0.0, %v2228
      %2230 = vmatmul.bf16.gmra.mxu0 %v2157
      %v2231 = vpop.f32.mrf.mxu0
      %v2232 = vadd.f32 0.0, %v2231
      %v2233 = vpop.f32.mrf.mxu0
      %v2234 = vadd.f32 0.0, %v2233
      %2235 = vmatmul.bf16.gmra.mxu0 %v2160
      %v2236 = vpop.f32.mrf.mxu0
      %v2237 = vadd.f32 0.0, %v2236
      %v2238 = vpop.f32.mrf.mxu0
      %v2239 = vadd.f32 0.0, %v2238
      %2240 = vmatmul.bf16.gmra.mxu0 %v2163
      %v2241 = vpop.f32.mrf.mxu0
      %v2242 = vadd.f32 0.0, %v2241
      %v2243 = vpop.f32.mrf.mxu0
      %v2244 = vadd.f32 0.0, %v2243
      %2245 = vmatmul.bf16.gmra.mxu0 %v2166
      %v2246 = vpop.f32.mrf.mxu0
      %v2247 = vadd.f32 0.0, %v2246
      %v2248 = vpop.f32.mrf.mxu0
      %v2249 = vadd.f32 0.0, %v2248
      %2250 = vmatmul.bf16.gmra.mxu0 %v2169
      %v2251 = vpop.f32.mrf.mxu0
      %v2252 = vadd.f32 0.0, %v2251
      %v2253 = vpop.f32.mrf.mxu0
      %v2254 = vadd.f32 0.0, %v2253
      %2255 = vmatmul.bf16.gmra.mxu0 %v2172
      %v2256 = vpop.f32.mrf.mxu0
      %v2257 = vadd.f32 0.0, %v2256
      %v2258 = vpop.f32.mrf.mxu0
      %v2259 = vadd.f32 0.0, %v2258
      %2260 = vmatmul.bf16.gmra.mxu0 %v2175
      %v2261 = vpop.f32.mrf.mxu0
      %v2262 = vadd.f32 0.0, %v2261
      %v2263 = vpop.f32.mrf.mxu0
      %v2264 = vadd.f32 0.0, %v2263
      %2265 = vmatmul.bf16.gmra.mxu0 %v2178
      %v2266 = vpop.f32.mrf.mxu0
      %v2267 = vadd.f32 0.0, %v2266
      %v2268 = vpop.f32.mrf.mxu0
      %v2269 = vadd.f32 0.0, %v2268
      %2270 = vmatmul.bf16.gmra.mxu0 %v2181
      %v2271 = vpop.f32.mrf.mxu0
      %v2272 = vadd.f32 0.0, %v2271
      %v2273 = vpop.f32.mrf.mxu0
      %v2274 = vadd.f32 0.0, %v2273
      %2275 = vdwg.mxu0
      %v2276 = vsel %vm218, %v2197, 0.0
      %v2277 = vsel %vm218, %v2199, 0.0
      %v2278 = vadd.f32 %v2276, %v2277
      %v2279 = vsel %vm218, %v2202, 0.0
      %v2280 = vadd.f32 %v2278, %v2279
      %v2281 = vsel %vm218, %v2204, 0.0
      %v2282 = vadd.f32 %v2280, %v2281
      %v2283 = vsel %vm218, %v2207, 0.0
      %v2284 = vadd.f32 %v2282, %v2283
      %v2285 = vsel %vm218, %v2209, 0.0
      %v2286 = vadd.f32 %v2284, %v2285
      %v2287 = vsel %vm218, %v2212, 0.0
      %v2288 = vadd.f32 %v2286, %v2287
      %v2289 = vsel %vm218, %v2214, 0.0
      %v2290 = vadd.f32 %v2288, %v2289
      %v2291 = vsel %vm218, %v2217, 0.0
      %v2292 = vadd.f32 %v2290, %v2291
      %v2293 = vsel %vm218, %v2219, 0.0
      %v2294 = vadd.f32 %v2292, %v2293
      %v2295 = vsel %vm218, %v2222, 0.0
      %v2296 = vadd.f32 %v2294, %v2295
      %v2297 = vsel %vm218, %v2224, 0.0
      %v2298 = vadd.f32 %v2296, %v2297
      %v2299 = vsel %vm218, %v2227, 0.0
      %v2300 = vadd.f32 %v2298, %v2299
      %v2301 = vsel %vm218, %v2229, 0.0
      %v2302 = vadd.f32 %v2300, %v2301
      %v2303 = vsel %vm218, %v2232, 0.0
      %v2304 = vadd.f32 %v2302, %v2303
      %v2305 = vsel %vm218, %v2234, 0.0
      %v2306 = vadd.f32 %v2304, %v2305
      %v2307 = vsel %vm218, %v2237, 0.0
      %v2308 = vadd.f32 %v2306, %v2307
      %v2309 = vsel %vm218, %v2239, 0.0
      %v2310 = vadd.f32 %v2308, %v2309
      %v2311 = vsel %vm218, %v2242, 0.0
      %v2312 = vadd.f32 %v2310, %v2311
      %v2313 = vsel %vm218, %v2244, 0.0
      %v2314 = vadd.f32 %v2312, %v2313
      %v2315 = vsel %vm218, %v2247, 0.0
      %v2316 = vadd.f32 %v2314, %v2315
      %v2317 = vsel %vm218, %v2249, 0.0
      %v2318 = vadd.f32 %v2316, %v2317
      %v2319 = vsel %vm218, %v2252, 0.0
      %v2320 = vadd.f32 %v2318, %v2319
      %v2321 = vsel %vm218, %v2254, 0.0
      %v2322 = vadd.f32 %v2320, %v2321
      %v2323 = vsel %vm218, %v2257, 0.0
      %v2324 = vadd.f32 %v2322, %v2323
      %v2325 = vsel %vm218, %v2259, 0.0
      %v2326 = vadd.f32 %v2324, %v2325
      %v2327 = vsel %vm218, %v2262, 0.0
      %v2328 = vadd.f32 %v2326, %v2327
      %v2329 = vsel %vm218, %v2264, 0.0
      %v2330 = vadd.f32 %v2328, %v2329
      %v2331 = vsel %vm218, %v2267, 0.0
      %v2332 = vadd.f32 %v2330, %v2331
      %v2333 = vsel %vm218, %v2269, 0.0
      %v2334 = vadd.f32 %v2332, %v2333
      %v2335 = vsel %vm218, %v2272, 0.0
      %v2336 = vadd.f32 %v2334, %v2335
      %v2337 = vsel %vm218, %v2274, 0.0
      %v2338 = vadd.f32 %v2336, %v2337
      %v2339 = vrot.slane %v2338, 4
      %v2340 = vadd.f32 %v2338, %v2339
      %v2341 = vrot.slane %v2340, 2
      %v2342 = vadd.f32 %v2340, %v2341
      %v2343 = vrot.slane %v2342, 1
      %v2344 = vadd.f32 %v2342, %v2343
      %v2345 = vrcp.pop 256.0
      %v2346 = vmul.f32 256.0, %v2345
      %v2347 = vsub.f32 1.0, %v2346
      %v2348 = vmul.f32 %v2345, %v2347
      %v2349 = vadd.f32 %v2345, %v2348
      %vm2350 = vweird.f32 %v2345
      %v2351 = vsel %vm2350, %v2345, %v2349
      %v2352 = vmul.f32 %v2344, %v2351
      %v2353 = vmul.f32 %v2197, %v2197
      %v2354 = vmul.f32 %v2199, %v2199
      %v2355 = vmul.f32 %v2202, %v2202
      %v2356 = vmul.f32 %v2204, %v2204
      %v2357 = vmul.f32 %v2207, %v2207
      %v2358 = vmul.f32 %v2209, %v2209
      %v2359 = vmul.f32 %v2212, %v2212
      %v2360 = vmul.f32 %v2214, %v2214
      %v2361 = vmul.f32 %v2217, %v2217
      %v2362 = vmul.f32 %v2219, %v2219
      %v2363 = vmul.f32 %v2222, %v2222
      %v2364 = vmul.f32 %v2224, %v2224
      %v2365 = vmul.f32 %v2227, %v2227
      %v2366 = vmul.f32 %v2229, %v2229
      %v2367 = vmul.f32 %v2232, %v2232
      %v2368 = vmul.f32 %v2234, %v2234
      %v2369 = vmul.f32 %v2237, %v2237
      %v2370 = vmul.f32 %v2239, %v2239
      %v2371 = vmul.f32 %v2242, %v2242
      %v2372 = vmul.f32 %v2244, %v2244
      %v2373 = vmul.f32 %v2247, %v2247
      %v2374 = vmul.f32 %v2249, %v2249
      %v2375 = vmul.f32 %v2252, %v2252
      %v2376 = vmul.f32 %v2254, %v2254
      %v2377 = vmul.f32 %v2257, %v2257
      %v2378 = vmul.f32 %v2259, %v2259
      %v2379 = vmul.f32 %v2262, %v2262
      %v2380 = vmul.f32 %v2264, %v2264
      %v2381 = vmul.f32 %v2267, %v2267
      %v2382 = vmul.f32 %v2269, %v2269
      %v2383 = vmul.f32 %v2272, %v2272
      %v2384 = vmul.f32 %v2274, %v2274
      %v2385 = vsel %vm218, %v2353, 0.0
      %v2386 = vsel %vm218, %v2354, 0.0
      %v2387 = vadd.f32 %v2385, %v2386
      %v2388 = vsel %vm218, %v2355, 0.0
      %v2389 = vadd.f32 %v2387, %v2388
      %v2390 = vsel %vm218, %v2356, 0.0
      %v2391 = vadd.f32 %v2389, %v2390
      %v2392 = vsel %vm218, %v2357, 0.0
      %v2393 = vadd.f32 %v2391, %v2392
      %v2394 = vsel %vm218, %v2358, 0.0
      %v2395 = vadd.f32 %v2393, %v2394
      %v2396 = vsel %vm218, %v2359, 0.0
      %v2397 = vadd.f32 %v2395, %v2396
      %v2398 = vsel %vm218, %v2360, 0.0
      %v2399 = vadd.f32 %v2397, %v2398
      %v2400 = vsel %vm218, %v2361, 0.0
      %v2401 = vadd.f32 %v2399, %v2400
      %v2402 = vsel %vm218, %v2362, 0.0
      %v2403 = vadd.f32 %v2401, %v2402
      %v2404 = vsel %vm218, %v2363, 0.0
      %v2405 = vadd.f32 %v2403, %v2404
      %v2406 = vsel %vm218, %v2364, 0.0
      %v2407 = vadd.f32 %v2405, %v2406
      %v2408 = vsel %vm218, %v2365, 0.0
      %v2409 = vadd.f32 %v2407, %v2408
      %v2410 = vsel %vm218, %v2366, 0.0
      %v2411 = vadd.f32 %v2409, %v2410
      %v2412 = vsel %vm218, %v2367, 0.0
      %v2413 = vadd.f32 %v2411, %v2412
      %v2414 = vsel %vm218, %v2368, 0.0
      %v2415 = vadd.f32 %v2413, %v2414
      %v2416 = vsel %vm218, %v2369, 0.0
      %v2417 = vadd.f32 %v2415, %v2416
      %v2418 = vsel %vm218, %v2370, 0.0
      %v2419 = vadd.f32 %v2417, %v2418
      %v2420 = vsel %vm218, %v2371, 0.0
      %v2421 = vadd.f32 %v2419, %v2420
      %v2422 = vsel %vm218, %v2372, 0.0
      %v2423 = vadd.f32 %v2421, %v2422
      %v2424 = vsel %vm218, %v2373, 0.0
      %v2425 = vadd.f32 %v2423, %v2424
      %v2426 = vsel %vm218, %v2374, 0.0
      %v2427 = vadd.f32 %v2425, %v2426
      %v2428 = vsel %vm218, %v2375, 0.0
      %v2429 = vadd.f32 %v2427, %v2428
      %v2430 = vsel %vm218, %v2376, 0.0
      %v2431 = vadd.f32 %v2429, %v2430
      %v2432 = vsel %vm218, %v2377, 0.0
      %v2433 = vadd.f32 %v2431, %v2432
      %v2434 = vsel %vm218, %v2378, 0.0
      %v2435 = vadd.f32 %v2433, %v2434
      %v2436 = vsel %vm218, %v2379, 0.0
      %v2437 = vadd.f32 %v2435, %v2436
      %v2438 = vsel %vm218, %v2380, 0.0
      %v2439 = vadd.f32 %v2437, %v2438
      %v2440 = vsel %vm218, %v2381, 0.0
      %v2441 = vadd.f32 %v2439, %v2440
      %v2442 = vsel %vm218, %v2382, 0.0
      %v2443 = vadd.f32 %v2441, %v2442
      %v2444 = vsel %vm218, %v2383, 0.0
      %v2445 = vadd.f32 %v2443, %v2444
      %v2446 = vsel %vm218, %v2384, 0.0
      %v2447 = vadd.f32 %v2445, %v2446
      %v2448 = vrot.slane %v2447, 4
      %v2449 = vadd.f32 %v2447, %v2448
      %v2450 = vrot.slane %v2449, 2
      %v2451 = vadd.f32 %v2449, %v2450
      %v2452 = vrot.slane %v2451, 1
      %v2453 = vadd.f32 %v2451, %v2452
      %v2454 = vmul.f32 %v2453, %v2351
      %v2455 = vmul.f32 %v2352, %v2352
      %v2456 = vsub.f32 %v2454, %v2455
      %v2457 = vsub.f32 %v2197, %v2352
      %v2458 = vsub.f32 %v2199, %v2352
      %v2459 = vsub.f32 %v2202, %v2352
      %v2460 = vsub.f32 %v2204, %v2352
      %v2461 = vsub.f32 %v2207, %v2352
      %v2462 = vsub.f32 %v2209, %v2352
      %v2463 = vsub.f32 %v2212, %v2352
      %v2464 = vsub.f32 %v2214, %v2352
      %v2465 = vsub.f32 %v2217, %v2352
      %v2466 = vsub.f32 %v2219, %v2352
      %v2467 = vsub.f32 %v2222, %v2352
      %v2468 = vsub.f32 %v2224, %v2352
      %v2469 = vsub.f32 %v2227, %v2352
      %v2470 = vsub.f32 %v2229, %v2352
      %v2471 = vsub.f32 %v2232, %v2352
      %v2472 = vsub.f32 %v2234, %v2352
      %v2473 = vsub.f32 %v2237, %v2352
      %v2474 = vsub.f32 %v2239, %v2352
      %v2475 = vsub.f32 %v2242, %v2352
      %v2476 = vsub.f32 %v2244, %v2352
      %v2477 = vsub.f32 %v2247, %v2352
      %v2478 = vsub.f32 %v2249, %v2352
      %v2479 = vsub.f32 %v2252, %v2352
      %v2480 = vsub.f32 %v2254, %v2352
      %v2481 = vsub.f32 %v2257, %v2352
      %v2482 = vsub.f32 %v2259, %v2352
      %v2483 = vsub.f32 %v2262, %v2352
      %v2484 = vsub.f32 %v2264, %v2352
      %v2485 = vsub.f32 %v2267, %v2352
      %v2486 = vsub.f32 %v2269, %v2352
      %v2487 = vsub.f32 %v2272, %v2352
      %v2488 = vsub.f32 %v2274, %v2352
      %v2489 = vadd.f32 %v2456, 1e-05
      %v2490 = vrsqrt.pop %v2489
      %v2491 = vmul.f32 %v2490, %v2489
      %v2492 = vmul.f32 %v2491, %v2490
      %v2493 = vmul.f32 0.5, %v2492
      %v2494 = vsub.f32 1.5, %v2493
      %v2495 = vmul.f32 %v2490, %v2494
      %vm2496 = vweird.f32 %v2489
      %vm2497 = vweird.f32 %v2490
      %vm2498 = vmor %vm2496, %vm2497
      %v2499 = vsel %vm2498, %v2490, %v2495
      %v2500 = vmul.f32 %v2457, %v2499
      %v2501 = vmul.f32 %v2458, %v2499
      %v2502 = vmul.f32 %v2459, %v2499
      %v2503 = vmul.f32 %v2460, %v2499
      %v2504 = vmul.f32 %v2461, %v2499
      %v2505 = vmul.f32 %v2462, %v2499
      %v2506 = vmul.f32 %v2463, %v2499
      %v2507 = vmul.f32 %v2464, %v2499
      %v2508 = vmul.f32 %v2465, %v2499
      %v2509 = vmul.f32 %v2466, %v2499
      %v2510 = vmul.f32 %v2467, %v2499
      %v2511 = vmul.f32 %v2468, %v2499
      %v2512 = vmul.f32 %v2469, %v2499
      %v2513 = vmul.f32 %v2470, %v2499
      %v2514 = vmul.f32 %v2471, %v2499
      %v2515 = vmul.f32 %v2472, %v2499
      %v2516 = vmul.f32 %v2473, %v2499
      %v2517 = vmul.f32 %v2474, %v2499
      %v2518 = vmul.f32 %v2475, %v2499
      %v2519 = vmul.f32 %v2476, %v2499
      %v2520 = vmul.f32 %v2477, %v2499
      %v2521 = vmul.f32 %v2478, %v2499
      %v2522 = vmul.f32 %v2479, %v2499
      %v2523 = vmul.f32 %v2480, %v2499
      %v2524 = vmul.f32 %v2481, %v2499
      %v2525 = vmul.f32 %v2482, %v2499
      %v2526 = vmul.f32 %v2483, %v2499
      %v2527 = vmul.f32 %v2484, %v2499
      %v2528 = vmul.f32 %v2485, %v2499
      %v2529 = vmul.f32 %v2486, %v2499
      %v2530 = vmul.f32 %v2487, %v2499
      %v2531 = vmul.f32 %v2488, %v2499
      %vm2532 = vcmp.ge.f32.partialorder %v2500, 0.0
      %vm2533 = vcmp.ge.f32.partialorder %v2501, 0.0
      %vm2534 = vcmp.ge.f32.partialorder %v2502, 0.0
      %vm2535 = vcmp.ge.f32.partialorder %v2503, 0.0
      %vm2536 = vcmp.ge.f32.partialorder %v2504, 0.0
      %vm2537 = vcmp.ge.f32.partialorder %v2505, 0.0
      %vm2538 = vcmp.ge.f32.partialorder %v2506, 0.0
      %vm2539 = vcmp.ge.f32.partialorder %v2507, 0.0
      %vm2540 = vcmp.ge.f32.partialorder %v2508, 0.0
      %vm2541 = vcmp.ge.f32.partialorder %v2509, 0.0
      %vm2542 = vcmp.ge.f32.partialorder %v2510, 0.0
      %vm2543 = vcmp.ge.f32.partialorder %v2511, 0.0
      %vm2544 = vcmp.ge.f32.partialorder %v2512, 0.0
      %vm2545 = vcmp.ge.f32.partialorder %v2513, 0.0
      %vm2546 = vcmp.ge.f32.partialorder %v2514, 0.0
      %vm2547 = vcmp.ge.f32.partialorder %v2515, 0.0
      %vm2548 = vcmp.ge.f32.partialorder %v2516, 0.0
      %vm2549 = vcmp.ge.f32.partialorder %v2517, 0.0
      %vm2550 = vcmp.ge.f32.partialorder %v2518, 0.0
      %vm2551 = vcmp.ge.f32.partialorder %v2519, 0.0
      %vm2552 = vcmp.ge.f32.partialorder %v2520, 0.0
      %vm2553 = vcmp.ge.f32.partialorder %v2521, 0.0
      %vm2554 = vcmp.ge.f32.partialorder %v2522, 0.0
      %vm2555 = vcmp.ge.f32.partialorder %v2523, 0.0
      %vm2556 = vcmp.ge.f32.partialorder %v2524, 0.0
      %vm2557 = vcmp.ge.f32.partialorder %v2525, 0.0
      %vm2558 = vcmp.ge.f32.partialorder %v2526, 0.0
      %vm2559 = vcmp.ge.f32.partialorder %v2527, 0.0
      %vm2560 = vcmp.ge.f32.partialorder %v2528, 0.0
      %vm2561 = vcmp.ge.f32.partialorder %v2529, 0.0
      %vm2562 = vcmp.ge.f32.partialorder %v2530, 0.0
      %vm2563 = vcmp.ge.f32.partialorder %v2531, 0.0
      %v2564 = vmul.f32 %v2500, 0.01
      %v2565 = vmul.f32 %v2501, 0.01
      %v2566 = vmul.f32 %v2502, 0.01
      %v2567 = vmul.f32 %v2503, 0.01
      %v2568 = vmul.f32 %v2504, 0.01
      %v2569 = vmul.f32 %v2505, 0.01
      %v2570 = vmul.f32 %v2506, 0.01
      %v2571 = vmul.f32 %v2507, 0.01
      %v2572 = vmul.f32 %v2508, 0.01
      %v2573 = vmul.f32 %v2509, 0.01
      %v2574 = vmul.f32 %v2510, 0.01
      %v2575 = vmul.f32 %v2511, 0.01
      %v2576 = vmul.f32 %v2512, 0.01
      %v2577 = vmul.f32 %v2513, 0.01
      %v2578 = vmul.f32 %v2514, 0.01
      %v2579 = vmul.f32 %v2515, 0.01
      %v2580 = vmul.f32 %v2516, 0.01
      %v2581 = vmul.f32 %v2517, 0.01
      %v2582 = vmul.f32 %v2518, 0.01
      %v2583 = vmul.f32 %v2519, 0.01
      %v2584 = vmul.f32 %v2520, 0.01
      %v2585 = vmul.f32 %v2521, 0.01
      %v2586 = vmul.f32 %v2522, 0.01
      %v2587 = vmul.f32 %v2523, 0.01
      %v2588 = vmul.f32 %v2524, 0.01
      %v2589 = vmul.f32 %v2525, 0.01
      %v2590 = vmul.f32 %v2526, 0.01
      %v2591 = vmul.f32 %v2527, 0.01
      %v2592 = vmul.f32 %v2528, 0.01
      %v2593 = vmul.f32 %v2529, 0.01
      %v2594 = vmul.f32 %v2530, 0.01
      %v2595 = vmul.f32 %v2531, 0.01
      %v2596 = vsel %vm2532, %v2500, %v2564
      %v2597 = vsel %vm2533, %v2501, %v2565
      %v2598 = vsel %vm2534, %v2502, %v2566
      %v2599 = vsel %vm2535, %v2503, %v2567
      %v2600 = vsel %vm2536, %v2504, %v2568
      %v2601 = vsel %vm2537, %v2505, %v2569
      %v2602 = vsel %vm2538, %v2506, %v2570
      %v2603 = vsel %vm2539, %v2507, %v2571
      %v2604 = vsel %vm2540, %v2508, %v2572
      %v2605 = vsel %vm2541, %v2509, %v2573
      %v2606 = vsel %vm2542, %v2510, %v2574
      %v2607 = vsel %vm2543, %v2511, %v2575
      %v2608 = vsel %vm2544, %v2512, %v2576
      %v2609 = vsel %vm2545, %v2513, %v2577
      %v2610 = vsel %vm2546, %v2514, %v2578
      %v2611 = vsel %vm2547, %v2515, %v2579
      %v2612 = vsel %vm2548, %v2516, %v2580
      %v2613 = vsel %vm2549, %v2517, %v2581
      %v2614 = vsel %vm2550, %v2518, %v2582
      %v2615 = vsel %vm2551, %v2519, %v2583
      %v2616 = vsel %vm2552, %v2520, %v2584
      %v2617 = vsel %vm2553, %v2521, %v2585
      %v2618 = vsel %vm2554, %v2522, %v2586
      %v2619 = vsel %vm2555, %v2523, %v2587
      %v2620 = vsel %vm2556, %v2524, %v2588
      %v2621 = vsel %vm2557, %v2525, %v2589
      %v2622 = vsel %vm2558, %v2526, %v2590
      %v2623 = vsel %vm2559, %v2527, %v2591
      %v2624 = vsel %vm2560, %v2528, %v2592
      %v2625 = vsel %vm2561, %v2529, %v2593
      %v2626 = vsel %vm2562, %v2530, %v2594
      %v2627 = vsel %vm2563, %v2531, %v2595
      %s2628 = scalar_lea.vmem [#allocation3], 24
      %2629 = vst.msk [vmem:[%s2628 + $0x1] sm:$0xff] %vm218, %v2596
      %2630 = vst.msk [vmem:[%s2628 + $0x9] sm:$0xff] %vm218, %v2597
      %2631 = vst.msk [vmem:[%s2628 + $0x19] sm:$0xff] %vm218, %v2598
      %2632 = vst.msk [vmem:[%s2628 + $0x21] sm:$0xff] %vm218, %v2599
      %2633 = vst.msk [vmem:[%s2628 + $0x31] sm:$0xff] %vm218, %v2600
      %2634 = vst.msk [vmem:[%s2628 + $0x39] sm:$0xff] %vm218, %v2601
      %2635 = vst.msk [vmem:[%s2628 + $0x49] sm:$0xff] %vm218, %v2602
      %2636 = vst.msk [vmem:[%s2628 + $0x51] sm:$0xff] %vm218, %v2603
      %2637 = vst.msk [vmem:[%s2628 + $0x61] sm:$0xff] %vm218, %v2604
      %2638 = vst.msk [vmem:[%s2628 + $0x69] sm:$0xff] %vm218, %v2605
      %2639 = vst.msk [vmem:[%s2628 + $0x79] sm:$0xff] %vm218, %v2606
      %2640 = vst.msk [vmem:[%s2628 + $0x81] sm:$0xff] %vm218, %v2607
      %2641 = vst.msk [vmem:[%s2628 + $0x91] sm:$0xff] %vm218, %v2608
      %2642 = vst.msk [vmem:[%s2628 + $0x99] sm:$0xff] %vm218, %v2609
      %2643 = vst.msk [vmem:[%s2628 + $0xa9] sm:$0xff] %vm218, %v2610
      %2644 = vst.msk [vmem:[%s2628 + $0xb1] sm:$0xff] %vm218, %v2611
      %2645 = vst.msk [vmem:[%s2628 + $0xc1] sm:$0xff] %vm218, %v2612
      %2646 = vst.msk [vmem:[%s2628 + $0xc9] sm:$0xff] %vm218, %v2613
      %2647 = vst.msk [vmem:[%s2628 + $0xd9] sm:$0xff] %vm218, %v2614
      %2648 = vst.msk [vmem:[%s2628 + $0xe1] sm:$0xff] %vm218, %v2615
      %2649 = vst.msk [vmem:[%s2628 + $0xf1] sm:$0xff] %vm218, %v2616
      %2650 = vst.msk [vmem:[%s2628 + $0xf9] sm:$0xff] %vm218, %v2617
      %2651 = vst.msk [vmem:[%s2628 + $0x109] sm:$0xff] %vm218, %v2618
      %2652 = vst.msk [vmem:[%s2628 + $0x111] sm:$0xff] %vm218, %v2619
      %2653 = vst.msk [vmem:[%s2628 + $0x121] sm:$0xff] %vm218, %v2620
      %2654 = vst.msk [vmem:[%s2628 + $0x129] sm:$0xff] %vm218, %v2621
      %2655 = vst.msk [vmem:[%s2628 + $0x139] sm:$0xff] %vm218, %v2622
      %2656 = vst.msk [vmem:[%s2628 + $0x141] sm:$0xff] %vm218, %v2623
      %2657 = vst.msk [vmem:[%s2628 + $0x151] sm:$0xff] %vm218, %v2624
      %2658 = vst.msk [vmem:[%s2628 + $0x159] sm:$0xff] %vm218, %v2625
      %2659 = vst.msk [vmem:[%s2628 + $0x169] sm:$0xff] %vm218, %v2626
      %2660 = vst.msk [vmem:[%s2628 + $0x171] sm:$0xff] %vm218, %v2627
      %v2661 = vld [vmem:[#allocation3] sm:$0xff]
      %v2662 = vld [vmem:[#allocation3 + $0x8] sm:$0xff]
      %v2663 = vld [vmem:[#allocation3 + $0x18] sm:$0xff]
      %v2664 = vld [vmem:[#allocation3 + $0x20] sm:$0xff]
      %v2665 = vld [vmem:[#allocation3 + $0x30] sm:$0xff]
      %v2666 = vld [vmem:[#allocation3 + $0x38] sm:$0xff]
      %v2667 = vld [vmem:[#allocation3 + $0x48] sm:$0xff]
      %v2668 = vld [vmem:[#allocation3 + $0x50] sm:$0xff]
      %v2669 = vld [vmem:[#allocation3 + $0x60] sm:$0xff]
      %v2670 = vld [vmem:[#allocation3 + $0x68] sm:$0xff]
      %v2671 = vld [vmem:[#allocation3 + $0x78] sm:$0xff]
      %v2672 = vld [vmem:[#allocation3 + $0x80] sm:$0xff]
      %v2673 = vld [vmem:[#allocation3 + $0x90] sm:$0xff]
      %v2674 = vld [vmem:[#allocation3 + $0x98] sm:$0xff]
      %v2675 = vld [vmem:[#allocation3 + $0xa8] sm:$0xff]
      %v2676 = vld [vmem:[#allocation3 + $0xb0] sm:$0xff]
      %v2677 = vld [vmem:[#allocation3 + $0xc0] sm:$0xff]
      %v2678 = vld [vmem:[#allocation3 + $0xc8] sm:$0xff]
      %v2679 = vld [vmem:[#allocation3 + $0xd8] sm:$0xff]
      %v2680 = vld [vmem:[#allocation3 + $0xe0] sm:$0xff]
      %v2681 = vld [vmem:[#allocation3 + $0xf0] sm:$0xff]
      %v2682 = vld [vmem:[#allocation3 + $0xf8] sm:$0xff]
      %v2683 = vld [vmem:[#allocation3 + $0x108] sm:$0xff]
      %v2684 = vld [vmem:[#allocation3 + $0x110] sm:$0xff]
      %v2685 = vld [vmem:[#allocation3 + $0x120] sm:$0xff]
      %v2686 = vld [vmem:[#allocation3 + $0x128] sm:$0xff]
      %v2687 = vld [vmem:[#allocation3 + $0x138] sm:$0xff]
      %v2688 = vld [vmem:[#allocation3 + $0x140] sm:$0xff]
      %v2689 = vld [vmem:[#allocation3 + $0x150] sm:$0xff]
      %v2690 = vld [vmem:[#allocation3 + $0x158] sm:$0xff]
      %v2691 = vld [vmem:[#allocation3 + $0x168] sm:$0xff]
      %v2692 = vld [vmem:[#allocation3 + $0x170] sm:$0xff]
      %2693 = vst.msk [vmem:[#allocation5] sm:$0xff] %vm218, %v2661
      %2694 = vst.msk [vmem:[#allocation5 + $0x8] sm:$0xff] %vm218, %v2662
      %2695 = vst.msk [vmem:[#allocation5 + $0x10] sm:$0xff] %vm218, %v2663
      %2696 = vst.msk [vmem:[#allocation5 + $0x18] sm:$0xff] %vm218, %v2664
      %2697 = vst.msk [vmem:[#allocation5 + $0x20] sm:$0xff] %vm218, %v2665
      %2698 = vst.msk [vmem:[#allocation5 + $0x28] sm:$0xff] %vm218, %v2666
      %2699 = vst.msk [vmem:[#allocation5 + $0x30] sm:$0xff] %vm218, %v2667
      %2700 = vst.msk [vmem:[#allocation5 + $0x38] sm:$0xff] %vm218, %v2668
      %2701 = vst.msk [vmem:[#allocation5 + $0x40] sm:$0xff] %vm218, %v2669
      %2702 = vst.msk [vmem:[#allocation5 + $0x48] sm:$0xff] %vm218, %v2670
      %2703 = vst.msk [vmem:[#allocation5 + $0x50] sm:$0xff] %vm218, %v2671
      %2704 = vst.msk [vmem:[#allocation5 + $0x58] sm:$0xff] %vm218, %v2672
      %2705 = vst.msk [vmem:[#allocation5 + $0x60] sm:$0xff] %vm218, %v2673
      %2706 = vst.msk [vmem:[#allocation5 + $0x68] sm:$0xff] %vm218, %v2674
      %2707 = vst.msk [vmem:[#allocation5 + $0x70] sm:$0xff] %vm218, %v2675
      %2708 = vst.msk [vmem:[#allocation5 + $0x78] sm:$0xff] %vm218, %v2676
      %2709 = vst.msk [vmem:[#allocation5 + $0x80] sm:$0xff] %vm218, %v2677
      %2710 = vst.msk [vmem:[#allocation5 + $0x88] sm:$0xff] %vm218, %v2678
      %2711 = vst.msk [vmem:[#allocation5 + $0x90] sm:$0xff] %vm218, %v2679
      %2712 = vst.msk [vmem:[#allocation5 + $0x98] sm:$0xff] %vm218, %v2680
      %2713 = vst.msk [vmem:[#allocation5 + $0xa0] sm:$0xff] %vm218, %v2681
      %2714 = vst.msk [vmem:[#allocation5 + $0xa8] sm:$0xff] %vm218, %v2682
      %2715 = vst.msk [vmem:[#allocation5 + $0xb0] sm:$0xff] %vm218, %v2683
      %2716 = vst.msk [vmem:[#allocation5 + $0xb8] sm:$0xff] %vm218, %v2684
      %2717 = vst.msk [vmem:[#allocation5 + $0xc0] sm:$0xff] %vm218, %v2685
      %2718 = vst.msk [vmem:[#allocation5 + $0xc8] sm:$0xff] %vm218, %v2686
      %2719 = vst.msk [vmem:[#allocation5 + $0xd0] sm:$0xff] %vm218, %v2687
      %2720 = vst.msk [vmem:[#allocation5 + $0xd8] sm:$0xff] %vm218, %v2688
      %2721 = vst.msk [vmem:[#allocation5 + $0xe0] sm:$0xff] %vm218, %v2689
      %2722 = vst.msk [vmem:[#allocation5 + $0xe8] sm:$0xff] %vm218, %v2690
      %2723 = vst.msk [vmem:[#allocation5 + $0xf0] sm:$0xff] %vm218, %v2691
      %2724 = vst.msk [vmem:[#allocation5 + $0xf8] sm:$0xff] %vm218, %v2692
      %v2725 = vld [vmem:[#allocation3 + $0x1] sm:$0xff]
      %v2726 = vld [vmem:[#allocation3 + $0x9] sm:$0xff]
      %v2727 = vld [vmem:[#allocation3 + $0x19] sm:$0xff]
      %v2728 = vld [vmem:[#allocation3 + $0x21] sm:$0xff]
      %v2729 = vld [vmem:[#allocation3 + $0x31] sm:$0xff]
      %v2730 = vld [vmem:[#allocation3 + $0x39] sm:$0xff]
      %v2731 = vld [vmem:[#allocation3 + $0x49] sm:$0xff]
      %v2732 = vld [vmem:[#allocation3 + $0x51] sm:$0xff]
      %v2733 = vld [vmem:[#allocation3 + $0x61] sm:$0xff]
      %v2734 = vld [vmem:[#allocation3 + $0x69] sm:$0xff]
      %v2735 = vld [vmem:[#allocation3 + $0x79] sm:$0xff]
      %v2736 = vld [vmem:[#allocation3 + $0x81] sm:$0xff]
      %v2737 = vld [vmem:[#allocation3 + $0x91] sm:$0xff]
      %v2738 = vld [vmem:[#allocation3 + $0x99] sm:$0xff]
      %v2739 = vld [vmem:[#allocation3 + $0xa9] sm:$0xff]
      %v2740 = vld [vmem:[#allocation3 + $0xb1] sm:$0xff]
      %v2741 = vld [vmem:[#allocation3 + $0xc1] sm:$0xff]
      %v2742 = vld [vmem:[#allocation3 + $0xc9] sm:$0xff]
      %v2743 = vld [vmem:[#allocation3 + $0xd9] sm:$0xff]
      %v2744 = vld [vmem:[#allocation3 + $0xe1] sm:$0xff]
      %v2745 = vld [vmem:[#allocation3 + $0xf1] sm:$0xff]
      %v2746 = vld [vmem:[#allocation3 + $0xf9] sm:$0xff]
      %v2747 = vld [vmem:[#allocation3 + $0x109] sm:$0xff]
      %v2748 = vld [vmem:[#allocation3 + $0x111] sm:$0xff]
      %v2749 = vld [vmem:[#allocation3 + $0x121] sm:$0xff]
      %v2750 = vld [vmem:[#allocation3 + $0x129] sm:$0xff]
      %v2751 = vld [vmem:[#allocation3 + $0x139] sm:$0xff]
      %v2752 = vld [vmem:[#allocation3 + $0x141] sm:$0xff]
      %v2753 = vld [vmem:[#allocation3 + $0x151] sm:$0xff]
      %v2754 = vld [vmem:[#allocation3 + $0x159] sm:$0xff]
      %v2755 = vld [vmem:[#allocation3 + $0x169] sm:$0xff]
      %v2756 = vld [vmem:[#allocation3 + $0x171] sm:$0xff]
      %2789 = vrot.lane.b32.xlu0 %v2725, 8
      %v2790 = vpop.permute.xlu0 %2789
      %2791 = vrot.lane.b32.xlu0 %v2726, 8
      %v2792 = vpop.permute.xlu0 %2791
      %2793 = vrot.lane.b32.xlu0 %v2727, 8
      %v2794 = vpop.permute.xlu0 %2793
      %2795 = vrot.lane.b32.xlu0 %v2728, 8
      %v2796 = vpop.permute.xlu0 %2795
      %2797 = vrot.lane.b32.xlu0 %v2729, 8
      %v2798 = vpop.permute.xlu0 %2797
      %2799 = vrot.lane.b32.xlu0 %v2730, 8
      %v2800 = vpop.permute.xlu0 %2799
      %2801 = vrot.lane.b32.xlu0 %v2731, 8
      %v2802 = vpop.permute.xlu0 %2801
      %2803 = vrot.lane.b32.xlu0 %v2732, 8
      %v2804 = vpop.permute.xlu0 %2803
      %2805 = vrot.lane.b32.xlu0 %v2733, 8
      %v2806 = vpop.permute.xlu0 %2805
      %2807 = vrot.lane.b32.xlu0 %v2734, 8
      %v2808 = vpop.permute.xlu0 %2807
      %2809 = vrot.lane.b32.xlu0 %v2735, 8
      %v2810 = vpop.permute.xlu0 %2809
      %2811 = vrot.lane.b32.xlu0 %v2736, 8
      %v2812 = vpop.permute.xlu0 %2811
      %2813 = vrot.lane.b32.xlu0 %v2737, 8
      %v2814 = vpop.permute.xlu0 %2813
      %2815 = vrot.lane.b32.xlu0 %v2738, 8
      %v2816 = vpop.permute.xlu0 %2815
      %2817 = vrot.lane.b32.xlu0 %v2739, 8
      %v2818 = vpop.permute.xlu0 %2817
      %2819 = vrot.lane.b32.xlu0 %v2740, 8
      %v2820 = vpop.permute.xlu0 %2819
      %2821 = vrot.lane.b32.xlu0 %v2741, 8
      %v2822 = vpop.permute.xlu0 %2821
      %2823 = vrot.lane.b32.xlu0 %v2742, 8
      %v2824 = vpop.permute.xlu0 %2823
      %2825 = vrot.lane.b32.xlu0 %v2743, 8
      %v2826 = vpop.permute.xlu0 %2825
      %2827 = vrot.lane.b32.xlu0 %v2744, 8
      %v2828 = vpop.permute.xlu0 %2827
      %2829 = vrot.lane.b32.xlu0 %v2745, 8
      %v2830 = vpop.permute.xlu0 %2829
      %2831 = vrot.lane.b32.xlu0 %v2746, 8
      %v2832 = vpop.permute.xlu0 %2831
      %2833 = vrot.lane.b32.xlu0 %v2747, 8
      %v2834 = vpop.permute.xlu0 %2833
      %2835 = vrot.lane.b32.xlu0 %v2748, 8
      %v2836 = vpop.permute.xlu0 %2835
      %2837 = vrot.lane.b32.xlu0 %v2749, 8
      %v2838 = vpop.permute.xlu0 %2837
      %2839 = vrot.lane.b32.xlu0 %v2750, 8
      %v2840 = vpop.permute.xlu0 %2839
      %2841 = vrot.lane.b32.xlu0 %v2751, 8
      %v2842 = vpop.permute.xlu0 %2841
      %2843 = vrot.lane.b32.xlu0 %v2752, 8
      %v2844 = vpop.permute.xlu0 %2843
      %2845 = vrot.lane.b32.xlu0 %v2753, 8
      %v2846 = vpop.permute.xlu0 %2845
      %2847 = vrot.lane.b32.xlu0 %v2754, 8
      %v2848 = vpop.permute.xlu0 %2847
      %2849 = vrot.lane.b32.xlu0 %v2755, 8
      %v2850 = vpop.permute.xlu0 %2849
      %2851 = vrot.lane.b32.xlu0 %v2756, 8
      %v2852 = vpop.permute.xlu0 %2851
      %vm2885 = vcmask 130112
      %2886 = vst.msk [vmem:[#allocation5] sm:$0xff] %vm2885, %v2790
      %2887 = vst.msk [vmem:[#allocation5 + $0x8] sm:$0xff] %vm2885, %v2792
      %2888 = vst.msk [vmem:[#allocation5 + $0x10] sm:$0xff] %vm2885, %v2794
      %2889 = vst.msk [vmem:[#allocation5 + $0x18] sm:$0xff] %vm2885, %v2796
      %2890 = vst.msk [vmem:[#allocation5 + $0x20] sm:$0xff] %vm2885, %v2798
      %2891 = vst.msk [vmem:[#allocation5 + $0x28] sm:$0xff] %vm2885, %v2800
      %2892 = vst.msk [vmem:[#allocation5 + $0x30] sm:$0xff] %vm2885, %v2802
      %2893 = vst.msk [vmem:[#allocation5 + $0x38] sm:$0xff] %vm2885, %v2804
      %2894 = vst.msk [vmem:[#allocation5 + $0x40] sm:$0xff] %vm2885, %v2806
      %2895 = vst.msk [vmem:[#allocation5 + $0x48] sm:$0xff] %vm2885, %v2808
      %2896 = vst.msk [vmem:[#allocation5 + $0x50] sm:$0xff] %vm2885, %v2810
      %2897 = vst.msk [vmem:[#allocation5 + $0x58] sm:$0xff] %vm2885, %v2812
      %2898 = vst.msk [vmem:[#allocation5 + $0x60] sm:$0xff] %vm2885, %v2814
      %2899 = vst.msk [vmem:[#allocation5 + $0x68] sm:$0xff] %vm2885, %v2816
      %2900 = vst.msk [vmem:[#allocation5 + $0x70] sm:$0xff] %vm2885, %v2818
      %2901 = vst.msk [vmem:[#allocation5 + $0x78] sm:$0xff] %vm2885, %v2820
      %2902 = vst.msk [vmem:[#allocation5 + $0x80] sm:$0xff] %vm2885, %v2822
      %2903 = vst.msk [vmem:[#allocation5 + $0x88] sm:$0xff] %vm2885, %v2824
      %2904 = vst.msk [vmem:[#allocation5 + $0x90] sm:$0xff] %vm2885, %v2826
      %2905 = vst.msk [vmem:[#allocation5 + $0x98] sm:$0xff] %vm2885, %v2828
      %2906 = vst.msk [vmem:[#allocation5 + $0xa0] sm:$0xff] %vm2885, %v2830
      %2907 = vst.msk [vmem:[#allocation5 + $0xa8] sm:$0xff] %vm2885, %v2832
      %2908 = vst.msk [vmem:[#allocation5 + $0xb0] sm:$0xff] %vm2885, %v2834
      %2909 = vst.msk [vmem:[#allocation5 + $0xb8] sm:$0xff] %vm2885, %v2836
      %2910 = vst.msk [vmem:[#allocation5 + $0xc0] sm:$0xff] %vm2885, %v2838
      %2911 = vst.msk [vmem:[#allocation5 + $0xc8] sm:$0xff] %vm2885, %v2840
      %2912 = vst.msk [vmem:[#allocation5 + $0xd0] sm:$0xff] %vm2885, %v2842
      %2913 = vst.msk [vmem:[#allocation5 + $0xd8] sm:$0xff] %vm2885, %v2844
      %2914 = vst.msk [vmem:[#allocation5 + $0xe0] sm:$0xff] %vm2885, %v2846
      %2915 = vst.msk [vmem:[#allocation5 + $0xe8] sm:$0xff] %vm2885, %v2848
      %2916 = vst.msk [vmem:[#allocation5 + $0xf0] sm:$0xff] %vm2885, %v2850
      %2917 = vst.msk [vmem:[#allocation5 + $0xf8] sm:$0xff] %vm2885, %v2852
      %v2918 = vld [vmem:[#allocation3 + $0x2] sm:$0xff]
      %v2919 = vld [vmem:[#allocation3 + $0xa] sm:$0xff]
      %v2920 = vld [vmem:[#allocation3 + $0x1a] sm:$0xff]
      %v2921 = vld [vmem:[#allocation3 + $0x22] sm:$0xff]
      %v2922 = vld [vmem:[#allocation3 + $0x32] sm:$0xff]
      %v2923 = vld [vmem:[#allocation3 + $0x3a] sm:$0xff]
      %v2924 = vld [vmem:[#allocation3 + $0x4a] sm:$0xff]
      %v2925 = vld [vmem:[#allocation3 + $0x52] sm:$0xff]
      %v2926 = vld [vmem:[#allocation3 + $0x62] sm:$0xff]
      %v2927 = vld [vmem:[#allocation3 + $0x6a] sm:$0xff]
      %v2928 = vld [vmem:[#allocation3 + $0x7a] sm:$0xff]
      %v2929 = vld [vmem:[#allocation3 + $0x82] sm:$0xff]
      %v2930 = vld [vmem:[#allocation3 + $0x92] sm:$0xff]
      %v2931 = vld [vmem:[#allocation3 + $0x9a] sm:$0xff]
      %v2932 = vld [vmem:[#allocation3 + $0xaa] sm:$0xff]
      %v2933 = vld [vmem:[#allocation3 + $0xb2] sm:$0xff]
      %v2934 = vld [vmem:[#allocation3 + $0xc2] sm:$0xff]
      %v2935 = vld [vmem:[#allocation3 + $0xca] sm:$0xff]
      %v2936 = vld [vmem:[#allocation3 + $0xda] sm:$0xff]
      %v2937 = vld [vmem:[#allocation3 + $0xe2] sm:$0xff]
      %v2938 = vld [vmem:[#allocation3 + $0xf2] sm:$0xff]
      %v2939 = vld [vmem:[#allocation3 + $0xfa] sm:$0xff]
      %v2940 = vld [vmem:[#allocation3 + $0x10a] sm:$0xff]
      %v2941 = vld [vmem:[#allocation3 + $0x112] sm:$0xff]
      %v2942 = vld [vmem:[#allocation3 + $0x122] sm:$0xff]
      %v2943 = vld [vmem:[#allocation3 + $0x12a] sm:$0xff]
      %v2944 = vld [vmem:[#allocation3 + $0x13a] sm:$0xff]
      %v2945 = vld [vmem:[#allocation3 + $0x142] sm:$0xff]
      %v2946 = vld [vmem:[#allocation3 + $0x152] sm:$0xff]
      %v2947 = vld [vmem:[#allocation3 + $0x15a] sm:$0xff]
      %v2948 = vld [vmem:[#allocation3 + $0x16a] sm:$0xff]
      %v2949 = vld [vmem:[#allocation3 + $0x172] sm:$0xff]
      %2982 = vrot.lane.b32.xlu0 %v2918, 16
      %v2983 = vpop.permute.xlu0 %2982
      %2984 = vrot.lane.b32.xlu0 %v2919, 16
      %v2985 = vpop.permute.xlu0 %2984
      %2986 = vrot.lane.b32.xlu0 %v2920, 16
      %v2987 = vpop.permute.xlu0 %2986
      %2988 = vrot.lane.b32.xlu0 %v2921, 16
      %v2989 = vpop.permute.xlu0 %2988
      %2990 = vrot.lane.b32.xlu0 %v2922, 16
      %v2991 = vpop.permute.xlu0 %2990
      %2992 = vrot.lane.b32.xlu0 %v2923, 16
      %v2993 = vpop.permute.xlu0 %2992
      %2994 = vrot.lane.b32.xlu0 %v2924, 16
      %v2995 = vpop.permute.xlu0 %2994
      %2996 = vrot.lane.b32.xlu0 %v2925, 16
      %v2997 = vpop.permute.xlu0 %2996
      %2998 = vrot.lane.b32.xlu0 %v2926, 16
      %v2999 = vpop.permute.xlu0 %2998
      %3000 = vrot.lane.b32.xlu0 %v2927, 16
      %v3001 = vpop.permute.xlu0 %3000
      %3002 = vrot.lane.b32.xlu0 %v2928, 16
      %v3003 = vpop.permute.xlu0 %3002
      %3004 = vrot.lane.b32.xlu0 %v2929, 16
      %v3005 = vpop.permute.xlu0 %3004
      %3006 = vrot.lane.b32.xlu0 %v2930, 16
      %v3007 = vpop.permute.xlu0 %3006
      %3008 = vrot.lane.b32.xlu0 %v2931, 16
      %v3009 = vpop.permute.xlu0 %3008
      %3010 = vrot.lane.b32.xlu0 %v2932, 16
      %v3011 = vpop.permute.xlu0 %3010
      %3012 = vrot.lane.b32.xlu0 %v2933, 16
      %v3013 = vpop.permute.xlu0 %3012
      %3014 = vrot.lane.b32.xlu0 %v2934, 16
      %v3015 = vpop.permute.xlu0 %3014
      %3016 = vrot.lane.b32.xlu0 %v2935, 16
      %v3017 = vpop.permute.xlu0 %3016
      %3018 = vrot.lane.b32.xlu0 %v2936, 16
      %v3019 = vpop.permute.xlu0 %3018
      %3020 = vrot.lane.b32.xlu0 %v2937, 16
      %v3021 = vpop.permute.xlu0 %3020
      %3022 = vrot.lane.b32.xlu0 %v2938, 16
      %v3023 = vpop.permute.xlu0 %3022
      %3024 = vrot.lane.b32.xlu0 %v2939, 16
      %v3025 = vpop.permute.xlu0 %3024
      %3026 = vrot.lane.b32.xlu0 %v2940, 16
      %v3027 = vpop.permute.xlu0 %3026
      %3028 = vrot.lane.b32.xlu0 %v2941, 16
      %v3029 = vpop.permute.xlu0 %3028
      %3030 = vrot.lane.b32.xlu0 %v2942, 16
      %v3031 = vpop.permute.xlu0 %3030
      %3032 = vrot.lane.b32.xlu0 %v2943, 16
      %v3033 = vpop.permute.xlu0 %3032
      %3034 = vrot.lane.b32.xlu0 %v2944, 16
      %v3035 = vpop.permute.xlu0 %3034
      %3036 = vrot.lane.b32.xlu0 %v2945, 16
      %v3037 = vpop.permute.xlu0 %3036
      %3038 = vrot.lane.b32.xlu0 %v2946, 16
      %v3039 = vpop.permute.xlu0 %3038
      %3040 = vrot.lane.b32.xlu0 %v2947, 16
      %v3041 = vpop.permute.xlu0 %3040
      %3042 = vrot.lane.b32.xlu0 %v2948, 16
      %v3043 = vpop.permute.xlu0 %3042
      %3044 = vrot.lane.b32.xlu0 %v2949, 16
      %v3045 = vpop.permute.xlu0 %3044
      %vm3078 = vcmask 195712
      %3079 = vst.msk [vmem:[#allocation5] sm:$0xff] %vm3078, %v2983
      %3080 = vst.msk [vmem:[#allocation5 + $0x8] sm:$0xff] %vm3078, %v2985
      %3081 = vst.msk [vmem:[#allocation5 + $0x10] sm:$0xff] %vm3078, %v2987
      %3082 = vst.msk [vmem:[#allocation5 + $0x18] sm:$0xff] %vm3078, %v2989
      %3083 = vst.msk [vmem:[#allocation5 + $0x20] sm:$0xff] %vm3078, %v2991
      %3084 = vst.msk [vmem:[#allocation5 + $0x28] sm:$0xff] %vm3078, %v2993
      %3085 = vst.msk [vmem:[#allocation5 + $0x30] sm:$0xff] %vm3078, %v2995
      %3086 = vst.msk [vmem:[#allocation5 + $0x38] sm:$0xff] %vm3078, %v2997
      %3087 = vst.msk [vmem:[#allocation5 + $0x40] sm:$0xff] %vm3078, %v2999
      %3088 = vst.msk [vmem:[#allocation5 + $0x48] sm:$0xff] %vm3078, %v3001
      %3089 = vst.msk [vmem:[#allocation5 + $0x50] sm:$0xff] %vm3078, %v3003
      %3090 = vst.msk [vmem:[#allocation5 + $0x58] sm:$0xff] %vm3078, %v3005
      %3091 = vst.msk [vmem:[#allocation5 + $0x60] sm:$0xff] %vm3078, %v3007
      %3092 = vst.msk [vmem:[#allocation5 + $0x68] sm:$0xff] %vm3078, %v3009
      %3093 = vst.msk [vmem:[#allocation5 + $0x70] sm:$0xff] %vm3078, %v3011
      %3094 = vst.msk [vmem:[#allocation5 + $0x78] sm:$0xff] %vm3078, %v3013
      %3095 = vst.msk [vmem:[#allocation5 + $0x80] sm:$0xff] %vm3078, %v3015
      %3096 = vst.msk [vmem:[#allocation5 + $0x88] sm:$0xff] %vm3078, %v3017
      %3097 = vst.msk [vmem:[#allocation5 + $0x90] sm:$0xff] %vm3078, %v3019
      %3098 = vst.msk [vmem:[#allocation5 + $0x98] sm:$0xff] %vm3078, %v3021
      %3099 = vst.msk [vmem:[#allocation5 + $0xa0] sm:$0xff] %vm3078, %v3023
      %3100 = vst.msk [vmem:[#allocation5 + $0xa8] sm:$0xff] %vm3078, %v3025
      %3101 = vst.msk [vmem:[#allocation5 + $0xb0] sm:$0xff] %vm3078, %v3027
      %3102 = vst.msk [vmem:[#allocation5 + $0xb8] sm:$0xff] %vm3078, %v3029
      %3103 = vst.msk [vmem:[#allocation5 + $0xc0] sm:$0xff] %vm3078, %v3031
      %3104 = vst.msk [vmem:[#allocation5 + $0xc8] sm:$0xff] %vm3078, %v3033
      %3105 = vst.msk [vmem:[#allocation5 + $0xd0] sm:$0xff] %vm3078, %v3035
      %3106 = vst.msk [vmem:[#allocation5 + $0xd8] sm:$0xff] %vm3078, %v3037
      %3107 = vst.msk [vmem:[#allocation5 + $0xe0] sm:$0xff] %vm3078, %v3039
      %3108 = vst.msk [vmem:[#allocation5 + $0xe8] sm:$0xff] %vm3078, %v3041
      %3109 = vst.msk [vmem:[#allocation5 + $0xf0] sm:$0xff] %vm3078, %v3043
      %3110 = vst.msk [vmem:[#allocation5 + $0xf8] sm:$0xff] %vm3078, %v3045
      %v3111 = vld [vmem:[%s2628] sm:$0xff]
      %v3112 = vld [vmem:[%s2628 + $0x8] sm:$0xff]
      %v3113 = vld [vmem:[%s2628 + $0x18] sm:$0xff]
      %v3114 = vld [vmem:[%s2628 + $0x20] sm:$0xff]
      %v3115 = vld [vmem:[%s2628 + $0x30] sm:$0xff]
      %v3116 = vld [vmem:[%s2628 + $0x38] sm:$0xff]
      %v3117 = vld [vmem:[%s2628 + $0x48] sm:$0xff]
      %v3118 = vld [vmem:[%s2628 + $0x50] sm:$0xff]
      %v3119 = vld [vmem:[%s2628 + $0x60] sm:$0xff]
      %v3120 = vld [vmem:[%s2628 + $0x68] sm:$0xff]
      %v3121 = vld [vmem:[%s2628 + $0x78] sm:$0xff]
      %v3122 = vld [vmem:[%s2628 + $0x80] sm:$0xff]
      %v3123 = vld [vmem:[%s2628 + $0x90] sm:$0xff]
      %v3124 = vld [vmem:[%s2628 + $0x98] sm:$0xff]
      %v3125 = vld [vmem:[%s2628 + $0xa8] sm:$0xff]
      %v3126 = vld [vmem:[%s2628 + $0xb0] sm:$0xff]
      %v3127 = vld [vmem:[%s2628 + $0xc0] sm:$0xff]
      %v3128 = vld [vmem:[%s2628 + $0xc8] sm:$0xff]
      %v3129 = vld [vmem:[%s2628 + $0xd8] sm:$0xff]
      %v3130 = vld [vmem:[%s2628 + $0xe0] sm:$0xff]
      %v3131 = vld [vmem:[%s2628 + $0xf0] sm:$0xff]
      %v3132 = vld [vmem:[%s2628 + $0xf8] sm:$0xff]
      %v3133 = vld [vmem:[%s2628 + $0x108] sm:$0xff]
      %v3134 = vld [vmem:[%s2628 + $0x110] sm:$0xff]
      %v3135 = vld [vmem:[%s2628 + $0x120] sm:$0xff]
      %v3136 = vld [vmem:[%s2628 + $0x128] sm:$0xff]
      %v3137 = vld [vmem:[%s2628 + $0x138] sm:$0xff]
      %v3138 = vld [vmem:[%s2628 + $0x140] sm:$0xff]
      %v3139 = vld [vmem:[%s2628 + $0x150] sm:$0xff]
      %v3140 = vld [vmem:[%s2628 + $0x158] sm:$0xff]
      %v3141 = vld [vmem:[%s2628 + $0x168] sm:$0xff]
      %v3142 = vld [vmem:[%s2628 + $0x170] sm:$0xff]
      %3175 = vrot.lane.b32.xlu0 %v3111, 24
      %v3176 = vpop.permute.xlu0 %3175
      %3177 = vrot.lane.b32.xlu0 %v3112, 24
      %v3178 = vpop.permute.xlu0 %3177
      %3179 = vrot.lane.b32.xlu0 %v3113, 24
      %v3180 = vpop.permute.xlu0 %3179
      %3181 = vrot.lane.b32.xlu0 %v3114, 24
      %v3182 = vpop.permute.xlu0 %3181
      %3183 = vrot.lane.b32.xlu0 %v3115, 24
      %v3184 = vpop.permute.xlu0 %3183
      %3185 = vrot.lane.b32.xlu0 %v3116, 24
      %v3186 = vpop.permute.xlu0 %3185
      %3187 = vrot.lane.b32.xlu0 %v3117, 24
      %v3188 = vpop.permute.xlu0 %3187
      %3189 = vrot.lane.b32.xlu0 %v3118, 24
      %v3190 = vpop.permute.xlu0 %3189
      %3191 = vrot.lane.b32.xlu0 %v3119, 24
      %v3192 = vpop.permute.xlu0 %3191
      %3193 = vrot.lane.b32.xlu0 %v3120, 24
      %v3194 = vpop.permute.xlu0 %3193
      %3195 = vrot.lane.b32.xlu0 %v3121, 24
      %v3196 = vpop.permute.xlu0 %3195
      %3197 = vrot.lane.b32.xlu0 %v3122, 24
      %v3198 = vpop.permute.xlu0 %3197
      %3199 = vrot.lane.b32.xlu0 %v3123, 24
      %v3200 = vpop.permute.xlu0 %3199
      %3201 = vrot.lane.b32.xlu0 %v3124, 24
      %v3202 = vpop.permute.xlu0 %3201
      %3203 = vrot.lane.b32.xlu0 %v3125, 24
      %v3204 = vpop.permute.xlu0 %3203
      %3205 = vrot.lane.b32.xlu0 %v3126, 24
      %v3206 = vpop.permute.xlu0 %3205
      %3207 = vrot.lane.b32.xlu0 %v3127, 24
      %v3208 = vpop.permute.xlu0 %3207
      %3209 = vrot.lane.b32.xlu0 %v3128, 24
      %v3210 = vpop.permute.xlu0 %3209
      %3211 = vrot.lane.b32.xlu0 %v3129, 24
      %v3212 = vpop.permute.xlu0 %3211
      %3213 = vrot.lane.b32.xlu0 %v3130, 24
      %v3214 = vpop.permute.xlu0 %3213
      %3215 = vrot.lane.b32.xlu0 %v3131, 24
      %v3216 = vpop.permute.xlu0 %3215
      %3217 = vrot.lane.b32.xlu0 %v3132, 24
      %v3218 = vpop.permute.xlu0 %3217
      %3219 = vrot.lane.b32.xlu0 %v3133, 24
      %v3220 = vpop.permute.xlu0 %3219
      %3221 = vrot.lane.b32.xlu0 %v3134, 24
      %v3222 = vpop.permute.xlu0 %3221
      %3223 = vrot.lane.b32.xlu0 %v3135, 24
      %v3224 = vpop.permute.xlu0 %3223
      %3225 = vrot.lane.b32.xlu0 %v3136, 24
      %v3226 = vpop.permute.xlu0 %3225
      %3227 = vrot.lane.b32.xlu0 %v3137, 24
      %v3228 = vpop.permute.xlu0 %3227
      %3229 = vrot.lane.b32.xlu0 %v3138, 24
      %v3230 = vpop.permute.xlu0 %3229
      %3231 = vrot.lane.b32.xlu0 %v3139, 24
      %v3232 = vpop.permute.xlu0 %3231
      %3233 = vrot.lane.b32.xlu0 %v3140, 24
      %v3234 = vpop.permute.xlu0 %3233
      %3235 = vrot.lane.b32.xlu0 %v3141, 24
      %v3236 = vpop.permute.xlu0 %3235
      %3237 = vrot.lane.b32.xlu0 %v3142, 24
      %v3238 = vpop.permute.xlu0 %3237
      %vm3271 = vcmask 261312
      %3272 = vst.msk [vmem:[#allocation5] sm:$0xff] %vm3271, %v3176
      %3273 = vst.msk [vmem:[#allocation5 + $0x8] sm:$0xff] %vm3271, %v3178
      %3274 = vst.msk [vmem:[#allocation5 + $0x10] sm:$0xff] %vm3271, %v3180
      %3275 = vst.msk [vmem:[#allocation5 + $0x18] sm:$0xff] %vm3271, %v3182
      %3276 = vst.msk [vmem:[#allocation5 + $0x20] sm:$0xff] %vm3271, %v3184
      %3277 = vst.msk [vmem:[#allocation5 + $0x28] sm:$0xff] %vm3271, %v3186
      %3278 = vst.msk [vmem:[#allocation5 + $0x30] sm:$0xff] %vm3271, %v3188
      %3279 = vst.msk [vmem:[#allocation5 + $0x38] sm:$0xff] %vm3271, %v3190
      %3280 = vst.msk [vmem:[#allocation5 + $0x40] sm:$0xff] %vm3271, %v3192
      %3281 = vst.msk [vmem:[#allocation5 + $0x48] sm:$0xff] %vm3271, %v3194
      %3282 = vst.msk [vmem:[#allocation5 + $0x50] sm:$0xff] %vm3271, %v3196
      %3283 = vst.msk [vmem:[#allocation5 + $0x58] sm:$0xff] %vm3271, %v3198
      %3284 = vst.msk [vmem:[#allocation5 + $0x60] sm:$0xff] %vm3271, %v3200
      %3285 = vst.msk [vmem:[#allocation5 + $0x68] sm:$0xff] %vm3271, %v3202
      %3286 = vst.msk [vmem:[#allocation5 + $0x70] sm:$0xff] %vm3271, %v3204
      %3287 = vst.msk [vmem:[#allocation5 + $0x78] sm:$0xff] %vm3271, %v3206
      %3288 = vst.msk [vmem:[#allocation5 + $0x80] sm:$0xff] %vm3271, %v3208
      %3289 = vst.msk [vmem:[#allocation5 + $0x88] sm:$0xff] %vm3271, %v3210
      %3290 = vst.msk [vmem:[#allocation5 + $0x90] sm:$0xff] %vm3271, %v3212
      %3291 = vst.msk [vmem:[#allocation5 + $0x98] sm:$0xff] %vm3271, %v3214
      %3292 = vst.msk [vmem:[#allocation5 + $0xa0] sm:$0xff] %vm3271, %v3216
      %3293 = vst.msk [vmem:[#allocation5 + $0xa8] sm:$0xff] %vm3271, %v3218
      %3294 = vst.msk [vmem:[#allocation5 + $0xb0] sm:$0xff] %vm3271, %v3220
      %3295 = vst.msk [vmem:[#allocation5 + $0xb8] sm:$0xff] %vm3271, %v3222
      %3296 = vst.msk [vmem:[#allocation5 + $0xc0] sm:$0xff] %vm3271, %v3224
      %3297 = vst.msk [vmem:[#allocation5 + $0xc8] sm:$0xff] %vm3271, %v3226
      %3298 = vst.msk [vmem:[#allocation5 + $0xd0] sm:$0xff] %vm3271, %v3228
      %3299 = vst.msk [vmem:[#allocation5 + $0xd8] sm:$0xff] %vm3271, %v3230
      %3300 = vst.msk [vmem:[#allocation5 + $0xe0] sm:$0xff] %vm3271, %v3232
      %3301 = vst.msk [vmem:[#allocation5 + $0xe8] sm:$0xff] %vm3271, %v3234
      %3302 = vst.msk [vmem:[#allocation5 + $0xf0] sm:$0xff] %vm3271, %v3236
      %3303 = vst.msk [vmem:[#allocation5 + $0xf8] sm:$0xff] %vm3271, %v3238
      %v3304 = vld [vmem:[%s2628 + $0x1] sm:$0xff]
      %v3305 = vld [vmem:[%s2628 + $0x9] sm:$0xff]
      %v3306 = vld [vmem:[%s2628 + $0x19] sm:$0xff]
      %v3307 = vld [vmem:[%s2628 + $0x21] sm:$0xff]
      %v3308 = vld [vmem:[%s2628 + $0x31] sm:$0xff]
      %v3309 = vld [vmem:[%s2628 + $0x39] sm:$0xff]
      %v3310 = vld [vmem:[%s2628 + $0x49] sm:$0xff]
      %v3311 = vld [vmem:[%s2628 + $0x51] sm:$0xff]
      %v3312 = vld [vmem:[%s2628 + $0x61] sm:$0xff]
      %v3313 = vld [vmem:[%s2628 + $0x69] sm:$0xff]
      %v3314 = vld [vmem:[%s2628 + $0x79] sm:$0xff]
      %v3315 = vld [vmem:[%s2628 + $0x81] sm:$0xff]
      %v3316 = vld [vmem:[%s2628 + $0x91] sm:$0xff]
      %v3317 = vld [vmem:[%s2628 + $0x99] sm:$0xff]
      %v3318 = vld [vmem:[%s2628 + $0xa9] sm:$0xff]
      %v3319 = vld [vmem:[%s2628 + $0xb1] sm:$0xff]
      %v3320 = vld [vmem:[%s2628 + $0xc1] sm:$0xff]
      %v3321 = vld [vmem:[%s2628 + $0xc9] sm:$0xff]
      %v3322 = vld [vmem:[%s2628 + $0xd9] sm:$0xff]
      %v3323 = vld [vmem:[%s2628 + $0xe1] sm:$0xff]
      %v3324 = vld [vmem:[%s2628 + $0xf1] sm:$0xff]
      %v3325 = vld [vmem:[%s2628 + $0xf9] sm:$0xff]
      %v3326 = vld [vmem:[%s2628 + $0x109] sm:$0xff]
      %v3327 = vld [vmem:[%s2628 + $0x111] sm:$0xff]
      %v3328 = vld [vmem:[%s2628 + $0x121] sm:$0xff]
      %v3329 = vld [vmem:[%s2628 + $0x129] sm:$0xff]
      %v3330 = vld [vmem:[%s2628 + $0x139] sm:$0xff]
      %v3331 = vld [vmem:[%s2628 + $0x141] sm:$0xff]
      %v3332 = vld [vmem:[%s2628 + $0x151] sm:$0xff]
      %v3333 = vld [vmem:[%s2628 + $0x159] sm:$0xff]
      %v3334 = vld [vmem:[%s2628 + $0x169] sm:$0xff]
      %v3335 = vld [vmem:[%s2628 + $0x171] sm:$0xff]
      %3368 = vrot.lane.b32.xlu0 %v3304, 32
      %v3369 = vpop.permute.xlu0 %3368
      %3370 = vrot.lane.b32.xlu0 %v3305, 32
      %v3371 = vpop.permute.xlu0 %3370
      %3372 = vrot.lane.b32.xlu0 %v3306, 32
      %v3373 = vpop.permute.xlu0 %3372
      %3374 = vrot.lane.b32.xlu0 %v3307, 32
      %v3375 = vpop.permute.xlu0 %3374
      %3376 = vrot.lane.b32.xlu0 %v3308, 32
      %v3377 = vpop.permute.xlu0 %3376
      %3378 = vrot.lane.b32.xlu0 %v3309, 32
      %v3379 = vpop.permute.xlu0 %3378
      %3380 = vrot.lane.b32.xlu0 %v3310, 32
      %v3381 = vpop.permute.xlu0 %3380
      %3382 = vrot.lane.b32.xlu0 %v3311, 32
      %v3383 = vpop.permute.xlu0 %3382
      %3384 = vrot.lane.b32.xlu0 %v3312, 32
      %v3385 = vpop.permute.xlu0 %3384
      %3386 = vrot.lane.b32.xlu0 %v3313, 32
      %v3387 = vpop.permute.xlu0 %3386
      %3388 = vrot.lane.b32.xlu0 %v3314, 32
      %v3389 = vpop.permute.xlu0 %3388
      %3390 = vrot.lane.b32.xlu0 %v3315, 32
      %v3391 = vpop.permute.xlu0 %3390
      %3392 = vrot.lane.b32.xlu0 %v3316, 32
      %v3393 = vpop.permute.xlu0 %3392
      %3394 = vrot.lane.b32.xlu0 %v3317, 32
      %v3395 = vpop.permute.xlu0 %3394
      %3396 = vrot.lane.b32.xlu0 %v3318, 32
      %v3397 = vpop.permute.xlu0 %3396
      %3398 = vrot.lane.b32.xlu0 %v3319, 32
      %v3399 = vpop.permute.xlu0 %3398
      %3400 = vrot.lane.b32.xlu0 %v3320, 32
      %v3401 = vpop.permute.xlu0 %3400
      %3402 = vrot.lane.b32.xlu0 %v3321, 32
      %v3403 = vpop.permute.xlu0 %3402
      %3404 = vrot.lane.b32.xlu0 %v3322, 32
      %v3405 = vpop.permute.xlu0 %3404
      %3406 = vrot.lane.b32.xlu0 %v3323, 32
      %v3407 = vpop.permute.xlu0 %3406
      %3408 = vrot.lane.b32.xlu0 %v3324, 32
      %v3409 = vpop.permute.xlu0 %3408
      %3410 = vrot.lane.b32.xlu0 %v3325, 32
      %v3411 = vpop.permute.xlu0 %3410
      %3412 = vrot.lane.b32.xlu0 %v3326, 32
      %v3413 = vpop.permute.xlu0 %3412
      %3414 = vrot.lane.b32.xlu0 %v3327, 32
      %v3415 = vpop.permute.xlu0 %3414
      %3416 = vrot.lane.b32.xlu0 %v3328, 32
      %v3417 = vpop.permute.xlu0 %3416
      %3418 = vrot.lane.b32.xlu0 %v3329, 32
      %v3419 = vpop.permute.xlu0 %3418
      %3420 = vrot.lane.b32.xlu0 %v3330, 32
      %v3421 = vpop.permute.xlu0 %3420
      %3422 = vrot.lane.b32.xlu0 %v3331, 32
      %v3423 = vpop.permute.xlu0 %3422
      %3424 = vrot.lane.b32.xlu0 %v3332, 32
      %v3425 = vpop.permute.xlu0 %3424
      %3426 = vrot.lane.b32.xlu0 %v3333, 32
      %v3427 = vpop.permute.xlu0 %3426
      %3428 = vrot.lane.b32.xlu0 %v3334, 32
      %v3429 = vpop.permute.xlu0 %3428
      %3430 = vrot.lane.b32.xlu0 %v3335, 32
      %v3431 = vpop.permute.xlu0 %3430
      %vm3464 = vcmask 326912
      %3465 = vst.msk [vmem:[#allocation5] sm:$0xff] %vm3464, %v3369
      %3466 = vst.msk [vmem:[#allocation5 + $0x8] sm:$0xff] %vm3464, %v3371
      %3467 = vst.msk [vmem:[#allocation5 + $0x10] sm:$0xff] %vm3464, %v3373
      %3468 = vst.msk [vmem:[#allocation5 + $0x18] sm:$0xff] %vm3464, %v3375
      %3469 = vst.msk [vmem:[#allocation5 + $0x20] sm:$0xff] %vm3464, %v3377
      %3470 = vst.msk [vmem:[#allocation5 + $0x28] sm:$0xff] %vm3464, %v3379
      %3471 = vst.msk [vmem:[#allocation5 + $0x30] sm:$0xff] %vm3464, %v3381
      %3472 = vst.msk [vmem:[#allocation5 + $0x38] sm:$0xff] %vm3464, %v3383
      %3473 = vst.msk [vmem:[#allocation5 + $0x40] sm:$0xff] %vm3464, %v3385
      %3474 = vst.msk [vmem:[#allocation5 + $0x48] sm:$0xff] %vm3464, %v3387
      %3475 = vst.msk [vmem:[#allocation5 + $0x50] sm:$0xff] %vm3464, %v3389
      %3476 = vst.msk [vmem:[#allocation5 + $0x58] sm:$0xff] %vm3464, %v3391
      %3477 = vst.msk [vmem:[#allocation5 + $0x60] sm:$0xff] %vm3464, %v3393
      %3478 = vst.msk [vmem:[#allocation5 + $0x68] sm:$0xff] %vm3464, %v3395
      %3479 = vst.msk [vmem:[#allocation5 + $0x70] sm:$0xff] %vm3464, %v3397
      %3480 = vst.msk [vmem:[#allocation5 + $0x78] sm:$0xff] %vm3464, %v3399
      %3481 = vst.msk [vmem:[#allocation5 + $0x80] sm:$0xff] %vm3464, %v3401
      %3482 = vst.msk [vmem:[#allocation5 + $0x88] sm:$0xff] %vm3464, %v3403
      %3483 = vst.msk [vmem:[#allocation5 + $0x90] sm:$0xff] %vm3464, %v3405
      %3484 = vst.msk [vmem:[#allocation5 + $0x98] sm:$0xff] %vm3464, %v3407
      %3485 = vst.msk [vmem:[#allocation5 + $0xa0] sm:$0xff] %vm3464, %v3409
      %3486 = vst.msk [vmem:[#allocation5 + $0xa8] sm:$0xff] %vm3464, %v3411
      %3487 = vst.msk [vmem:[#allocation5 + $0xb0] sm:$0xff] %vm3464, %v3413
      %3488 = vst.msk [vmem:[#allocation5 + $0xb8] sm:$0xff] %vm3464, %v3415
      %3489 = vst.msk [vmem:[#allocation5 + $0xc0] sm:$0xff] %vm3464, %v3417
      %3490 = vst.msk [vmem:[#allocation5 + $0xc8] sm:$0xff] %vm3464, %v3419
      %3491 = vst.msk [vmem:[#allocation5 + $0xd0] sm:$0xff] %vm3464, %v3421
      %3492 = vst.msk [vmem:[#allocation5 + $0xd8] sm:$0xff] %vm3464, %v3423
      %3493 = vst.msk [vmem:[#allocation5 + $0xe0] sm:$0xff] %vm3464, %v3425
      %3494 = vst.msk [vmem:[#allocation5 + $0xe8] sm:$0xff] %vm3464, %v3427
      %3495 = vst.msk [vmem:[#allocation5 + $0xf0] sm:$0xff] %vm3464, %v3429
      %3496 = vst.msk [vmem:[#allocation5 + $0xf8] sm:$0xff] %vm3464, %v3431
      %v3497 = vld [vmem:[%s2628 + $0x2] sm:$0xff]
      %v3498 = vld [vmem:[%s2628 + $0xa] sm:$0xff]
      %v3499 = vld [vmem:[%s2628 + $0x1a] sm:$0xff]
      %v3500 = vld [vmem:[%s2628 + $0x22] sm:$0xff]
      %v3501 = vld [vmem:[%s2628 + $0x32] sm:$0xff]
      %v3502 = vld [vmem:[%s2628 + $0x3a] sm:$0xff]
      %v3503 = vld [vmem:[%s2628 + $0x4a] sm:$0xff]
      %v3504 = vld [vmem:[%s2628 + $0x52] sm:$0xff]
      %v3505 = vld [vmem:[%s2628 + $0x62] sm:$0xff]
      %v3506 = vld [vmem:[%s2628 + $0x6a] sm:$0xff]
      %v3507 = vld [vmem:[%s2628 + $0x7a] sm:$0xff]
      %v3508 = vld [vmem:[%s2628 + $0x82] sm:$0xff]
      %v3509 = vld [vmem:[%s2628 + $0x92] sm:$0xff]
      %v3510 = vld [vmem:[%s2628 + $0x9a] sm:$0xff]
      %v3511 = vld [vmem:[%s2628 + $0xaa] sm:$0xff]
      %v3512 = vld [vmem:[%s2628 + $0xb2] sm:$0xff]
      %v3513 = vld [vmem:[%s2628 + $0xc2] sm:$0xff]
      %v3514 = vld [vmem:[%s2628 + $0xca] sm:$0xff]
      %v3515 = vld [vmem:[%s2628 + $0xda] sm:$0xff]
      %v3516 = vld [vmem:[%s2628 + $0xe2] sm:$0xff]
      %v3517 = vld [vmem:[%s2628 + $0xf2] sm:$0xff]
      %v3518 = vld [vmem:[%s2628 + $0xfa] sm:$0xff]
      %v3519 = vld [vmem:[%s2628 + $0x10a] sm:$0xff]
      %v3520 = vld [vmem:[%s2628 + $0x112] sm:$0xff]
      %v3521 = vld [vmem:[%s2628 + $0x122] sm:$0xff]
      %v3522 = vld [vmem:[%s2628 + $0x12a] sm:$0xff]
      %v3523 = vld [vmem:[%s2628 + $0x13a] sm:$0xff]
      %v3524 = vld [vmem:[%s2628 + $0x142] sm:$0xff]
      %v3525 = vld [vmem:[%s2628 + $0x152] sm:$0xff]
      %v3526 = vld [vmem:[%s2628 + $0x15a] sm:$0xff]
      %v3527 = vld [vmem:[%s2628 + $0x16a] sm:$0xff]
      %v3528 = vld [vmem:[%s2628 + $0x172] sm:$0xff]
      %3561 = vrot.lane.b32.xlu0 %v3497, 40
      %v3562 = vpop.permute.xlu0 %3561
      %3563 = vrot.lane.b32.xlu0 %v3498, 40
      %v3564 = vpop.permute.xlu0 %3563
      %3565 = vrot.lane.b32.xlu0 %v3499, 40
      %v3566 = vpop.permute.xlu0 %3565
      %3567 = vrot.lane.b32.xlu0 %v3500, 40
      %v3568 = vpop.permute.xlu0 %3567
      %3569 = vrot.lane.b32.xlu0 %v3501, 40
      %v3570 = vpop.permute.xlu0 %3569
      %3571 = vrot.lane.b32.xlu0 %v3502, 40
      %v3572 = vpop.permute.xlu0 %3571
      %3573 = vrot.lane.b32.xlu0 %v3503, 40
      %v3574 = vpop.permute.xlu0 %3573
      %3575 = vrot.lane.b32.xlu0 %v3504, 40
      %v3576 = vpop.permute.xlu0 %3575
      %3577 = vrot.lane.b32.xlu0 %v3505, 40
      %v3578 = vpop.permute.xlu0 %3577
      %3579 = vrot.lane.b32.xlu0 %v3506, 40
      %v3580 = vpop.permute.xlu0 %3579
      %3581 = vrot.lane.b32.xlu0 %v3507, 40
      %v3582 = vpop.permute.xlu0 %3581
      %3583 = vrot.lane.b32.xlu0 %v3508, 40
      %v3584 = vpop.permute.xlu0 %3583
      %3585 = vrot.lane.b32.xlu0 %v3509, 40
      %v3586 = vpop.permute.xlu0 %3585
      %3587 = vrot.lane.b32.xlu0 %v3510, 40
      %v3588 = vpop.permute.xlu0 %3587
      %3589 = vrot.lane.b32.xlu0 %v3511, 40
      %v3590 = vpop.permute.xlu0 %3589
      %3591 = vrot.lane.b32.xlu0 %v3512, 40
      %v3592 = vpop.permute.xlu0 %3591
      %3593 = vrot.lane.b32.xlu0 %v3513, 40
      %v3594 = vpop.permute.xlu0 %3593
      %3595 = vrot.lane.b32.xlu0 %v3514, 40
      %v3596 = vpop.permute.xlu0 %3595
      %3597 = vrot.lane.b32.xlu0 %v3515, 40
      %v3598 = vpop.permute.xlu0 %3597
      %3599 = vrot.lane.b32.xlu0 %v3516, 40
      %v3600 = vpop.permute.xlu0 %3599
      %3601 = vrot.lane.b32.xlu0 %v3517, 40
      %v3602 = vpop.permute.xlu0 %3601
      %3603 = vrot.lane.b32.xlu0 %v3518, 40
      %v3604 = vpop.permute.xlu0 %3603
      %3605 = vrot.lane.b32.xlu0 %v3519, 40
      %v3606 = vpop.permute.xlu0 %3605
      %3607 = vrot.lane.b32.xlu0 %v3520, 40
      %v3608 = vpop.permute.xlu0 %3607
      %3609 = vrot.lane.b32.xlu0 %v3521, 40
      %v3610 = vpop.permute.xlu0 %3609
      %3611 = vrot.lane.b32.xlu0 %v3522, 40
      %v3612 = vpop.permute.xlu0 %3611
      %3613 = vrot.lane.b32.xlu0 %v3523, 40
      %v3614 = vpop.permute.xlu0 %3613
      %3615 = vrot.lane.b32.xlu0 %v3524, 40
      %v3616 = vpop.permute.xlu0 %3615
      %3617 = vrot.lane.b32.xlu0 %v3525, 40
      %v3618 = vpop.permute.xlu0 %3617
      %3619 = vrot.lane.b32.xlu0 %v3526, 40
      %v3620 = vpop.permute.xlu0 %3619
      %3621 = vrot.lane.b32.xlu0 %v3527, 40
      %v3622 = vpop.permute.xlu0 %3621
      %3623 = vrot.lane.b32.xlu0 %v3528, 40
      %v3624 = vpop.permute.xlu0 %3623
      %vm3657 = vcmask 392512
      %3658 = vst.msk [vmem:[#allocation5] sm:$0xff] %vm3657, %v3562
      %3659 = vst.msk [vmem:[#allocation5 + $0x8] sm:$0xff] %vm3657, %v3564
      %3660 = vst.msk [vmem:[#allocation5 + $0x10] sm:$0xff] %vm3657, %v3566
      %3661 = vst.msk [vmem:[#allocation5 + $0x18] sm:$0xff] %vm3657, %v3568
      %3662 = vst.msk [vmem:[#allocation5 + $0x20] sm:$0xff] %vm3657, %v3570
      %3663 = vst.msk [vmem:[#allocation5 + $0x28] sm:$0xff] %vm3657, %v3572
      %3664 = vst.msk [vmem:[#allocation5 + $0x30] sm:$0xff] %vm3657, %v3574
      %3665 = vst.msk [vmem:[#allocation5 + $0x38] sm:$0xff] %vm3657, %v3576
      %3666 = vst.msk [vmem:[#allocation5 + $0x40] sm:$0xff] %vm3657, %v3578
      %3667 = vst.msk [vmem:[#allocation5 + $0x48] sm:$0xff] %vm3657, %v3580
      %3668 = vst.msk [vmem:[#allocation5 + $0x50] sm:$0xff] %vm3657, %v3582
      %3669 = vst.msk [vmem:[#allocation5 + $0x58] sm:$0xff] %vm3657, %v3584
      %3670 = vst.msk [vmem:[#allocation5 + $0x60] sm:$0xff] %vm3657, %v3586
      %3671 = vst.msk [vmem:[#allocation5 + $0x68] sm:$0xff] %vm3657, %v3588
      %3672 = vst.msk [vmem:[#allocation5 + $0x70] sm:$0xff] %vm3657, %v3590
      %3673 = vst.msk [vmem:[#allocation5 + $0x78] sm:$0xff] %vm3657, %v3592
      %3674 = vst.msk [vmem:[#allocation5 + $0x80] sm:$0xff] %vm3657, %v3594
      %3675 = vst.msk [vmem:[#allocation5 + $0x88] sm:$0xff] %vm3657, %v3596
      %3676 = vst.msk [vmem:[#allocation5 + $0x90] sm:$0xff] %vm3657, %v3598
      %3677 = vst.msk [vmem:[#allocation5 + $0x98] sm:$0xff] %vm3657, %v3600
      %3678 = vst.msk [vmem:[#allocation5 + $0xa0] sm:$0xff] %vm3657, %v3602
      %3679 = vst.msk [vmem:[#allocation5 + $0xa8] sm:$0xff] %vm3657, %v3604
      %3680 = vst.msk [vmem:[#allocation5 + $0xb0] sm:$0xff] %vm3657, %v3606
      %3681 = vst.msk [vmem:[#allocation5 + $0xb8] sm:$0xff] %vm3657, %v3608
      %3682 = vst.msk [vmem:[#allocation5 + $0xc0] sm:$0xff] %vm3657, %v3610
      %3683 = vst.msk [vmem:[#allocation5 + $0xc8] sm:$0xff] %vm3657, %v3612
      %3684 = vst.msk [vmem:[#allocation5 + $0xd0] sm:$0xff] %vm3657, %v3614
      %3685 = vst.msk [vmem:[#allocation5 + $0xd8] sm:$0xff] %vm3657, %v3616
      %3686 = vst.msk [vmem:[#allocation5 + $0xe0] sm:$0xff] %vm3657, %v3618
      %3687 = vst.msk [vmem:[#allocation5 + $0xe8] sm:$0xff] %vm3657, %v3620
      %3688 = vst.msk [vmem:[#allocation5 + $0xf0] sm:$0xff] %vm3657, %v3622
      %3689 = vst.msk [vmem:[#allocation5 + $0xf8] sm:$0xff] %vm3657, %v3624
      %s3690 = scalar_lea.vmem [#allocation3], 48
      %v3691 = vld [vmem:[%s3690] sm:$0xff]
      %v3692 = vld [vmem:[%s3690 + $0x8] sm:$0xff]
      %v3693 = vld [vmem:[%s3690 + $0x18] sm:$0xff]
      %v3694 = vld [vmem:[%s3690 + $0x20] sm:$0xff]
      %v3695 = vld [vmem:[%s3690 + $0x30] sm:$0xff]
      %v3696 = vld [vmem:[%s3690 + $0x38] sm:$0xff]
      %v3697 = vld [vmem:[%s3690 + $0x48] sm:$0xff]
      %v3698 = vld [vmem:[%s3690 + $0x50] sm:$0xff]
      %v3699 = vld [vmem:[%s3690 + $0x60] sm:$0xff]
      %v3700 = vld [vmem:[%s3690 + $0x68] sm:$0xff]
      %v3701 = vld [vmem:[%s3690 + $0x78] sm:$0xff]
      %v3702 = vld [vmem:[%s3690 + $0x80] sm:$0xff]
      %v3703 = vld [vmem:[%s3690 + $0x90] sm:$0xff]
      %v3704 = vld [vmem:[%s3690 + $0x98] sm:$0xff]
      %v3705 = vld [vmem:[%s3690 + $0xa8] sm:$0xff]
      %v3706 = vld [vmem:[%s3690 + $0xb0] sm:$0xff]
      %v3707 = vld [vmem:[%s3690 + $0xc0] sm:$0xff]
      %v3708 = vld [vmem:[%s3690 + $0xc8] sm:$0xff]
      %v3709 = vld [vmem:[%s3690 + $0xd8] sm:$0xff]
      %v3710 = vld [vmem:[%s3690 + $0xe0] sm:$0xff]
      %v3711 = vld [vmem:[%s3690 + $0xf0] sm:$0xff]
      %v3712 = vld [vmem:[%s3690 + $0xf8] sm:$0xff]
      %v3713 = vld [vmem:[%s3690 + $0x108] sm:$0xff]
      %v3714 = vld [vmem:[%s3690 + $0x110] sm:$0xff]
      %v3715 = vld [vmem:[%s3690 + $0x120] sm:$0xff]
      %v3716 = vld [vmem:[%s3690 + $0x128] sm:$0xff]
      %v3717 = vld [vmem:[%s3690 + $0x138] sm:$0xff]
      %v3718 = vld [vmem:[%s3690 + $0x140] sm:$0xff]
      %v3719 = vld [vmem:[%s3690 + $0x150] sm:$0xff]
      %v3720 = vld [vmem:[%s3690 + $0x158] sm:$0xff]
      %v3721 = vld [vmem:[%s3690 + $0x168] sm:$0xff]
      %v3722 = vld [vmem:[%s3690 + $0x170] sm:$0xff]
      %3755 = vrot.lane.b32.xlu0 %v3691, 48
      %v3756 = vpop.permute.xlu0 %3755
      %3757 = vrot.lane.b32.xlu0 %v3692, 48
      %v3758 = vpop.permute.xlu0 %3757
      %3759 = vrot.lane.b32.xlu0 %v3693, 48
      %v3760 = vpop.permute.xlu0 %3759
      %3761 = vrot.lane.b32.xlu0 %v3694, 48
      %v3762 = vpop.permute.xlu0 %3761
      %3763 = vrot.lane.b32.xlu0 %v3695, 48
      %v3764 = vpop.permute.xlu0 %3763
      %3765 = vrot.lane.b32.xlu0 %v3696, 48
      %v3766 = vpop.permute.xlu0 %3765
      %3767 = vrot.lane.b32.xlu0 %v3697, 48
      %v3768 = vpop.permute.xlu0 %3767
      %3769 = vrot.lane.b32.xlu0 %v3698, 48
      %v3770 = vpop.permute.xlu0 %3769
      %3771 = vrot.lane.b32.xlu0 %v3699, 48
      %v3772 = vpop.permute.xlu0 %3771
      %3773 = vrot.lane.b32.xlu0 %v3700, 48
      %v3774 = vpop.permute.xlu0 %3773
      %3775 = vrot.lane.b32.xlu0 %v3701, 48
      %v3776 = vpop.permute.xlu0 %3775
      %3777 = vrot.lane.b32.xlu0 %v3702, 48
      %v3778 = vpop.permute.xlu0 %3777
      %3779 = vrot.lane.b32.xlu0 %v3703, 48
      %v3780 = vpop.permute.xlu0 %3779
      %3781 = vrot.lane.b32.xlu0 %v3704, 48
      %v3782 = vpop.permute.xlu0 %3781
      %3783 = vrot.lane.b32.xlu0 %v3705, 48
      %v3784 = vpop.permute.xlu0 %3783
      %3785 = vrot.lane.b32.xlu0 %v3706, 48
      %v3786 = vpop.permute.xlu0 %3785
      %3787 = vrot.lane.b32.xlu0 %v3707, 48
      %v3788 = vpop.permute.xlu0 %3787
      %3789 = vrot.lane.b32.xlu0 %v3708, 48
      %v3790 = vpop.permute.xlu0 %3789
      %3791 = vrot.lane.b32.xlu0 %v3709, 48
      %v3792 = vpop.permute.xlu0 %3791
      %3793 = vrot.lane.b32.xlu0 %v3710, 48
      %v3794 = vpop.permute.xlu0 %3793
      %3795 = vrot.lane.b32.xlu0 %v3711, 48
      %v3796 = vpop.permute.xlu0 %3795
      %3797 = vrot.lane.b32.xlu0 %v3712, 48
      %v3798 = vpop.permute.xlu0 %3797
      %3799 = vrot.lane.b32.xlu0 %v3713, 48
      %v3800 = vpop.permute.xlu0 %3799
      %3801 = vrot.lane.b32.xlu0 %v3714, 48
      %v3802 = vpop.permute.xlu0 %3801
      %3803 = vrot.lane.b32.xlu0 %v3715, 48
      %v3804 = vpop.permute.xlu0 %3803
      %3805 = vrot.lane.b32.xlu0 %v3716, 48
      %v3806 = vpop.permute.xlu0 %3805
      %3807 = vrot.lane.b32.xlu0 %v3717, 48
      %v3808 = vpop.permute.xlu0 %3807
      %3809 = vrot.lane.b32.xlu0 %v3718, 48
      %v3810 = vpop.permute.xlu0 %3809
      %3811 = vrot.lane.b32.xlu0 %v3719, 48
      %v3812 = vpop.permute.xlu0 %3811
      %3813 = vrot.lane.b32.xlu0 %v3720, 48
      %v3814 = vpop.permute.xlu0 %3813
      %3815 = vrot.lane.b32.xlu0 %v3721, 48
      %v3816 = vpop.permute.xlu0 %3815
      %3817 = vrot.lane.b32.xlu0 %v3722, 48
      %v3818 = vpop.permute.xlu0 %3817
      %vm3851 = vcmask 458112
      %3852 = vst.msk [vmem:[#allocation5] sm:$0xff] %vm3851, %v3756
      %3853 = vst.msk [vmem:[#allocation5 + $0x8] sm:$0xff] %vm3851, %v3758
      %3854 = vst.msk [vmem:[#allocation5 + $0x10] sm:$0xff] %vm3851, %v3760
      %3855 = vst.msk [vmem:[#allocation5 + $0x18] sm:$0xff] %vm3851, %v3762
      %3856 = vst.msk [vmem:[#allocation5 + $0x20] sm:$0xff] %vm3851, %v3764
      %3857 = vst.msk [vmem:[#allocation5 + $0x28] sm:$0xff] %vm3851, %v3766
      %3858 = vst.msk [vmem:[#allocation5 + $0x30] sm:$0xff] %vm3851, %v3768
      %3859 = vst.msk [vmem:[#allocation5 + $0x38] sm:$0xff] %vm3851, %v3770
      %3860 = vst.msk [vmem:[#allocation5 + $0x40] sm:$0xff] %vm3851, %v3772
      %3861 = vst.msk [vmem:[#allocation5 + $0x48] sm:$0xff] %vm3851, %v3774
      %3862 = vst.msk [vmem:[#allocation5 + $0x50] sm:$0xff] %vm3851, %v3776
      %3863 = vst.msk [vmem:[#allocation5 + $0x58] sm:$0xff] %vm3851, %v3778
      %3864 = vst.msk [vmem:[#allocation5 + $0x60] sm:$0xff] %vm3851, %v3780
      %3865 = vst.msk [vmem:[#allocation5 + $0x68] sm:$0xff] %vm3851, %v3782
      %3866 = vst.msk [vmem:[#allocation5 + $0x70] sm:$0xff] %vm3851, %v3784
      %3867 = vst.msk [vmem:[#allocation5 + $0x78] sm:$0xff] %vm3851, %v3786
      %3868 = vst.msk [vmem:[#allocation5 + $0x80] sm:$0xff] %vm3851, %v3788
      %3869 = vst.msk [vmem:[#allocation5 + $0x88] sm:$0xff] %vm3851, %v3790
      %3870 = vst.msk [vmem:[#allocation5 + $0x90] sm:$0xff] %vm3851, %v3792
      %3871 = vst.msk [vmem:[#allocation5 + $0x98] sm:$0xff] %vm3851, %v3794
      %3872 = vst.msk [vmem:[#allocation5 + $0xa0] sm:$0xff] %vm3851, %v3796
      %3873 = vst.msk [vmem:[#allocation5 + $0xa8] sm:$0xff] %vm3851, %v3798
      %3874 = vst.msk [vmem:[#allocation5 + $0xb0] sm:$0xff] %vm3851, %v3800
      %3875 = vst.msk [vmem:[#allocation5 + $0xb8] sm:$0xff] %vm3851, %v3802
      %3876 = vst.msk [vmem:[#allocation5 + $0xc0] sm:$0xff] %vm3851, %v3804
      %3877 = vst.msk [vmem:[#allocation5 + $0xc8] sm:$0xff] %vm3851, %v3806
      %3878 = vst.msk [vmem:[#allocation5 + $0xd0] sm:$0xff] %vm3851, %v3808
      %3879 = vst.msk [vmem:[#allocation5 + $0xd8] sm:$0xff] %vm3851, %v3810
      %3880 = vst.msk [vmem:[#allocation5 + $0xe0] sm:$0xff] %vm3851, %v3812
      %3881 = vst.msk [vmem:[#allocation5 + $0xe8] sm:$0xff] %vm3851, %v3814
      %3882 = vst.msk [vmem:[#allocation5 + $0xf0] sm:$0xff] %vm3851, %v3816
      %3883 = vst.msk [vmem:[#allocation5 + $0xf8] sm:$0xff] %vm3851, %v3818
      %v3884 = vld [vmem:[%s3690 + $0x1] sm:$0xff]
      %v3885 = vld [vmem:[%s3690 + $0x9] sm:$0xff]
      %v3886 = vld [vmem:[%s3690 + $0x19] sm:$0xff]
      %v3887 = vld [vmem:[%s3690 + $0x21] sm:$0xff]
      %v3888 = vld [vmem:[%s3690 + $0x31] sm:$0xff]
      %v3889 = vld [vmem:[%s3690 + $0x39] sm:$0xff]
      %v3890 = vld [vmem:[%s3690 + $0x49] sm:$0xff]
      %v3891 = vld [vmem:[%s3690 + $0x51] sm:$0xff]
      %v3892 = vld [vmem:[%s3690 + $0x61] sm:$0xff]
      %v3893 = vld [vmem:[%s3690 + $0x69] sm:$0xff]
      %v3894 = vld [vmem:[%s3690 + $0x79] sm:$0xff]
      %v3895 = vld [vmem:[%s3690 + $0x81] sm:$0xff]
      %v3896 = vld [vmem:[%s3690 + $0x91] sm:$0xff]
      %v3897 = vld [vmem:[%s3690 + $0x99] sm:$0xff]
      %v3898 = vld [vmem:[%s3690 + $0xa9] sm:$0xff]
      %v3899 = vld [vmem:[%s3690 + $0xb1] sm:$0xff]
      %v3900 = vld [vmem:[%s3690 + $0xc1] sm:$0xff]
      %v3901 = vld [vmem:[%s3690 + $0xc9] sm:$0xff]
      %v3902 = vld [vmem:[%s3690 + $0xd9] sm:$0xff]
      %v3903 = vld [vmem:[%s3690 + $0xe1] sm:$0xff]
      %v3904 = vld [vmem:[%s3690 + $0xf1] sm:$0xff]
      %v3905 = vld [vmem:[%s3690 + $0xf9] sm:$0xff]
      %v3906 = vld [vmem:[%s3690 + $0x109] sm:$0xff]
      %v3907 = vld [vmem:[%s3690 + $0x111] sm:$0xff]
      %v3908 = vld [vmem:[%s3690 + $0x121] sm:$0xff]
      %v3909 = vld [vmem:[%s3690 + $0x129] sm:$0xff]
      %v3910 = vld [vmem:[%s3690 + $0x139] sm:$0xff]
      %v3911 = vld [vmem:[%s3690 + $0x141] sm:$0xff]
      %v3912 = vld [vmem:[%s3690 + $0x151] sm:$0xff]
      %v3913 = vld [vmem:[%s3690 + $0x159] sm:$0xff]
      %v3914 = vld [vmem:[%s3690 + $0x169] sm:$0xff]
      %v3915 = vld [vmem:[%s3690 + $0x171] sm:$0xff]
      %3948 = vrot.lane.b32.xlu0 %v3884, 56
      %v3949 = vpop.permute.xlu0 %3948
      %3950 = vrot.lane.b32.xlu0 %v3885, 56
      %v3951 = vpop.permute.xlu0 %3950
      %3952 = vrot.lane.b32.xlu0 %v3886, 56
      %v3953 = vpop.permute.xlu0 %3952
      %3954 = vrot.lane.b32.xlu0 %v3887, 56
      %v3955 = vpop.permute.xlu0 %3954
      %3956 = vrot.lane.b32.xlu0 %v3888, 56
      %v3957 = vpop.permute.xlu0 %3956
      %3958 = vrot.lane.b32.xlu0 %v3889, 56
      %v3959 = vpop.permute.xlu0 %3958
      %3960 = vrot.lane.b32.xlu0 %v3890, 56
      %v3961 = vpop.permute.xlu0 %3960
      %3962 = vrot.lane.b32.xlu0 %v3891, 56
      %v3963 = vpop.permute.xlu0 %3962
      %3964 = vrot.lane.b32.xlu0 %v3892, 56
      %v3965 = vpop.permute.xlu0 %3964
      %3966 = vrot.lane.b32.xlu0 %v3893, 56
      %v3967 = vpop.permute.xlu0 %3966
      %3968 = vrot.lane.b32.xlu0 %v3894, 56
      %v3969 = vpop.permute.xlu0 %3968
      %3970 = vrot.lane.b32.xlu0 %v3895, 56
      %v3971 = vpop.permute.xlu0 %3970
      %3972 = vrot.lane.b32.xlu0 %v3896, 56
      %v3973 = vpop.permute.xlu0 %3972
      %3974 = vrot.lane.b32.xlu0 %v3897, 56
      %v3975 = vpop.permute.xlu0 %3974
      %3976 = vrot.lane.b32.xlu0 %v3898, 56
      %v3977 = vpop.permute.xlu0 %3976
      %3978 = vrot.lane.b32.xlu0 %v3899, 56
      %v3979 = vpop.permute.xlu0 %3978
      %3980 = vrot.lane.b32.xlu0 %v3900, 56
      %v3981 = vpop.permute.xlu0 %3980
      %3982 = vrot.lane.b32.xlu0 %v3901, 56
      %v3983 = vpop.permute.xlu0 %3982
      %3984 = vrot.lane.b32.xlu0 %v3902, 56
      %v3985 = vpop.permute.xlu0 %3984
      %3986 = vrot.lane.b32.xlu0 %v3903, 56
      %v3987 = vpop.permute.xlu0 %3986
      %3988 = vrot.lane.b32.xlu0 %v3904, 56
      %v3989 = vpop.permute.xlu0 %3988
      %3990 = vrot.lane.b32.xlu0 %v3905, 56
      %v3991 = vpop.permute.xlu0 %3990
      %3992 = vrot.lane.b32.xlu0 %v3906, 56
      %v3993 = vpop.permute.xlu0 %3992
      %3994 = vrot.lane.b32.xlu0 %v3907, 56
      %v3995 = vpop.permute.xlu0 %3994
      %3996 = vrot.lane.b32.xlu0 %v3908, 56
      %v3997 = vpop.permute.xlu0 %3996
      %3998 = vrot.lane.b32.xlu0 %v3909, 56
      %v3999 = vpop.permute.xlu0 %3998
      %4000 = vrot.lane.b32.xlu0 %v3910, 56
      %v4001 = vpop.permute.xlu0 %4000
      %4002 = vrot.lane.b32.xlu0 %v3911, 56
      %v4003 = vpop.permute.xlu0 %4002
      %4004 = vrot.lane.b32.xlu0 %v3912, 56
      %v4005 = vpop.permute.xlu0 %4004
      %4006 = vrot.lane.b32.xlu0 %v3913, 56
      %v4007 = vpop.permute.xlu0 %4006
      %4008 = vrot.lane.b32.xlu0 %v3914, 56
      %v4009 = vpop.permute.xlu0 %4008
      %4010 = vrot.lane.b32.xlu0 %v3915, 56
      %v4011 = vpop.permute.xlu0 %4010
      %vm4044 = vcmask 523712
      %4045 = vst.msk [vmem:[#allocation5] sm:$0xff] %vm4044, %v3949
      %4046 = vst.msk [vmem:[#allocation5 + $0x8] sm:$0xff] %vm4044, %v3951
      %4047 = vst.msk [vmem:[#allocation5 + $0x10] sm:$0xff] %vm4044, %v3953
      %4048 = vst.msk [vmem:[#allocation5 + $0x18] sm:$0xff] %vm4044, %v3955
      %4049 = vst.msk [vmem:[#allocation5 + $0x20] sm:$0xff] %vm4044, %v3957
      %4050 = vst.msk [vmem:[#allocation5 + $0x28] sm:$0xff] %vm4044, %v3959
      %4051 = vst.msk [vmem:[#allocation5 + $0x30] sm:$0xff] %vm4044, %v3961
      %4052 = vst.msk [vmem:[#allocation5 + $0x38] sm:$0xff] %vm4044, %v3963
      %4053 = vst.msk [vmem:[#allocation5 + $0x40] sm:$0xff] %vm4044, %v3965
      %4054 = vst.msk [vmem:[#allocation5 + $0x48] sm:$0xff] %vm4044, %v3967
      %4055 = vst.msk [vmem:[#allocation5 + $0x50] sm:$0xff] %vm4044, %v3969
      %4056 = vst.msk [vmem:[#allocation5 + $0x58] sm:$0xff] %vm4044, %v3971
      %4057 = vst.msk [vmem:[#allocation5 + $0x60] sm:$0xff] %vm4044, %v3973
      %4058 = vst.msk [vmem:[#allocation5 + $0x68] sm:$0xff] %vm4044, %v3975
      %4059 = vst.msk [vmem:[#allocation5 + $0x70] sm:$0xff] %vm4044, %v3977
      %4060 = vst.msk [vmem:[#allocation5 + $0x78] sm:$0xff] %vm4044, %v3979
      %4061 = vst.msk [vmem:[#allocation5 + $0x80] sm:$0xff] %vm4044, %v3981
      %4062 = vst.msk [vmem:[#allocation5 + $0x88] sm:$0xff] %vm4044, %v3983
      %4063 = vst.msk [vmem:[#allocation5 + $0x90] sm:$0xff] %vm4044, %v3985
      %4064 = vst.msk [vmem:[#allocation5 + $0x98] sm:$0xff] %vm4044, %v3987
      %4065 = vst.msk [vmem:[#allocation5 + $0xa0] sm:$0xff] %vm4044, %v3989
      %4066 = vst.msk [vmem:[#allocation5 + $0xa8] sm:$0xff] %vm4044, %v3991
      %4067 = vst.msk [vmem:[#allocation5 + $0xb0] sm:$0xff] %vm4044, %v3993
      %4068 = vst.msk [vmem:[#allocation5 + $0xb8] sm:$0xff] %vm4044, %v3995
      %4069 = vst.msk [vmem:[#allocation5 + $0xc0] sm:$0xff] %vm4044, %v3997
      %4070 = vst.msk [vmem:[#allocation5 + $0xc8] sm:$0xff] %vm4044, %v3999
      %4071 = vst.msk [vmem:[#allocation5 + $0xd0] sm:$0xff] %vm4044, %v4001
      %4072 = vst.msk [vmem:[#allocation5 + $0xd8] sm:$0xff] %vm4044, %v4003
      %4073 = vst.msk [vmem:[#allocation5 + $0xe0] sm:$0xff] %vm4044, %v4005
      %4074 = vst.msk [vmem:[#allocation5 + $0xe8] sm:$0xff] %vm4044, %v4007
      %4075 = vst.msk [vmem:[#allocation5 + $0xf0] sm:$0xff] %vm4044, %v4009
      %4076 = vst.msk [vmem:[#allocation5 + $0xf8] sm:$0xff] %vm4044, %v4011
      %v4077 = vld [vmem:[%s3690 + $0x2] sm:$0xff]
      %v4078 = vld [vmem:[%s3690 + $0xa] sm:$0xff]
      %v4079 = vld [vmem:[%s3690 + $0x1a] sm:$0xff]
      %v4080 = vld [vmem:[%s3690 + $0x22] sm:$0xff]
      %v4081 = vld [vmem:[%s3690 + $0x32] sm:$0xff]
      %v4082 = vld [vmem:[%s3690 + $0x3a] sm:$0xff]
      %v4083 = vld [vmem:[%s3690 + $0x4a] sm:$0xff]
      %v4084 = vld [vmem:[%s3690 + $0x52] sm:$0xff]
      %v4085 = vld [vmem:[%s3690 + $0x62] sm:$0xff]
      %v4086 = vld [vmem:[%s3690 + $0x6a] sm:$0xff]
      %v4087 = vld [vmem:[%s3690 + $0x7a] sm:$0xff]
      %v4088 = vld [vmem:[%s3690 + $0x82] sm:$0xff]
      %v4089 = vld [vmem:[%s3690 + $0x92] sm:$0xff]
      %v4090 = vld [vmem:[%s3690 + $0x9a] sm:$0xff]
      %v4091 = vld [vmem:[%s3690 + $0xaa] sm:$0xff]
      %v4092 = vld [vmem:[%s3690 + $0xb2] sm:$0xff]
      %v4093 = vld [vmem:[%s3690 + $0xc2] sm:$0xff]
      %v4094 = vld [vmem:[%s3690 + $0xca] sm:$0xff]
      %v4095 = vld [vmem:[%s3690 + $0xda] sm:$0xff]
      %v4096 = vld [vmem:[%s3690 + $0xe2] sm:$0xff]
      %v4097 = vld [vmem:[%s3690 + $0xf2] sm:$0xff]
      %v4098 = vld [vmem:[%s3690 + $0xfa] sm:$0xff]
      %v4099 = vld [vmem:[%s3690 + $0x10a] sm:$0xff]
      %v4100 = vld [vmem:[%s3690 + $0x112] sm:$0xff]
      %v4101 = vld [vmem:[%s3690 + $0x122] sm:$0xff]
      %v4102 = vld [vmem:[%s3690 + $0x12a] sm:$0xff]
      %v4103 = vld [vmem:[%s3690 + $0x13a] sm:$0xff]
      %v4104 = vld [vmem:[%s3690 + $0x142] sm:$0xff]
      %v4105 = vld [vmem:[%s3690 + $0x152] sm:$0xff]
      %v4106 = vld [vmem:[%s3690 + $0x15a] sm:$0xff]
      %v4107 = vld [vmem:[%s3690 + $0x16a] sm:$0xff]
      %v4108 = vld [vmem:[%s3690 + $0x172] sm:$0xff]
      %4141 = vrot.lane.b32.xlu0 %v4077, 64
      %v4142 = vpop.permute.xlu0 %4141
      %4143 = vrot.lane.b32.xlu0 %v4078, 64
      %v4144 = vpop.permute.xlu0 %4143
      %4145 = vrot.lane.b32.xlu0 %v4079, 64
      %v4146 = vpop.permute.xlu0 %4145
      %4147 = vrot.lane.b32.xlu0 %v4080, 64
      %v4148 = vpop.permute.xlu0 %4147
      %4149 = vrot.lane.b32.xlu0 %v4081, 64
      %v4150 = vpop.permute.xlu0 %4149
      %4151 = vrot.lane.b32.xlu0 %v4082, 64
      %v4152 = vpop.permute.xlu0 %4151
      %4153 = vrot.lane.b32.xlu0 %v4083, 64
      %v4154 = vpop.permute.xlu0 %4153
      %4155 = vrot.lane.b32.xlu0 %v4084, 64
      %v4156 = vpop.permute.xlu0 %4155
      %4157 = vrot.lane.b32.xlu0 %v4085, 64
      %v4158 = vpop.permute.xlu0 %4157
      %4159 = vrot.lane.b32.xlu0 %v4086, 64
      %v4160 = vpop.permute.xlu0 %4159
      %4161 = vrot.lane.b32.xlu0 %v4087, 64
      %v4162 = vpop.permute.xlu0 %4161
      %4163 = vrot.lane.b32.xlu0 %v4088, 64
      %v4164 = vpop.permute.xlu0 %4163
      %4165 = vrot.lane.b32.xlu0 %v4089, 64
      %v4166 = vpop.permute.xlu0 %4165
      %4167 = vrot.lane.b32.xlu0 %v4090, 64
      %v4168 = vpop.permute.xlu0 %4167
      %4169 = vrot.lane.b32.xlu0 %v4091, 64
      %v4170 = vpop.permute.xlu0 %4169
      %4171 = vrot.lane.b32.xlu0 %v4092, 64
      %v4172 = vpop.permute.xlu0 %4171
      %4173 = vrot.lane.b32.xlu0 %v4093, 64
      %v4174 = vpop.permute.xlu0 %4173
      %4175 = vrot.lane.b32.xlu0 %v4094, 64
      %v4176 = vpop.permute.xlu0 %4175
      %4177 = vrot.lane.b32.xlu0 %v4095, 64
      %v4178 = vpop.permute.xlu0 %4177
      %4179 = vrot.lane.b32.xlu0 %v4096, 64
      %v4180 = vpop.permute.xlu0 %4179
      %4181 = vrot.lane.b32.xlu0 %v4097, 64
      %v4182 = vpop.permute.xlu0 %4181
      %4183 = vrot.lane.b32.xlu0 %v4098, 64
      %v4184 = vpop.permute.xlu0 %4183
      %4185 = vrot.lane.b32.xlu0 %v4099, 64
      %v4186 = vpop.permute.xlu0 %4185
      %4187 = vrot.lane.b32.xlu0 %v4100, 64
      %v4188 = vpop.permute.xlu0 %4187
      %4189 = vrot.lane.b32.xlu0 %v4101, 64
      %v4190 = vpop.permute.xlu0 %4189
      %4191 = vrot.lane.b32.xlu0 %v4102, 64
      %v4192 = vpop.permute.xlu0 %4191
      %4193 = vrot.lane.b32.xlu0 %v4103, 64
      %v4194 = vpop.permute.xlu0 %4193
      %4195 = vrot.lane.b32.xlu0 %v4104, 64
      %v4196 = vpop.permute.xlu0 %4195
      %4197 = vrot.lane.b32.xlu0 %v4105, 64
      %v4198 = vpop.permute.xlu0 %4197
      %4199 = vrot.lane.b32.xlu0 %v4106, 64
      %v4200 = vpop.permute.xlu0 %4199
      %4201 = vrot.lane.b32.xlu0 %v4107, 64
      %v4202 = vpop.permute.xlu0 %4201
      %4203 = vrot.lane.b32.xlu0 %v4108, 64
      %v4204 = vpop.permute.xlu0 %4203
      %vm4237 = vcmask 589312
      %4238 = vst.msk [vmem:[#allocation5] sm:$0xff] %vm4237, %v4142
      %4239 = vst.msk [vmem:[#allocation5 + $0x8] sm:$0xff] %vm4237, %v4144
      %4240 = vst.msk [vmem:[#allocation5 + $0x10] sm:$0xff] %vm4237, %v4146
      %4241 = vst.msk [vmem:[#allocation5 + $0x18] sm:$0xff] %vm4237, %v4148
      %4242 = vst.msk [vmem:[#allocation5 + $0x20] sm:$0xff] %vm4237, %v4150
      %4243 = vst.msk [vmem:[#allocation5 + $0x28] sm:$0xff] %vm4237, %v4152
      %4244 = vst.msk [vmem:[#allocation5 + $0x30] sm:$0xff] %vm4237, %v4154
      %4245 = vst.msk [vmem:[#allocation5 + $0x38] sm:$0xff] %vm4237, %v4156
      %4246 = vst.msk [vmem:[#allocation5 + $0x40] sm:$0xff] %vm4237, %v4158
      %4247 = vst.msk [vmem:[#allocation5 + $0x48] sm:$0xff] %vm4237, %v4160
      %4248 = vst.msk [vmem:[#allocation5 + $0x50] sm:$0xff] %vm4237, %v4162
      %4249 = vst.msk [vmem:[#allocation5 + $0x58] sm:$0xff] %vm4237, %v4164
      %4250 = vst.msk [vmem:[#allocation5 + $0x60] sm:$0xff] %vm4237, %v4166
      %4251 = vst.msk [vmem:[#allocation5 + $0x68] sm:$0xff] %vm4237, %v4168
      %4252 = vst.msk [vmem:[#allocation5 + $0x70] sm:$0xff] %vm4237, %v4170
      %4253 = vst.msk [vmem:[#allocation5 + $0x78] sm:$0xff] %vm4237, %v4172
      %4254 = vst.msk [vmem:[#allocation5 + $0x80] sm:$0xff] %vm4237, %v4174
      %4255 = vst.msk [vmem:[#allocation5 + $0x88] sm:$0xff] %vm4237, %v4176
      %4256 = vst.msk [vmem:[#allocation5 + $0x90] sm:$0xff] %vm4237, %v4178
      %4257 = vst.msk [vmem:[#allocation5 + $0x98] sm:$0xff] %vm4237, %v4180
      %4258 = vst.msk [vmem:[#allocation5 + $0xa0] sm:$0xff] %vm4237, %v4182
      %4259 = vst.msk [vmem:[#allocation5 + $0xa8] sm:$0xff] %vm4237, %v4184
      %4260 = vst.msk [vmem:[#allocation5 + $0xb0] sm:$0xff] %vm4237, %v4186
      %4261 = vst.msk [vmem:[#allocation5 + $0xb8] sm:$0xff] %vm4237, %v4188
      %4262 = vst.msk [vmem:[#allocation5 + $0xc0] sm:$0xff] %vm4237, %v4190
      %4263 = vst.msk [vmem:[#allocation5 + $0xc8] sm:$0xff] %vm4237, %v4192
      %4264 = vst.msk [vmem:[#allocation5 + $0xd0] sm:$0xff] %vm4237, %v4194
      %4265 = vst.msk [vmem:[#allocation5 + $0xd8] sm:$0xff] %vm4237, %v4196
      %4266 = vst.msk [vmem:[#allocation5 + $0xe0] sm:$0xff] %vm4237, %v4198
      %4267 = vst.msk [vmem:[#allocation5 + $0xe8] sm:$0xff] %vm4237, %v4200
      %4268 = vst.msk [vmem:[#allocation5 + $0xf0] sm:$0xff] %vm4237, %v4202
      %4269 = vst.msk [vmem:[#allocation5 + $0xf8] sm:$0xff] %vm4237, %v4204
      %v4270 = vld [vmem:[#allocation5] sm:$0xff]
      %v4271 = vld [vmem:[#allocation5 + $0x8] sm:$0xff]
      %v4272 = vld [vmem:[#allocation5 + $0x10] sm:$0xff]
      %v4273 = vld [vmem:[#allocation5 + $0x18] sm:$0xff]
      %v4274 = vld [vmem:[#allocation5 + $0x20] sm:$0xff]
      %v4275 = vld [vmem:[#allocation5 + $0x28] sm:$0xff]
      %v4276 = vld [vmem:[#allocation5 + $0x30] sm:$0xff]
      %v4277 = vld [vmem:[#allocation5 + $0x38] sm:$0xff]
      %v4278 = vld [vmem:[#allocation5 + $0x40] sm:$0xff]
      %v4279 = vld [vmem:[#allocation5 + $0x48] sm:$0xff]
      %v4280 = vld [vmem:[#allocation5 + $0x50] sm:$0xff]
      %v4281 = vld [vmem:[#allocation5 + $0x58] sm:$0xff]
      %v4282 = vld [vmem:[#allocation5 + $0x60] sm:$0xff]
      %v4283 = vld [vmem:[#allocation5 + $0x68] sm:$0xff]
      %v4284 = vld [vmem:[#allocation5 + $0x70] sm:$0xff]
      %v4285 = vld [vmem:[#allocation5 + $0x78] sm:$0xff]
      %v4286 = vld [vmem:[#allocation5 + $0x80] sm:$0xff]
      %v4287 = vld [vmem:[#allocation5 + $0x88] sm:$0xff]
      %v4288 = vld [vmem:[#allocation5 + $0x90] sm:$0xff]
      %v4289 = vld [vmem:[#allocation5 + $0x98] sm:$0xff]
      %v4290 = vld [vmem:[#allocation5 + $0xa0] sm:$0xff]
      %v4291 = vld [vmem:[#allocation5 + $0xa8] sm:$0xff]
      %v4292 = vld [vmem:[#allocation5 + $0xb0] sm:$0xff]
      %v4293 = vld [vmem:[#allocation5 + $0xb8] sm:$0xff]
      %v4294 = vld [vmem:[#allocation5 + $0xc0] sm:$0xff]
      %v4295 = vld [vmem:[#allocation5 + $0xc8] sm:$0xff]
      %v4296 = vld [vmem:[#allocation5 + $0xd0] sm:$0xff]
      %v4297 = vld [vmem:[#allocation5 + $0xd8] sm:$0xff]
      %v4298 = vld [vmem:[#allocation5 + $0xe0] sm:$0xff]
      %v4299 = vld [vmem:[#allocation5 + $0xe8] sm:$0xff]
      %v4300 = vld [vmem:[#allocation5 + $0xf0] sm:$0xff]
      %v4301 = vld [vmem:[#allocation5 + $0xf8] sm:$0xff]
      %v4302 = vpack.c.bf16 %v4270, %v4270
      %v4303 = vpack.c.bf16 %v4271, %v4271
      %v4304 = vpack.c.bf16 %v4272, %v4272
      %v4305 = vpack.c.bf16 %v4273, %v4273
      %v4306 = vpack.c.bf16 %v4274, %v4274
      %v4307 = vpack.c.bf16 %v4275, %v4275
      %v4308 = vpack.c.bf16 %v4276, %v4276
      %v4309 = vpack.c.bf16 %v4277, %v4277
      %v4310 = vpack.c.bf16 %v4278, %v4278
      %v4311 = vpack.c.bf16 %v4279, %v4279
      %v4312 = vpack.c.bf16 %v4280, %v4280
      %v4313 = vpack.c.bf16 %v4281, %v4281
      %v4314 = vpack.c.bf16 %v4282, %v4282
      %v4315 = vpack.c.bf16 %v4283, %v4283
      %v4316 = vpack.c.bf16 %v4284, %v4284
      %v4317 = vpack.c.bf16 %v4285, %v4285
      %v4318 = vpack.c.bf16 %v4286, %v4286
      %v4319 = vpack.c.bf16 %v4287, %v4287
      %v4320 = vpack.c.bf16 %v4288, %v4288
      %v4321 = vpack.c.bf16 %v4289, %v4289
      %v4322 = vpack.c.bf16 %v4290, %v4290
      %v4323 = vpack.c.bf16 %v4291, %v4291
      %v4324 = vpack.c.bf16 %v4292, %v4292
      %v4325 = vpack.c.bf16 %v4293, %v4293
      %v4326 = vpack.c.bf16 %v4294, %v4294
      %v4327 = vpack.c.bf16 %v4295, %v4295
      %v4328 = vpack.c.bf16 %v4296, %v4296
      %v4329 = vpack.c.bf16 %v4297, %v4297
      %v4330 = vpack.c.bf16 %v4298, %v4298
      %v4331 = vpack.c.bf16 %v4299, %v4299
      %v4332 = vpack.c.bf16 %v4300, %v4300
      %v4333 = vpack.c.bf16 %v4301, %v4301
      %v4334 = vld [vmem:[%s2] sm:$0xf]
      %v4335 = vld [vmem:[%s2 + $0x4] sm:$0xf]
      %v4336 = vld [vmem:[%s2 + $0x8] sm:$0xf]
      %v4337 = vld [vmem:[%s2 + $0xc] sm:$0xf]
      %v4338 = vld [vmem:[%s2 + $0x10] sm:$0xf]
      %v4339 = vld [vmem:[%s2 + $0x14] sm:$0xf]
      %v4340 = vld [vmem:[%s2 + $0x18] sm:$0xf]
      %v4341 = vld [vmem:[%s2 + $0x1c] sm:$0xf]
      %v4342 = vld [vmem:[%s2 + $0x20] sm:$0xf]
      %v4375 = vunpack.c.l.b16 %v4302
      %v4376 = vunpack.c.l.b16 %v4303
      %v4377 = vunpack.c.l.b16 %v4304
      %v4378 = vunpack.c.l.b16 %v4305
      %v4379 = vunpack.c.l.b16 %v4306
      %v4380 = vunpack.c.l.b16 %v4307
      %v4381 = vunpack.c.l.b16 %v4308
      %v4382 = vunpack.c.l.b16 %v4309
      %v4383 = vunpack.c.l.b16 %v4310
      %v4384 = vunpack.c.l.b16 %v4311
      %v4385 = vunpack.c.l.b16 %v4312
      %v4386 = vunpack.c.l.b16 %v4313
      %v4387 = vunpack.c.l.b16 %v4314
      %v4388 = vunpack.c.l.b16 %v4315
      %v4389 = vunpack.c.l.b16 %v4316
      %v4390 = vunpack.c.l.b16 %v4317
      %v4391 = vunpack.c.l.b16 %v4318
      %v4392 = vunpack.c.l.b16 %v4319
      %v4393 = vunpack.c.l.b16 %v4320
      %v4394 = vunpack.c.l.b16 %v4321
      %v4395 = vunpack.c.l.b16 %v4322
      %v4396 = vunpack.c.l.b16 %v4323
      %v4397 = vunpack.c.l.b16 %v4324
      %v4398 = vunpack.c.l.b16 %v4325
      %v4399 = vunpack.c.l.b16 %v4326
      %v4400 = vunpack.c.l.b16 %v4327
      %v4401 = vunpack.c.l.b16 %v4328
      %v4402 = vunpack.c.l.b16 %v4329
      %v4403 = vunpack.c.l.b16 %v4330
      %v4404 = vunpack.c.l.b16 %v4331
      %v4405 = vunpack.c.l.b16 %v4332
      %v4406 = vunpack.c.l.b16 %v4333
      %v4407 = vpack.c.b16 %v4376, %v4375
      %v4408 = vpack.c.b16 %v4378, %v4377
      %v4409 = vpack.c.b16 %v4380, %v4379
      %v4410 = vpack.c.b16 %v4382, %v4381
      %v4411 = vpack.c.b16 %v4384, %v4383
      %v4412 = vpack.c.b16 %v4386, %v4385
      %v4413 = vpack.c.b16 %v4388, %v4387
      %v4414 = vpack.c.b16 %v4390, %v4389
      %v4415 = vpack.c.b16 %v4392, %v4391
      %v4416 = vpack.c.b16 %v4394, %v4393
      %v4417 = vpack.c.b16 %v4396, %v4395
      %v4418 = vpack.c.b16 %v4398, %v4397
      %v4419 = vpack.c.b16 %v4400, %v4399
      %v4420 = vpack.c.b16 %v4402, %v4401
      %v4421 = vpack.c.b16 %v4404, %v4403
      %v4422 = vpack.c.b16 %v4406, %v4405
      %v4432 = vunpack.c.l.b16 %v4334
      %v4433 = vunpack.c.l.b16 %v4335
      %v4434 = vunpack.c.l.b16 %v4336
      %v4435 = vunpack.c.l.b16 %v4337
      %v4436 = vunpack.c.l.b16 %v4338
      %v4437 = vunpack.c.l.b16 %v4339
      %v4438 = vunpack.c.l.b16 %v4340
      %v4439 = vunpack.c.l.b16 %v4341
      %v4440 = vunpack.c.l.b16 %v4342
      %v4441 = vpack.c.b16 %v4433, %v4432
      %v4442 = vpack.c.b16 %v4435, %v4434
      %v4443 = vpack.c.b16 %v4437, %v4436
      %v4444 = vpack.c.b16 %v4439, %v4438
      %v4445 = vpack.c.b16 %v4440, %v4440
      %vm4450 = vcmask 588800
      %v4452 = vsel %vm4450, %v4407, 0
      %v4455 = vsel %vm4450, %v4408, 0
      %v4458 = vsel %vm4450, %v4409, 0
      %v4461 = vsel %vm4450, %v4410, 0
      %v4464 = vsel %vm4450, %v4411, 0
      %v4467 = vsel %vm4450, %v4412, 0
      %v4470 = vsel %vm4450, %v4413, 0
      %v4473 = vsel %vm4450, %v4414, 0
      %v4476 = vsel %vm4450, %v4415, 0
      %v4479 = vsel %vm4450, %v4416, 0
      %v4482 = vsel %vm4450, %v4417, 0
      %v4485 = vsel %vm4450, %v4418, 0
      %v4488 = vsel %vm4450, %v4419, 0
      %v4491 = vsel %vm4450, %v4420, 0
      %v4494 = vsel %vm4450, %v4421, 0
      %v4497 = vsel %vm4450, %v4422, 0
      %vm4499 = vcmask 1043456
      %v4501 = vsel %vm4499, %v4445, 0
      %4503 = vmatpush.bf16.msra.mxu0 0
      %4504 = vmatpush.bf16.msra.mxu0 0
      %4505 = vmatpush.bf16.msra.mxu0 0
      %4506 = vmatpush.bf16.msra.mxu0 %v4501
      %4507 = vmatpush.bf16.msra.mxu0 %v4444
      %4508 = vmatpush.bf16.msra.mxu0 %v4443
      %4509 = vmatpush.bf16.msra.mxu0 %v4442
      %4510 = vmatpush.bf16.msra.mxu0 %v4441
      %4511 = vmatmul.bf16.gmra.mxu0 %v4452
      %v4512 = vpop.f32.mrf.mxu0
      %v4513 = vadd.f32 0.0, %v4512
      %v4514 = vpop.f32.mrf.mxu0
      %v4515 = vadd.f32 0.0, %v4514
      %4516 = vmatmul.bf16.gmra.mxu0 %v4455
      %v4517 = vpop.f32.mrf.mxu0
      %v4518 = vadd.f32 0.0, %v4517
      %v4519 = vpop.f32.mrf.mxu0
      %v4520 = vadd.f32 0.0, %v4519
      %4521 = vmatmul.bf16.gmra.mxu0 %v4458
      %v4522 = vpop.f32.mrf.mxu0
      %v4523 = vadd.f32 0.0, %v4522
      %v4524 = vpop.f32.mrf.mxu0
      %v4525 = vadd.f32 0.0, %v4524
      %4526 = vmatmul.bf16.gmra.mxu0 %v4461
      %v4527 = vpop.f32.mrf.mxu0
      %v4528 = vadd.f32 0.0, %v4527
      %v4529 = vpop.f32.mrf.mxu0
      %v4530 = vadd.f32 0.0, %v4529
      %4531 = vmatmul.bf16.gmra.mxu0 %v4464
      %v4532 = vpop.f32.mrf.mxu0
      %v4533 = vadd.f32 0.0, %v4532
      %v4534 = vpop.f32.mrf.mxu0
      %v4535 = vadd.f32 0.0, %v4534
      %4536 = vmatmul.bf16.gmra.mxu0 %v4467
      %v4537 = vpop.f32.mrf.mxu0
      %v4538 = vadd.f32 0.0, %v4537
      %v4539 = vpop.f32.mrf.mxu0
      %v4540 = vadd.f32 0.0, %v4539
      %4541 = vmatmul.bf16.gmra.mxu0 %v4470
      %v4542 = vpop.f32.mrf.mxu0
      %v4543 = vadd.f32 0.0, %v4542
      %v4544 = vpop.f32.mrf.mxu0
      %v4545 = vadd.f32 0.0, %v4544
      %4546 = vmatmul.bf16.gmra.mxu0 %v4473
      %v4547 = vpop.f32.mrf.mxu0
      %v4548 = vadd.f32 0.0, %v4547
      %v4549 = vpop.f32.mrf.mxu0
      %v4550 = vadd.f32 0.0, %v4549
      %4551 = vmatmul.bf16.gmra.mxu0 %v4476
      %v4552 = vpop.f32.mrf.mxu0
      %v4553 = vadd.f32 0.0, %v4552
      %v4554 = vpop.f32.mrf.mxu0
      %v4555 = vadd.f32 0.0, %v4554
      %4556 = vmatmul.bf16.gmra.mxu0 %v4479
      %v4557 = vpop.f32.mrf.mxu0
      %v4558 = vadd.f32 0.0, %v4557
      %v4559 = vpop.f32.mrf.mxu0
      %v4560 = vadd.f32 0.0, %v4559
      %4561 = vmatmul.bf16.gmra.mxu0 %v4482
      %v4562 = vpop.f32.mrf.mxu0
      %v4563 = vadd.f32 0.0, %v4562
      %v4564 = vpop.f32.mrf.mxu0
      %v4565 = vadd.f32 0.0, %v4564
      %4566 = vmatmul.bf16.gmra.mxu0 %v4485
      %v4567 = vpop.f32.mrf.mxu0
      %v4568 = vadd.f32 0.0, %v4567
      %v4569 = vpop.f32.mrf.mxu0
      %v4570 = vadd.f32 0.0, %v4569
      %4571 = vmatmul.bf16.gmra.mxu0 %v4488
      %v4572 = vpop.f32.mrf.mxu0
      %v4573 = vadd.f32 0.0, %v4572
      %v4574 = vpop.f32.mrf.mxu0
      %v4575 = vadd.f32 0.0, %v4574
      %4576 = vmatmul.bf16.gmra.mxu0 %v4491
      %v4577 = vpop.f32.mrf.mxu0
      %v4578 = vadd.f32 0.0, %v4577
      %v4579 = vpop.f32.mrf.mxu0
      %v4580 = vadd.f32 0.0, %v4579
      %4581 = vmatmul.bf16.gmra.mxu0 %v4494
      %v4582 = vpop.f32.mrf.mxu0
      %v4583 = vadd.f32 0.0, %v4582
      %v4584 = vpop.f32.mrf.mxu0
      %v4585 = vadd.f32 0.0, %v4584
      %4586 = vmatmul.bf16.gmra.mxu0 %v4497
      %v4587 = vpop.f32.mrf.mxu0
      %v4588 = vadd.f32 0.0, %v4587
      %v4589 = vpop.f32.mrf.mxu0
      %v4590 = vadd.f32 0.0, %v4589
      %4591 = vdwg.mxu0
      %v4592 = vsel %vm218, %v4513, 0.0
      %v4593 = vsel %vm218, %v4515, 0.0
      %v4594 = vadd.f32 %v4592, %v4593
      %v4595 = vsel %vm218, %v4518, 0.0
      %v4596 = vadd.f32 %v4594, %v4595
      %v4597 = vsel %vm218, %v4520, 0.0
      %v4598 = vadd.f32 %v4596, %v4597
      %v4599 = vsel %vm218, %v4523, 0.0
      %v4600 = vadd.f32 %v4598, %v4599
      %v4601 = vsel %vm218, %v4525, 0.0
      %v4602 = vadd.f32 %v4600, %v4601
      %v4603 = vsel %vm218, %v4528, 0.0
      %v4604 = vadd.f32 %v4602, %v4603
      %v4605 = vsel %vm218, %v4530, 0.0
      %v4606 = vadd.f32 %v4604, %v4605
      %v4607 = vsel %vm218, %v4533, 0.0
      %v4608 = vadd.f32 %v4606, %v4607
      %v4609 = vsel %vm218, %v4535, 0.0
      %v4610 = vadd.f32 %v4608, %v4609
      %v4611 = vsel %vm218, %v4538, 0.0
      %v4612 = vadd.f32 %v4610, %v4611
      %v4613 = vsel %vm218, %v4540, 0.0
      %v4614 = vadd.f32 %v4612, %v4613
      %v4615 = vsel %vm218, %v4543, 0.0
      %v4616 = vadd.f32 %v4614, %v4615
      %v4617 = vsel %vm218, %v4545, 0.0
      %v4618 = vadd.f32 %v4616, %v4617
      %v4619 = vsel %vm218, %v4548, 0.0
      %v4620 = vadd.f32 %v4618, %v4619
      %v4621 = vsel %vm218, %v4550, 0.0
      %v4622 = vadd.f32 %v4620, %v4621
      %v4623 = vsel %vm218, %v4553, 0.0
      %v4624 = vadd.f32 %v4622, %v4623
      %v4625 = vsel %vm218, %v4555, 0.0
      %v4626 = vadd.f32 %v4624, %v4625
      %v4627 = vsel %vm218, %v4558, 0.0
      %v4628 = vadd.f32 %v4626, %v4627
      %v4629 = vsel %vm218, %v4560, 0.0
      %v4630 = vadd.f32 %v4628, %v4629
      %v4631 = vsel %vm218, %v4563, 0.0
      %v4632 = vadd.f32 %v4630, %v4631
      %v4633 = vsel %vm218, %v4565, 0.0
      %v4634 = vadd.f32 %v4632, %v4633
      %v4635 = vsel %vm218, %v4568, 0.0
      %v4636 = vadd.f32 %v4634, %v4635
      %v4637 = vsel %vm218, %v4570, 0.0
      %v4638 = vadd.f32 %v4636, %v4637
      %v4639 = vsel %vm218, %v4573, 0.0
      %v4640 = vadd.f32 %v4638, %v4639
      %v4641 = vsel %vm218, %v4575, 0.0
      %v4642 = vadd.f32 %v4640, %v4641
      %v4643 = vsel %vm218, %v4578, 0.0
      %v4644 = vadd.f32 %v4642, %v4643
      %v4645 = vsel %vm218, %v4580, 0.0
      %v4646 = vadd.f32 %v4644, %v4645
      %v4647 = vsel %vm218, %v4583, 0.0
      %v4648 = vadd.f32 %v4646, %v4647
      %v4649 = vsel %vm218, %v4585, 0.0
      %v4650 = vadd.f32 %v4648, %v4649
      %v4651 = vsel %vm218, %v4588, 0.0
      %v4652 = vadd.f32 %v4650, %v4651
      %v4653 = vsel %vm218, %v4590, 0.0
      %v4654 = vadd.f32 %v4652, %v4653
      %v4655 = vrot.slane %v4654, 4
      %v4656 = vadd.f32 %v4654, %v4655
      %v4657 = vrot.slane %v4656, 2
      %v4658 = vadd.f32 %v4656, %v4657
      %v4659 = vrot.slane %v4658, 1
      %v4660 = vadd.f32 %v4658, %v4659
      %v4661 = vmul.f32 %v4660, %v2351
      %v4662 = vmul.f32 %v4513, %v4513
      %v4663 = vmul.f32 %v4515, %v4515
      %v4664 = vmul.f32 %v4518, %v4518
      %v4665 = vmul.f32 %v4520, %v4520
      %v4666 = vmul.f32 %v4523, %v4523
      %v4667 = vmul.f32 %v4525, %v4525
      %v4668 = vmul.f32 %v4528, %v4528
      %v4669 = vmul.f32 %v4530, %v4530
      %v4670 = vmul.f32 %v4533, %v4533
      %v4671 = vmul.f32 %v4535, %v4535
      %v4672 = vmul.f32 %v4538, %v4538
      %v4673 = vmul.f32 %v4540, %v4540
      %v4674 = vmul.f32 %v4543, %v4543
      %v4675 = vmul.f32 %v4545, %v4545
      %v4676 = vmul.f32 %v4548, %v4548
      %v4677 = vmul.f32 %v4550, %v4550
      %v4678 = vmul.f32 %v4553, %v4553
      %v4679 = vmul.f32 %v4555, %v4555
      %v4680 = vmul.f32 %v4558, %v4558
      %v4681 = vmul.f32 %v4560, %v4560
      %v4682 = vmul.f32 %v4563, %v4563
      %v4683 = vmul.f32 %v4565, %v4565
      %v4684 = vmul.f32 %v4568, %v4568
      %v4685 = vmul.f32 %v4570, %v4570
      %v4686 = vmul.f32 %v4573, %v4573
      %v4687 = vmul.f32 %v4575, %v4575
      %v4688 = vmul.f32 %v4578, %v4578
      %v4689 = vmul.f32 %v4580, %v4580
      %v4690 = vmul.f32 %v4583, %v4583
      %v4691 = vmul.f32 %v4585, %v4585
      %v4692 = vmul.f32 %v4588, %v4588
      %v4693 = vmul.f32 %v4590, %v4590
      %v4694 = vsel %vm218, %v4662, 0.0
      %v4695 = vsel %vm218, %v4663, 0.0
      %v4696 = vadd.f32 %v4694, %v4695
      %v4697 = vsel %vm218, %v4664, 0.0
      %v4698 = vadd.f32 %v4696, %v4697
      %v4699 = vsel %vm218, %v4665, 0.0
      %v4700 = vadd.f32 %v4698, %v4699
      %v4701 = vsel %vm218, %v4666, 0.0
      %v4702 = vadd.f32 %v4700, %v4701
      %v4703 = vsel %vm218, %v4667, 0.0
      %v4704 = vadd.f32 %v4702, %v4703
      %v4705 = vsel %vm218, %v4668, 0.0
      %v4706 = vadd.f32 %v4704, %v4705
      %v4707 = vsel %vm218, %v4669, 0.0
      %v4708 = vadd.f32 %v4706, %v4707
      %v4709 = vsel %vm218, %v4670, 0.0
      %v4710 = vadd.f32 %v4708, %v4709
      %v4711 = vsel %vm218, %v4671, 0.0
      %v4712 = vadd.f32 %v4710, %v4711
      %v4713 = vsel %vm218, %v4672, 0.0
      %v4714 = vadd.f32 %v4712, %v4713
      %v4715 = vsel %vm218, %v4673, 0.0
      %v4716 = vadd.f32 %v4714, %v4715
      %v4717 = vsel %vm218, %v4674, 0.0
      %v4718 = vadd.f32 %v4716, %v4717
      %v4719 = vsel %vm218, %v4675, 0.0
      %v4720 = vadd.f32 %v4718, %v4719
      %v4721 = vsel %vm218, %v4676, 0.0
      %v4722 = vadd.f32 %v4720, %v4721
      %v4723 = vsel %vm218, %v4677, 0.0
      %v4724 = vadd.f32 %v4722, %v4723
      %v4725 = vsel %vm218, %v4678, 0.0
      %v4726 = vadd.f32 %v4724, %v4725
      %v4727 = vsel %vm218, %v4679, 0.0
      %v4728 = vadd.f32 %v4726, %v4727
      %v4729 = vsel %vm218, %v4680, 0.0
      %v4730 = vadd.f32 %v4728, %v4729
      %v4731 = vsel %vm218, %v4681, 0.0
      %v4732 = vadd.f32 %v4730, %v4731
      %v4733 = vsel %vm218, %v4682, 0.0
      %v4734 = vadd.f32 %v4732, %v4733
      %v4735 = vsel %vm218, %v4683, 0.0
      %v4736 = vadd.f32 %v4734, %v4735
      %v4737 = vsel %vm218, %v4684, 0.0
      %v4738 = vadd.f32 %v4736, %v4737
      %v4739 = vsel %vm218, %v4685, 0.0
      %v4740 = vadd.f32 %v4738, %v4739
      %v4741 = vsel %vm218, %v4686, 0.0
      %v4742 = vadd.f32 %v4740, %v4741
      %v4743 = vsel %vm218, %v4687, 0.0
      %v4744 = vadd.f32 %v4742, %v4743
      %v4745 = vsel %vm218, %v4688, 0.0
      %v4746 = vadd.f32 %v4744, %v4745
      %v4747 = vsel %vm218, %v4689, 0.0
      %v4748 = vadd.f32 %v4746, %v4747
      %v4749 = vsel %vm218, %v4690, 0.0
      %v4750 = vadd.f32 %v4748, %v4749
      %v4751 = vsel %vm218, %v4691, 0.0
      %v4752 = vadd.f32 %v4750, %v4751
      %v4753 = vsel %vm218, %v4692, 0.0
      %v4754 = vadd.f32 %v4752, %v4753
      %v4755 = vsel %vm218, %v4693, 0.0
      %v4756 = vadd.f32 %v4754, %v4755
      %v4757 = vrot.slane %v4756, 4
      %v4758 = vadd.f32 %v4756, %v4757
      %v4759 = vrot.slane %v4758, 2
      %v4760 = vadd.f32 %v4758, %v4759
      %v4761 = vrot.slane %v4760, 1
      %v4762 = vadd.f32 %v4760, %v4761
      %v4763 = vmul.f32 %v4762, %v2351
      %v4764 = vmul.f32 %v4661, %v4661
      %v4765 = vsub.f32 %v4763, %v4764
      %v4766 = vsub.f32 %v4513, %v4661
      %v4767 = vsub.f32 %v4515, %v4661
      %v4768 = vsub.f32 %v4518, %v4661
      %v4769 = vsub.f32 %v4520, %v4661
      %v4770 = vsub.f32 %v4523, %v4661
      %v4771 = vsub.f32 %v4525, %v4661
      %v4772 = vsub.f32 %v4528, %v4661
      %v4773 = vsub.f32 %v4530, %v4661
      %v4774 = vsub.f32 %v4533, %v4661
      %v4775 = vsub.f32 %v4535, %v4661
      %v4776 = vsub.f32 %v4538, %v4661
      %v4777 = vsub.f32 %v4540, %v4661
      %v4778 = vsub.f32 %v4543, %v4661
      %v4779 = vsub.f32 %v4545, %v4661
      %v4780 = vsub.f32 %v4548, %v4661
      %v4781 = vsub.f32 %v4550, %v4661
      %v4782 = vsub.f32 %v4553, %v4661
      %v4783 = vsub.f32 %v4555, %v4661
      %v4784 = vsub.f32 %v4558, %v4661
      %v4785 = vsub.f32 %v4560, %v4661
      %v4786 = vsub.f32 %v4563, %v4661
      %v4787 = vsub.f32 %v4565, %v4661
      %v4788 = vsub.f32 %v4568, %v4661
      %v4789 = vsub.f32 %v4570, %v4661
      %v4790 = vsub.f32 %v4573, %v4661
      %v4791 = vsub.f32 %v4575, %v4661
      %v4792 = vsub.f32 %v4578, %v4661
      %v4793 = vsub.f32 %v4580, %v4661
      %v4794 = vsub.f32 %v4583, %v4661
      %v4795 = vsub.f32 %v4585, %v4661
      %v4796 = vsub.f32 %v4588, %v4661
      %v4797 = vsub.f32 %v4590, %v4661
      %v4798 = vadd.f32 %v4765, 1e-05
      %v4799 = vrsqrt.pop %v4798
      %v4800 = vmul.f32 %v4799, %v4798
      %v4801 = vmul.f32 %v4800, %v4799
      %v4802 = vmul.f32 0.5, %v4801
      %v4803 = vsub.f32 1.5, %v4802
      %v4804 = vmul.f32 %v4799, %v4803
      %vm4805 = vweird.f32 %v4798
      %vm4806 = vweird.f32 %v4799
      %vm4807 = vmor %vm4805, %vm4806
      %v4808 = vsel %vm4807, %v4799, %v4804
      %v4809 = vmul.f32 %v4766, %v4808
      %v4810 = vmul.f32 %v4767, %v4808
      %v4811 = vmul.f32 %v4768, %v4808
      %v4812 = vmul.f32 %v4769, %v4808
      %v4813 = vmul.f32 %v4770, %v4808
      %v4814 = vmul.f32 %v4771, %v4808
      %v4815 = vmul.f32 %v4772, %v4808
      %v4816 = vmul.f32 %v4773, %v4808
      %v4817 = vmul.f32 %v4774, %v4808
      %v4818 = vmul.f32 %v4775, %v4808
      %v4819 = vmul.f32 %v4776, %v4808
      %v4820 = vmul.f32 %v4777, %v4808
      %v4821 = vmul.f32 %v4778, %v4808
      %v4822 = vmul.f32 %v4779, %v4808
      %v4823 = vmul.f32 %v4780, %v4808
      %v4824 = vmul.f32 %v4781, %v4808
      %v4825 = vmul.f32 %v4782, %v4808
      %v4826 = vmul.f32 %v4783, %v4808
      %v4827 = vmul.f32 %v4784, %v4808
      %v4828 = vmul.f32 %v4785, %v4808
      %v4829 = vmul.f32 %v4786, %v4808
      %v4830 = vmul.f32 %v4787, %v4808
      %v4831 = vmul.f32 %v4788, %v4808
      %v4832 = vmul.f32 %v4789, %v4808
      %v4833 = vmul.f32 %v4790, %v4808
      %v4834 = vmul.f32 %v4791, %v4808
      %v4835 = vmul.f32 %v4792, %v4808
      %v4836 = vmul.f32 %v4793, %v4808
      %v4837 = vmul.f32 %v4794, %v4808
      %v4838 = vmul.f32 %v4795, %v4808
      %v4839 = vmul.f32 %v4796, %v4808
      %v4840 = vmul.f32 %v4797, %v4808
      %vm4841 = vcmp.ge.f32.partialorder %v4809, 0.0
      %vm4842 = vcmp.ge.f32.partialorder %v4810, 0.0
      %vm4843 = vcmp.ge.f32.partialorder %v4811, 0.0
      %vm4844 = vcmp.ge.f32.partialorder %v4812, 0.0
      %vm4845 = vcmp.ge.f32.partialorder %v4813, 0.0
      %vm4846 = vcmp.ge.f32.partialorder %v4814, 0.0
      %vm4847 = vcmp.ge.f32.partialorder %v4815, 0.0
      %vm4848 = vcmp.ge.f32.partialorder %v4816, 0.0
      %vm4849 = vcmp.ge.f32.partialorder %v4817, 0.0
      %vm4850 = vcmp.ge.f32.partialorder %v4818, 0.0
      %vm4851 = vcmp.ge.f32.partialorder %v4819, 0.0
      %vm4852 = vcmp.ge.f32.partialorder %v4820, 0.0
      %vm4853 = vcmp.ge.f32.partialorder %v4821, 0.0
      %vm4854 = vcmp.ge.f32.partialorder %v4822, 0.0
      %vm4855 = vcmp.ge.f32.partialorder %v4823, 0.0
      %vm4856 = vcmp.ge.f32.partialorder %v4824, 0.0
      %vm4857 = vcmp.ge.f32.partialorder %v4825, 0.0
      %vm4858 = vcmp.ge.f32.partialorder %v4826, 0.0
      %vm4859 = vcmp.ge.f32.partialorder %v4827, 0.0
      %vm4860 = vcmp.ge.f32.partialorder %v4828, 0.0
      %vm4861 = vcmp.ge.f32.partialorder %v4829, 0.0
      %vm4862 = vcmp.ge.f32.partialorder %v4830, 0.0
      %vm4863 = vcmp.ge.f32.partialorder %v4831, 0.0
      %vm4864 = vcmp.ge.f32.partialorder %v4832, 0.0
      %vm4865 = vcmp.ge.f32.partialorder %v4833, 0.0
      %vm4866 = vcmp.ge.f32.partialorder %v4834, 0.0
      %vm4867 = vcmp.ge.f32.partialorder %v4835, 0.0
      %vm4868 = vcmp.ge.f32.partialorder %v4836, 0.0
      %vm4869 = vcmp.ge.f32.partialorder %v4837, 0.0
      %vm4870 = vcmp.ge.f32.partialorder %v4838, 0.0
      %vm4871 = vcmp.ge.f32.partialorder %v4839, 0.0
      %vm4872 = vcmp.ge.f32.partialorder %v4840, 0.0
      %v4873 = vmul.f32 %v4809, 0.01
      %v4874 = vmul.f32 %v4810, 0.01
      %v4875 = vmul.f32 %v4811, 0.01
      %v4876 = vmul.f32 %v4812, 0.01
      %v4877 = vmul.f32 %v4813, 0.01
      %v4878 = vmul.f32 %v4814, 0.01
      %v4879 = vmul.f32 %v4815, 0.01
      %v4880 = vmul.f32 %v4816, 0.01
      %v4881 = vmul.f32 %v4817, 0.01
      %v4882 = vmul.f32 %v4818, 0.01
      %v4883 = vmul.f32 %v4819, 0.01
      %v4884 = vmul.f32 %v4820, 0.01
      %v4885 = vmul.f32 %v4821, 0.01
      %v4886 = vmul.f32 %v4822, 0.01
      %v4887 = vmul.f32 %v4823, 0.01
      %v4888 = vmul.f32 %v4824, 0.01
      %v4889 = vmul.f32 %v4825, 0.01
      %v4890 = vmul.f32 %v4826, 0.01
      %v4891 = vmul.f32 %v4827, 0.01
      %v4892 = vmul.f32 %v4828, 0.01
      %v4893 = vmul.f32 %v4829, 0.01
      %v4894 = vmul.f32 %v4830, 0.01
      %v4895 = vmul.f32 %v4831, 0.01
      %v4896 = vmul.f32 %v4832, 0.01
      %v4897 = vmul.f32 %v4833, 0.01
      %v4898 = vmul.f32 %v4834, 0.01
      %v4899 = vmul.f32 %v4835, 0.01
      %v4900 = vmul.f32 %v4836, 0.01
      %v4901 = vmul.f32 %v4837, 0.01
      %v4902 = vmul.f32 %v4838, 0.01
      %v4903 = vmul.f32 %v4839, 0.01
      %v4904 = vmul.f32 %v4840, 0.01
      %v4905 = vsel %vm4841, %v4809, %v4873
      %v4906 = vsel %vm4842, %v4810, %v4874
      %v4907 = vsel %vm4843, %v4811, %v4875
      %v4908 = vsel %vm4844, %v4812, %v4876
      %v4909 = vsel %vm4845, %v4813, %v4877
      %v4910 = vsel %vm4846, %v4814, %v4878
      %v4911 = vsel %vm4847, %v4815, %v4879
      %v4912 = vsel %vm4848, %v4816, %v4880
      %v4913 = vsel %vm4849, %v4817, %v4881
      %v4914 = vsel %vm4850, %v4818, %v4882
      %v4915 = vsel %vm4851, %v4819, %v4883
      %v4916 = vsel %vm4852, %v4820, %v4884
      %v4917 = vsel %vm4853, %v4821, %v4885
      %v4918 = vsel %vm4854, %v4822, %v4886
      %v4919 = vsel %vm4855, %v4823, %v4887
      %v4920 = vsel %vm4856, %v4824, %v4888
      %v4921 = vsel %vm4857, %v4825, %v4889
      %v4922 = vsel %vm4858, %v4826, %v4890
      %v4923 = vsel %vm4859, %v4827, %v4891
      %v4924 = vsel %vm4860, %v4828, %v4892
      %v4925 = vsel %vm4861, %v4829, %v4893
      %v4926 = vsel %vm4862, %v4830, %v4894
      %v4927 = vsel %vm4863, %v4831, %v4895
      %v4928 = vsel %vm4864, %v4832, %v4896
      %v4929 = vsel %vm4865, %v4833, %v4897
      %v4930 = vsel %vm4866, %v4834, %v4898
      %v4931 = vsel %vm4867, %v4835, %v4899
      %v4932 = vsel %vm4868, %v4836, %v4900
      %v4933 = vsel %vm4869, %v4837, %v4901
      %v4934 = vsel %vm4870, %v4838, %v4902
      %v4935 = vsel %vm4871, %v4839, %v4903
      %v4936 = vsel %vm4872, %v4840, %v4904
      %4937 = vst.msk [vmem:[%s170] sm:$0xff] %vm218, %v4905
      %4938 = vst.msk [vmem:[%s170 + $0x8] sm:$0xff] %vm218, %v4906
      %4939 = vst.msk [vmem:[%s170 + $0x10] sm:$0xff] %vm218, %v4907
      %4940 = vst.msk [vmem:[%s170 + $0x18] sm:$0xff] %vm218, %v4908
      %4941 = vst.msk [vmem:[%s170 + $0x20] sm:$0xff] %vm218, %v4909
      %4942 = vst.msk [vmem:[%s170 + $0x28] sm:$0xff] %vm218, %v4910
      %4943 = vst.msk [vmem:[%s170 + $0x30] sm:$0xff] %vm218, %v4911
      %4944 = vst.msk [vmem:[%s170 + $0x38] sm:$0xff] %vm218, %v4912
      %4945 = vst.msk [vmem:[%s170 + $0x40] sm:$0xff] %vm218, %v4913
      %4946 = vst.msk [vmem:[%s170 + $0x48] sm:$0xff] %vm218, %v4914
      %4947 = vst.msk [vmem:[%s170 + $0x50] sm:$0xff] %vm218, %v4915
      %4948 = vst.msk [vmem:[%s170 + $0x58] sm:$0xff] %vm218, %v4916
      %4949 = vst.msk [vmem:[%s170 + $0x60] sm:$0xff] %vm218, %v4917
      %4950 = vst.msk [vmem:[%s170 + $0x68] sm:$0xff] %vm218, %v4918
      %4951 = vst.msk [vmem:[%s170 + $0x70] sm:$0xff] %vm218, %v4919
      %4952 = vst.msk [vmem:[%s170 + $0x78] sm:$0xff] %vm218, %v4920
      %4953 = vst.msk [vmem:[%s170 + $0x80] sm:$0xff] %vm218, %v4921
      %4954 = vst.msk [vmem:[%s170 + $0x88] sm:$0xff] %vm218, %v4922
      %4955 = vst.msk [vmem:[%s170 + $0x90] sm:$0xff] %vm218, %v4923
      %4956 = vst.msk [vmem:[%s170 + $0x98] sm:$0xff] %vm218, %v4924
      %4957 = vst.msk [vmem:[%s170 + $0xa0] sm:$0xff] %vm218, %v4925
      %4958 = vst.msk [vmem:[%s170 + $0xa8] sm:$0xff] %vm218, %v4926
      %4959 = vst.msk [vmem:[%s170 + $0xb0] sm:$0xff] %vm218, %v4927
      %4960 = vst.msk [vmem:[%s170 + $0xb8] sm:$0xff] %vm218, %v4928
      %4961 = vst.msk [vmem:[%s170 + $0xc0] sm:$0xff] %vm218, %v4929
      %4962 = vst.msk [vmem:[%s170 + $0xc8] sm:$0xff] %vm218, %v4930
      %4963 = vst.msk [vmem:[%s170 + $0xd0] sm:$0xff] %vm218, %v4931
      %4964 = vst.msk [vmem:[%s170 + $0xd8] sm:$0xff] %vm218, %v4932
      %4965 = vst.msk [vmem:[%s170 + $0xe0] sm:$0xff] %vm218, %v4933
      %4966 = vst.msk [vmem:[%s170 + $0xe8] sm:$0xff] %vm218, %v4934
      %4967 = vst.msk [vmem:[%s170 + $0xf0] sm:$0xff] %vm218, %v4935
      %4968 = vst.msk [vmem:[%s170 + $0xf8] sm:$0xff] %vm218, %v4936
      %p4969 = scmp.lt.s32.totalorder %s14, 1
      %s4970 = scalar_select %p4969, %s14, 1
      %s4971 = smul.addr %s4970, 32
      %s4972 = smul.addr %s4971, 8
      %s4973 = scalar_lea.vmem %s3, %s4972
      // Predicated region
      $region33: #{tpu_custom_call.1} parent=31 // pred_check
        %p4974 = pneg %p100
      $region34: #{tpu_custom_call.1} parent=31 // pred_check_branch
        %4976 = sbr.rel (%p4974) target = $region36
      $region35: #{tpu_custom_call.1} parent=31 // pred_region
        _
      $region36: #{tpu_custom_call.1} parent=31 // pred_fallthru
        _
    $region32: #{tpu_custom_call.1} parent=5 // pred_fallthru
      _
    %p4977 = scmp.le.s32.totalorder 2, %s9
    // Predicated region
    $region37: #{tpu_custom_call.1} parent=5 // pred_check
      %p4978 = pneg %p4977
    $region38: #{tpu_custom_call.1} parent=5 // pred_check_branch
      %4980 = sbr.rel (%p4978) target = $region40
    $region39: #{tpu_custom_call.1} parent=5 // pred_region
      %s4981 = ssub.s32 %s9, 2
      // Predicated region
      $region41: #{tpu_custom_call.1} parent=39 // pred_check
        %p4982 = pneg %p106
      $region42: #{tpu_custom_call.1} parent=39 // pred_check_branch
        %4984 = sbr.rel (%p4982) target = $region44
      $region43: #{tpu_custom_call.1} parent=39 // pred_region
        %p4985 = scmp.lt.s32.totalorder %s15, 1
        %s4986 = scalar_select %p4985, %s15, 1
        %s4987 = smul.addr %s4986, 32
        %s4988 = smul.addr %s4987, 8
        %s4989 = scalar_lea.vmem %s3, %s4988
      $region44: #{tpu_custom_call.1} parent=39 // pred_fallthru
        _
    $region40: #{tpu_custom_call.1} parent=5 // pred_fallthru
      _
  $region6: #{tpu_custom_call.1} parent=0 // loop_footer
    %s13 = sadd.s32 1, %s9
  $region7: #{tpu_custom_call.1} parent=0 // loop_footer_branch
    %8 = sbr.rel target = $region3
  $region8: #{tpu_custom_call.1} parent=0 // loop_exit
    _

</llo_original>
